<compile_context>
chip_gen: v6e
topology: v6e:2x2x1
jax: 0.10.0
libtpu: 0.0.40
codegen_flags: <defaults>
</compile_context>

<pallas_src>
import functools

import numpy as np
import jax
import jax.numpy as jnp
from jax.experimental import pallas as pl
from jax.experimental.pallas import tpu as pltpu

# network constants (LeNet on 32x32x3)
_KH = _KW = 5
_C0, _C1, _C2 = 3, 6, 16
_H0 = _W0 = 32
_F1, _F2, _F3 = 120, 84, 10
_F3_PAD = 128          # lane-dense output width (wrapper slices [:, :10])
_NB_DEFAULT = 32       # images per grid step


def _round_up(x, m):
    return ((x + m - 1) // m) * m


# ---------------------------------------------------------------------------
# Kernel
# ---------------------------------------------------------------------------
def _lenet_kernel(x_ref, w1_ref, b1_ref, s1e_ref, s1o_ref,
                  w2_ref, b2_ref, s2e_ref, s2o_ref,
                  wf1_ref, bf1_ref, wf2_ref, bf2_ref, wf3_ref, bf3_ref,
                  o_ref):
    nb = o_ref.shape[0]
    x = x_ref[...]                                   # (32, nb, 96)  (H, N, W*C)

    def conv_relu_pool(act, w_ref, b_ref, se_ref, so_ref, oh, out_wc, pooled_wc):
        """5x5 valid conv (block-Toeplitz matmuls) + bias + ReLU + 2x2/2 pool.

        act: (H, nb, in_wc) value with folded (W, C) lanes.
        w_ref: (5, in_wc, out_wc) pre-packed block-Toeplitz weights.
        Returns (oh//2, nb, pooled_wc).
        """
        in_wc = act.shape[-1]
        acc = jnp.dot(act[0:oh].reshape(oh * nb, in_wc), w_ref[0],
                      preferred_element_type=jnp.float32)
        for di in range(1, _KH):
            lhs = act[di:di + oh].reshape(oh * nb, in_wc)
            acc = acc + jnp.dot(lhs, w_ref[di],
                                preferred_element_type=jnp.float32)
        y = jnp.maximum(acc + b_ref[...], 0.0)             # bias + ReLU
        # H max-pool: leading-dim reshape + max
        y = y.reshape(oh // 2, 2, nb, out_wc)
        y = jnp.maximum(y[:, 0], y[:, 1])                  # (oh/2, nb, out_wc)
        # W max-pool: exact 0/1 selection matmuls (constants hoisted to host)
        y2 = y.reshape((oh // 2) * nb, out_wc)
        even = jnp.dot(y2, se_ref[...], preferred_element_type=jnp.float32)
        odd = jnp.dot(y2, so_ref[...], preferred_element_type=jnp.float32)
        p = jnp.maximum(even, odd)                         # (oh/2*nb, pooled_wc)
        return p.reshape(oh // 2, nb, pooled_wc)

    p1 = conv_relu_pool(x, w1_ref, b1_ref, s1e_ref, s1o_ref,
                        28, 28 * _C1, 14 * _C1)            # (14, nb, 84)
    p2 = conv_relu_pool(p1, w2_ref, b2_ref, s2e_ref, s2o_ref,
                        10, 10 * _C2, 5 * _C2)             # (5, nb, 80)

    # fc1: 5 accumulated 2-D matmuls over the pooled H rows (weights pre-permuted)
    z = bf1_ref[...]                                       # (1, 120) -> bcast
    for ph in range(5):
        z = z + jnp.dot(p2[ph], wf1_ref[ph],
                        preferred_element_type=jnp.float32)
    z = jnp.maximum(z, 0.0)                                # (nb, 120)
    z = jnp.maximum(jnp.dot(z, wf2_ref[...],
                            preferred_element_type=jnp.float32)
                    + bf2_ref[...], 0.0)                   # (nb, 84)
    z = jnp.dot(z, wf3_ref[...],
                preferred_element_type=jnp.float32) + bf3_ref[...]   # (nb, 128)
    o_ref[...] = z.astype(o_ref.dtype)


# ---------------------------------------------------------------------------
# Wrapper
# ---------------------------------------------------------------------------
def _const_spec(arr):
    nd = arr.ndim
    return pl.BlockSpec(arr.shape, lambda i, _nd=nd: (0,) * _nd)


@jax.jit
def net_forward(packed, x_nchw):
    n, c, h, w = x_nchw.shape
    assert (c, h, w) == (_C0, _H0, _W0), "Net expects (N, 3, 32, 32) input"

    nb = min(_NB_DEFAULT, _round_up(n, 8))     # sublane-aligned batch tile
    n_pad = _round_up(n, nb)

    # (N, C, H, W) -> (H, N, W, C) -> folded (H, N, W*C): lane-dense input DMA.
    xf = jnp.transpose(x_nchw.astype(jnp.float32), (2, 0, 3, 1))
    xf = xf.reshape(_H0, n, _W0 * _C0)
    if n_pad != n:
        xf = jnp.pad(xf, ((0, 0), (0, n_pad - n), (0, 0)))

    out = pl.pallas_call(
        _lenet_kernel,
        out_shape=jax.ShapeDtypeStruct((n_pad, _F3_PAD), jnp.float32),
        grid=(n_pad // nb,),
        in_specs=[pl.BlockSpec((_H0, nb, _W0 * _C0), lambda i: (0, i, 0))]
                 + [_const_spec(a) for a in packed],
        out_specs=pl.BlockSpec((nb, _F3_PAD), lambda i: (i, 0)),
        compiler_params=pltpu.CompilerParams(
            dimension_semantics=("parallel",),
            vmem_limit_bytes=48 * 1024 * 1024),
    )(xf, *packed)
    return out[:n, :_F3]


# ---------------------------------------------------------------------------
# Parameter init / one-time packing (host side, outside the hot path)
# ---------------------------------------------------------------------------
def init_params(key):
    """PyTorch-default-style init (uniform +/- 1/sqrt(fan_in)), torch layouts."""
    def uniform(k, shape, fan_in):
        bound = 1.0 / jnp.sqrt(jnp.float32(fan_in))
        return jax.random.uniform(k, shape, jnp.float32, -bound, bound)

    ks = jax.random.split(key, 10)
    return {
        "conv1_w": uniform(ks[0], (_C1, _C0, _KH, _KW), _C0 * _KH * _KW),
        "conv1_b": uniform(ks[1], (_C1,), _C0 * _KH * _KW),
        "conv2_w": uniform(ks[2], (_C2, _C1, _KH, _KW), _C1 * _KH * _KW),
        "conv2_b": uniform(ks[3], (_C2,), _C1 * _KH * _KW),
        "fc1_w": uniform(ks[4], (_F1, _C2 * 25), _C2 * 25),
        "fc1_b": uniform(ks[5], (_F1,), _C2 * 25),
        "fc2_w": uniform(ks[6], (_F2, _F1), _F1),
        "fc2_b": uniform(ks[7], (_F2,), _F1),
        "fc3_w": uniform(ks[8], (_F3, _F2), _F2),
        "fc3_b": uniform(ks[9], (_F3,), _F2),
    }


def _toeplitz_weight(w_oihw, in_w, out_w):
    """Block-Toeplitz expansion: (OC, C, 5, 5) -> (5, in_w*C, out_w*OC) with
    r[di, wcol*C + c, j*OC + oc] = w[oc, c, di, wcol - j] when 0 <= wcol-j < 5."""
    oc_n, c_n, kh, kw = w_oihw.shape
    r = np.zeros((kh, in_w * c_n, out_w * oc_n), np.float32)
    for di in range(kh):
        for dj in range(kw):
            for j in range(out_w):
                wcol = j + dj
                r[di, wcol * c_n:(wcol + 1) * c_n,
                  j * oc_n:(j + 1) * oc_n] = w_oihw[:, :, di, dj].T
    return r


def _pool_selectors(out_w, c):
    """0/1 matrices picking even / odd W positions from a folded (2*out_w, c)
    lane dim: (2*out_w*c, out_w*c)."""
    se = np.zeros((2 * out_w * c, out_w * c), np.float32)
    so = np.zeros_like(se)
    for p in range(out_w):
        for ch in range(c):
            se[(2 * p) * c + ch, p * c + ch] = 1.0
            so[(2 * p + 1) * c + ch, p * c + ch] = 1.0
    return se, so


def pack_params(p):
    """One-time repack into kernel-native layouts."""
    w1 = np.asarray(p["conv1_w"], np.float32)
    b1 = np.asarray(p["conv1_b"], np.float32)
    w2 = np.asarray(p["conv2_w"], np.float32)
    b2 = np.asarray(p["conv2_b"], np.float32)
    f1w = np.asarray(p["fc1_w"], np.float32)
    f1b = np.asarray(p["fc1_b"], np.float32)
    f2w = np.asarray(p["fc2_w"], np.float32)
    f2b = np.asarray(p["fc2_b"], np.float32)
    f3w = np.asarray(p["fc3_w"], np.float32)
    f3b = np.asarray(p["fc3_b"], np.float32)

    w1t = _toeplitz_weight(w1, _W0, 28)                 # (5, 96, 168)
    w2t = _toeplitz_weight(w2, 14, 10)                  # (5, 84, 160)
    b1f = np.tile(b1, 28)[None, :]                      # (1, 168)
    b2f = np.tile(b2, 10)[None, :]                      # (1, 160)
    s1e, s1o = _pool_selectors(14, _C1)                 # (168, 84)
    s2e, s2o = _pool_selectors(5, _C2)                  # (160, 80)

    # fc1: torch feature index = c*25 + ph*5 + pw ; kernel feature = (ph, pw*16 + c)
    wf1 = (f1w.reshape(_F1, _C2, 5, 5)
           .transpose(2, 3, 1, 0)                       # (ph, pw, c, o)
           .reshape(5, 5 * _C2, _F1))                   # (5, 80, 120)
    bf1 = f1b[None, :]                                  # (1, 120)
    wf2 = f2w.T                                         # (120, 84)
    bf2 = f2b[None, :]                                  # (1, 84)
    wf3 = np.zeros((_F2, _F3_PAD), np.float32)          # (84, 128) lane-dense
    wf3[:, :_F3] = f3w.T
    bf3 = np.zeros((1, _F3_PAD), np.float32)
    bf3[0, :_F3] = f3b

    packed = (w1t, b1f, s1e, s1o, w2t, b2f, s2e, s2o,
              wf1, bf1, wf2, bf2, wf3, bf3)
    return tuple(jnp.asarray(a) for a in packed)


# ---------------------------------------------------------------------------
# Pure-JAX/XLA reference (validation only)
# ---------------------------------------------------------------------------
def reference_forward(params, x):
    def conv_relu(x, w, b):
        y = jax.lax.conv_general_dilated(
            x, w, window_strides=(1, 1), padding="VALID",
            dimension_numbers=("NCHW", "OIHW", "NCHW"),
            precision=jax.lax.Precision.HIGHEST)
        return jax.nn.relu(y + b[None, :, None, None])

    def pool(x):
        return jax.lax.reduce_window(x, -jnp.inf, jax.lax.max,
                                     (1, 1, 2, 2), (1, 1, 2, 2), "VALID")

    x = pool(conv_relu(x, params["conv1_w"], params["conv1_b"]))
    x = pool(conv_relu(x, params["conv2_w"], params["conv2_b"]))
    x = x.reshape(x.shape[0], -1)
    x = jax.nn.relu(x @ params["fc1_w"].T + params["fc1_b"])
    x = jax.nn.relu(x @ params["fc2_w"].T + params["fc2_b"])
    return x @ params["fc3_w"].T + params["fc3_b"]


if __name__ == "__main__":
    key = jax.random.PRNGKey(0)
    pkey, xkey = jax.random.split(key)
    params = init_params(pkey)
    packed = pack_params(params)
    x = jax.random.normal(xkey, (2, _C0, _H0, _W0), dtype=jnp.float32)

    out = jax.block_until_ready(net_forward(packed, x))
    assert out.shape == (2, _F3) and out.dtype == jnp.float32

    ref = reference_forward(params, x)
    max_err = float(jnp.max(jnp.abs(out - ref)))
    assert max_err < 1e-2, f"mismatch vs XLA reference: {max_err}"

    print("KERNEL_OK")
</pallas_src>

<mosaic_0001>
module attributes {stable_mosaic.version = 11 : i64} {
  func.func @_lenet_kernel(%arg0: i32, %arg1: memref<32x8x96xf32, #tpu.memory_space<vmem>>, %arg2: memref<5x96x168xf32, #tpu.memory_space<vmem>>, %arg3: memref<1x168xf32, #tpu.memory_space<vmem>>, %arg4: memref<168x84xf32, #tpu.memory_space<vmem>>, %arg5: memref<168x84xf32, #tpu.memory_space<vmem>>, %arg6: memref<5x84x160xf32, #tpu.memory_space<vmem>>, %arg7: memref<1x160xf32, #tpu.memory_space<vmem>>, %arg8: memref<160x80xf32, #tpu.memory_space<vmem>>, %arg9: memref<160x80xf32, #tpu.memory_space<vmem>>, %arg10: memref<5x80x120xf32, #tpu.memory_space<vmem>>, %arg11: memref<1x120xf32, #tpu.memory_space<vmem>>, %arg12: memref<120x84xf32, #tpu.memory_space<vmem>>, %arg13: memref<1x84xf32, #tpu.memory_space<vmem>>, %arg14: memref<84x128xf32, #tpu.memory_space<vmem>>, %arg15: memref<1x128xf32, #tpu.memory_space<vmem>>, %arg16: memref<8x128xf32, #tpu.memory_space<vmem>>) attributes {dimension_semantics = [#tpu.dimension_semantics<parallel>], iteration_bounds = array<i64: 1>, scalar_prefetch = 0 : i64, scratch_operands = 0 : i64, tpu.core_type = #tpu.core_type<tc>, window_params = [{transform_indices = @transform_0, window_bounds = array<i64: 32, 8, 96>}, {pipeline_mode = #tpu.pipeline_mode<synchronous>, transform_indices = @transform_1, window_bounds = array<i64: 5, 96, 168>}, {pipeline_mode = #tpu.pipeline_mode<synchronous>, transform_indices = @transform_2, window_bounds = array<i64: 1, 168>}, {pipeline_mode = #tpu.pipeline_mode<synchronous>, transform_indices = @transform_3, window_bounds = array<i64: 168, 84>}, {pipeline_mode = #tpu.pipeline_mode<synchronous>, transform_indices = @transform_4, window_bounds = array<i64: 168, 84>}, {pipeline_mode = #tpu.pipeline_mode<synchronous>, transform_indices = @transform_5, window_bounds = array<i64: 5, 84, 160>}, {pipeline_mode = #tpu.pipeline_mode<synchronous>, transform_indices = @transform_6, window_bounds = array<i64: 1, 160>}, {pipeline_mode = #tpu.pipeline_mode<synchronous>, transform_indices = @transform_7, window_bounds = array<i64: 160, 80>}, {pipeline_mode = #tpu.pipeline_mode<synchronous>, transform_indices = @transform_8, window_bounds = array<i64: 160, 80>}, {pipeline_mode = #tpu.pipeline_mode<synchronous>, transform_indices = @transform_9, window_bounds = array<i64: 5, 80, 120>}, {pipeline_mode = #tpu.pipeline_mode<synchronous>, transform_indices = @transform_10, window_bounds = array<i64: 1, 120>}, {pipeline_mode = #tpu.pipeline_mode<synchronous>, transform_indices = @transform_11, window_bounds = array<i64: 120, 84>}, {pipeline_mode = #tpu.pipeline_mode<synchronous>, transform_indices = @transform_12, window_bounds = array<i64: 1, 84>}, {pipeline_mode = #tpu.pipeline_mode<synchronous>, transform_indices = @transform_13, window_bounds = array<i64: 84, 128>}, {pipeline_mode = #tpu.pipeline_mode<synchronous>, transform_indices = @transform_14, window_bounds = array<i64: 1, 128>}, {transform_indices = @transform_15, window_bounds = array<i64: 8, 128>}]} {
    %c0 = arith.constant 0 : index
    %c0_0 = arith.constant 0 : index
    %c0_1 = arith.constant 0 : index
    %0 = vector.load %arg1[%c0, %c0_0, %c0_1] : memref<32x8x96xf32, #tpu.memory_space<vmem>>, vector<32x8x96xf32>
    %1 = vector.extract_strided_slice %0 {offsets = [0, 0, 0], sizes = [28, 8, 96], strides = [1, 1, 1]} : vector<32x8x96xf32> to vector<28x8x96xf32>
    %2 = vector.shape_cast %1 : vector<28x8x96xf32> to vector<224x96xf32>
    %c0_2 = arith.constant 0 : index
    %c0_3 = arith.constant 0 : index
    %c0_4 = arith.constant 0 : index
    %3 = vector.load %arg2[%c0_2, %c0_3, %c0_4] : memref<5x96x168xf32, #tpu.memory_space<vmem>>, vector<1x96x168xf32>
    %4 = vector.shape_cast %3 : vector<1x96x168xf32> to vector<96x168xf32>
    %cst = arith.constant dense<0.000000e+00> : vector<224x168xf32>
    %5 = tpu.matmul %2, %4, %cst {dimension_numbers = #tpu.dot_dimension_numbers<[1], [0], [0], [1], [0, 0, 1, 1], [], []>} : vector<224x96xf32>, vector<96x168xf32>, vector<224x168xf32> -> vector<224x168xf32>
    %6 = vector.extract_strided_slice %0 {offsets = [1, 0, 0], sizes = [28, 8, 96], strides = [1, 1, 1]} : vector<32x8x96xf32> to vector<28x8x96xf32>
    %7 = vector.shape_cast %6 : vector<28x8x96xf32> to vector<224x96xf32>
    %c1 = arith.constant 1 : index
    %c0_5 = arith.constant 0 : index
    %c0_6 = arith.constant 0 : index
    %8 = vector.load %arg2[%c1, %c0_5, %c0_6] : memref<5x96x168xf32, #tpu.memory_space<vmem>>, vector<1x96x168xf32>
    %9 = vector.shape_cast %8 : vector<1x96x168xf32> to vector<96x168xf32>
    %cst_7 = arith.constant dense<0.000000e+00> : vector<224x168xf32>
    %10 = tpu.matmul %7, %9, %cst_7 {dimension_numbers = #tpu.dot_dimension_numbers<[1], [0], [0], [1], [0, 0, 1, 1], [], []>} : vector<224x96xf32>, vector<96x168xf32>, vector<224x168xf32> -> vector<224x168xf32>
    %11 = arith.addf %5, %10 : vector<224x168xf32>
    %12 = vector.extract_strided_slice %0 {offsets = [2, 0, 0], sizes = [28, 8, 96], strides = [1, 1, 1]} : vector<32x8x96xf32> to vector<28x8x96xf32>
    %13 = vector.shape_cast %12 : vector<28x8x96xf32> to vector<224x96xf32>
    %c2 = arith.constant 2 : index
    %c0_8 = arith.constant 0 : index
    %c0_9 = arith.constant 0 : index
    %14 = vector.load %arg2[%c2, %c0_8, %c0_9] : memref<5x96x168xf32, #tpu.memory_space<vmem>>, vector<1x96x168xf32>
    %15 = vector.shape_cast %14 : vector<1x96x168xf32> to vector<96x168xf32>
    %cst_10 = arith.constant dense<0.000000e+00> : vector<224x168xf32>
    %16 = tpu.matmul %13, %15, %cst_10 {dimension_numbers = #tpu.dot_dimension_numbers<[1], [0], [0], [1], [0, 0, 1, 1], [], []>} : vector<224x96xf32>, vector<96x168xf32>, vector<224x168xf32> -> vector<224x168xf32>
    %17 = arith.addf %11, %16 : vector<224x168xf32>
    %18 = vector.extract_strided_slice %0 {offsets = [3, 0, 0], sizes = [28, 8, 96], strides = [1, 1, 1]} : vector<32x8x96xf32> to vector<28x8x96xf32>
    %19 = vector.shape_cast %18 : vector<28x8x96xf32> to vector<224x96xf32>
    %c3 = arith.constant 3 : index
    %c0_11 = arith.constant 0 : index
    %c0_12 = arith.constant 0 : index
    %20 = vector.load %arg2[%c3, %c0_11, %c0_12] : memref<5x96x168xf32, #tpu.memory_space<vmem>>, vector<1x96x168xf32>
    %21 = vector.shape_cast %20 : vector<1x96x168xf32> to vector<96x168xf32>
    %cst_13 = arith.constant dense<0.000000e+00> : vector<224x168xf32>
    %22 = tpu.matmul %19, %21, %cst_13 {dimension_numbers = #tpu.dot_dimension_numbers<[1], [0], [0], [1], [0, 0, 1, 1], [], []>} : vector<224x96xf32>, vector<96x168xf32>, vector<224x168xf32> -> vector<224x168xf32>
    %23 = arith.addf %17, %22 : vector<224x168xf32>
    %24 = vector.extract_strided_slice %0 {offsets = [4, 0, 0], sizes = [28, 8, 96], strides = [1, 1, 1]} : vector<32x8x96xf32> to vector<28x8x96xf32>
    %25 = vector.shape_cast %24 : vector<28x8x96xf32> to vector<224x96xf32>
    %c4 = arith.constant 4 : index
    %c0_14 = arith.constant 0 : index
    %c0_15 = arith.constant 0 : index
    %26 = vector.load %arg2[%c4, %c0_14, %c0_15] : memref<5x96x168xf32, #tpu.memory_space<vmem>>, vector<1x96x168xf32>
    %27 = vector.shape_cast %26 : vector<1x96x168xf32> to vector<96x168xf32>
    %cst_16 = arith.constant dense<0.000000e+00> : vector<224x168xf32>
    %28 = tpu.matmul %25, %27, %cst_16 {dimension_numbers = #tpu.dot_dimension_numbers<[1], [0], [0], [1], [0, 0, 1, 1], [], []>} : vector<224x96xf32>, vector<96x168xf32>, vector<224x168xf32> -> vector<224x168xf32>
    %29 = arith.addf %23, %28 : vector<224x168xf32>
    %c0_17 = arith.constant 0 : index
    %c0_18 = arith.constant 0 : index
    %30 = vector.load %arg3[%c0_17, %c0_18] : memref<1x168xf32, #tpu.memory_space<vmem>>, vector<1x168xf32>
    %31 = vector.broadcast %30 : vector<1x168xf32> to vector<224x168xf32>
    %32 = arith.addf %29, %31 : vector<224x168xf32>
    %cst_19 = arith.constant 0.000000e+00 : f32
    %33 = vector.broadcast %cst_19 : f32 to vector<224x168xf32>
    %34 = arith.maximumf %32, %33 : vector<224x168xf32>
    %35 = vector.shape_cast %34 : vector<224x168xf32> to vector<14x2x8x168xf32>
    %36 = vector.extract_strided_slice %35 {offsets = [0, 0, 0, 0], sizes = [14, 1, 8, 168], strides = [1, 1, 1, 1]} : vector<14x2x8x168xf32> to vector<14x1x8x168xf32>
    %37 = vector.shape_cast %36 : vector<14x1x8x168xf32> to vector<14x8x168xf32>
    %38 = vector.extract_strided_slice %35 {offsets = [0, 1, 0, 0], sizes = [14, 1, 8, 168], strides = [1, 1, 1, 1]} : vector<14x2x8x168xf32> to vector<14x1x8x168xf32>
    %39 = vector.shape_cast %38 : vector<14x1x8x168xf32> to vector<14x8x168xf32>
    %40 = arith.maximumf %37, %39 : vector<14x8x168xf32>
    %41 = vector.shape_cast %40 : vector<14x8x168xf32> to vector<112x168xf32>
    %c0_20 = arith.constant 0 : index
    %c0_21 = arith.constant 0 : index
    %42 = vector.load %arg4[%c0_20, %c0_21] : memref<168x84xf32, #tpu.memory_space<vmem>>, vector<168x84xf32>
    %cst_22 = arith.constant dense<0.000000e+00> : vector<112x84xf32>
    %43 = tpu.matmul %41, %42, %cst_22 {dimension_numbers = #tpu.dot_dimension_numbers<[1], [0], [0], [1], [0, 0, 1, 1], [], []>} : vector<112x168xf32>, vector<168x84xf32>, vector<112x84xf32> -> vector<112x84xf32>
    %c0_23 = arith.constant 0 : index
    %c0_24 = arith.constant 0 : index
    %44 = vector.load %arg5[%c0_23, %c0_24] : memref<168x84xf32, #tpu.memory_space<vmem>>, vector<168x84xf32>
    %cst_25 = arith.constant dense<0.000000e+00> : vector<112x84xf32>
    %45 = tpu.matmul %41, %44, %cst_25 {dimension_numbers = #tpu.dot_dimension_numbers<[1], [0], [0], [1], [0, 0, 1, 1], [], []>} : vector<112x168xf32>, vector<168x84xf32>, vector<112x84xf32> -> vector<112x84xf32>
    %46 = arith.maximumf %43, %45 : vector<112x84xf32>
    %47 = vector.shape_cast %46 : vector<112x84xf32> to vector<14x8x84xf32>
    %48 = vector.extract_strided_slice %47 {offsets = [0, 0, 0], sizes = [10, 8, 84], strides = [1, 1, 1]} : vector<14x8x84xf32> to vector<10x8x84xf32>
    %49 = vector.shape_cast %48 : vector<10x8x84xf32> to vector<80x84xf32>
    %c0_26 = arith.constant 0 : index
    %c0_27 = arith.constant 0 : index
    %c0_28 = arith.constant 0 : index
    %50 = vector.load %arg6[%c0_26, %c0_27, %c0_28] : memref<5x84x160xf32, #tpu.memory_space<vmem>>, vector<1x84x160xf32>
    %51 = vector.shape_cast %50 : vector<1x84x160xf32> to vector<84x160xf32>
    %cst_29 = arith.constant dense<0.000000e+00> : vector<80x160xf32>
    %52 = tpu.matmul %49, %51, %cst_29 {dimension_numbers = #tpu.dot_dimension_numbers<[1], [0], [0], [1], [0, 0, 1, 1], [], []>} : vector<80x84xf32>, vector<84x160xf32>, vector<80x160xf32> -> vector<80x160xf32>
    %53 = vector.extract_strided_slice %47 {offsets = [1, 0, 0], sizes = [10, 8, 84], strides = [1, 1, 1]} : vector<14x8x84xf32> to vector<10x8x84xf32>
    %54 = vector.shape_cast %53 : vector<10x8x84xf32> to vector<80x84xf32>
    %c1_30 = arith.constant 1 : index
    %c0_31 = arith.constant 0 : index
    %c0_32 = arith.constant 0 : index
    %55 = vector.load %arg6[%c1_30, %c0_31, %c0_32] : memref<5x84x160xf32, #tpu.memory_space<vmem>>, vector<1x84x160xf32>
    %56 = vector.shape_cast %55 : vector<1x84x160xf32> to vector<84x160xf32>
    %cst_33 = arith.constant dense<0.000000e+00> : vector<80x160xf32>
    %57 = tpu.matmul %54, %56, %cst_33 {dimension_numbers = #tpu.dot_dimension_numbers<[1], [0], [0], [1], [0, 0, 1, 1], [], []>} : vector<80x84xf32>, vector<84x160xf32>, vector<80x160xf32> -> vector<80x160xf32>
    %58 = arith.addf %52, %57 : vector<80x160xf32>
    %59 = vector.extract_strided_slice %47 {offsets = [2, 0, 0], sizes = [10, 8, 84], strides = [1, 1, 1]} : vector<14x8x84xf32> to vector<10x8x84xf32>
    %60 = vector.shape_cast %59 : vector<10x8x84xf32> to vector<80x84xf32>
    %c2_34 = arith.constant 2 : index
    %c0_35 = arith.constant 0 : index
    %c0_36 = arith.constant 0 : index
    %61 = vector.load %arg6[%c2_34, %c0_35, %c0_36] : memref<5x84x160xf32, #tpu.memory_space<vmem>>, vector<1x84x160xf32>
    %62 = vector.shape_cast %61 : vector<1x84x160xf32> to vector<84x160xf32>
    %cst_37 = arith.constant dense<0.000000e+00> : vector<80x160xf32>
    %63 = tpu.matmul %60, %62, %cst_37 {dimension_numbers = #tpu.dot_dimension_numbers<[1], [0], [0], [1], [0, 0, 1, 1], [], []>} : vector<80x84xf32>, vector<84x160xf32>, vector<80x160xf32> -> vector<80x160xf32>
    %64 = arith.addf %58, %63 : vector<80x160xf32>
    %65 = vector.extract_strided_slice %47 {offsets = [3, 0, 0], sizes = [10, 8, 84], strides = [1, 1, 1]} : vector<14x8x84xf32> to vector<10x8x84xf32>
    %66 = vector.shape_cast %65 : vector<10x8x84xf32> to vector<80x84xf32>
    %c3_38 = arith.constant 3 : index
    %c0_39 = arith.constant 0 : index
    %c0_40 = arith.constant 0 : index
    %67 = vector.load %arg6[%c3_38, %c0_39, %c0_40] : memref<5x84x160xf32, #tpu.memory_space<vmem>>, vector<1x84x160xf32>
    %68 = vector.shape_cast %67 : vector<1x84x160xf32> to vector<84x160xf32>
    %cst_41 = arith.constant dense<0.000000e+00> : vector<80x160xf32>
    %69 = tpu.matmul %66, %68, %cst_41 {dimension_numbers = #tpu.dot_dimension_numbers<[1], [0], [0], [1], [0, 0, 1, 1], [], []>} : vector<80x84xf32>, vector<84x160xf32>, vector<80x160xf32> -> vector<80x160xf32>
    %70 = arith.addf %64, %69 : vector<80x160xf32>
    %71 = vector.extract_strided_slice %47 {offsets = [4, 0, 0], sizes = [10, 8, 84], strides = [1, 1, 1]} : vector<14x8x84xf32> to vector<10x8x84xf32>
    %72 = vector.shape_cast %71 : vector<10x8x84xf32> to vector<80x84xf32>
    %c4_42 = arith.constant 4 : index
    %c0_43 = arith.constant 0 : index
    %c0_44 = arith.constant 0 : index
    %73 = vector.load %arg6[%c4_42, %c0_43, %c0_44] : memref<5x84x160xf32, #tpu.memory_space<vmem>>, vector<1x84x160xf32>
    %74 = vector.shape_cast %73 : vector<1x84x160xf32> to vector<84x160xf32>
    %cst_45 = arith.constant dense<0.000000e+00> : vector<80x160xf32>
    %75 = tpu.matmul %72, %74, %cst_45 {dimension_numbers = #tpu.dot_dimension_numbers<[1], [0], [0], [1], [0, 0, 1, 1], [], []>} : vector<80x84xf32>, vector<84x160xf32>, vector<80x160xf32> -> vector<80x160xf32>
    %76 = arith.addf %70, %75 : vector<80x160xf32>
    %c0_46 = arith.constant 0 : index
    %c0_47 = arith.constant 0 : index
    %77 = vector.load %arg7[%c0_46, %c0_47] : memref<1x160xf32, #tpu.memory_space<vmem>>, vector<1x160xf32>
    %78 = vector.broadcast %77 : vector<1x160xf32> to vector<80x160xf32>
    %79 = arith.addf %76, %78 : vector<80x160xf32>
    %cst_48 = arith.constant 0.000000e+00 : f32
    %80 = vector.broadcast %cst_48 : f32 to vector<80x160xf32>
    %81 = arith.maximumf %79, %80 : vector<80x160xf32>
    %82 = vector.shape_cast %81 : vector<80x160xf32> to vector<5x2x8x160xf32>
    %83 = vector.extract_strided_slice %82 {offsets = [0, 0, 0, 0], sizes = [5, 1, 8, 160], strides = [1, 1, 1, 1]} : vector<5x2x8x160xf32> to vector<5x1x8x160xf32>
    %84 = vector.shape_cast %83 : vector<5x1x8x160xf32> to vector<5x8x160xf32>
    %85 = vector.extract_strided_slice %82 {offsets = [0, 1, 0, 0], sizes = [5, 1, 8, 160], strides = [1, 1, 1, 1]} : vector<5x2x8x160xf32> to vector<5x1x8x160xf32>
    %86 = vector.shape_cast %85 : vector<5x1x8x160xf32> to vector<5x8x160xf32>
    %87 = arith.maximumf %84, %86 : vector<5x8x160xf32>
    %88 = vector.shape_cast %87 : vector<5x8x160xf32> to vector<40x160xf32>
    %c0_49 = arith.constant 0 : index
    %c0_50 = arith.constant 0 : index
    %89 = vector.load %arg8[%c0_49, %c0_50] : memref<160x80xf32, #tpu.memory_space<vmem>>, vector<160x80xf32>
    %cst_51 = arith.constant dense<0.000000e+00> : vector<40x80xf32>
    %90 = tpu.matmul %88, %89, %cst_51 {dimension_numbers = #tpu.dot_dimension_numbers<[1], [0], [0], [1], [0, 0, 1, 1], [], []>} : vector<40x160xf32>, vector<160x80xf32>, vector<40x80xf32> -> vector<40x80xf32>
    %c0_52 = arith.constant 0 : index
    %c0_53 = arith.constant 0 : index
    %91 = vector.load %arg9[%c0_52, %c0_53] : memref<160x80xf32, #tpu.memory_space<vmem>>, vector<160x80xf32>
    %cst_54 = arith.constant dense<0.000000e+00> : vector<40x80xf32>
    %92 = tpu.matmul %88, %91, %cst_54 {dimension_numbers = #tpu.dot_dimension_numbers<[1], [0], [0], [1], [0, 0, 1, 1], [], []>} : vector<40x160xf32>, vector<160x80xf32>, vector<40x80xf32> -> vector<40x80xf32>
    %93 = arith.maximumf %90, %92 : vector<40x80xf32>
    %94 = vector.shape_cast %93 : vector<40x80xf32> to vector<5x8x80xf32>
    %c0_55 = arith.constant 0 : index
    %c0_56 = arith.constant 0 : index
    %95 = vector.load %arg11[%c0_55, %c0_56] : memref<1x120xf32, #tpu.memory_space<vmem>>, vector<1x120xf32>
    %96 = vector.extract_strided_slice %94 {offsets = [0, 0, 0], sizes = [1, 8, 80], strides = [1, 1, 1]} : vector<5x8x80xf32> to vector<1x8x80xf32>
    %97 = vector.shape_cast %96 : vector<1x8x80xf32> to vector<8x80xf32>
    %c0_57 = arith.constant 0 : index
    %c0_58 = arith.constant 0 : index
    %c0_59 = arith.constant 0 : index
    %98 = vector.load %arg10[%c0_57, %c0_58, %c0_59] : memref<5x80x120xf32, #tpu.memory_space<vmem>>, vector<1x80x120xf32>
    %99 = vector.shape_cast %98 : vector<1x80x120xf32> to vector<80x120xf32>
    %cst_60 = arith.constant dense<0.000000e+00> : vector<8x120xf32>
    %100 = tpu.matmul %97, %99, %cst_60 {dimension_numbers = #tpu.dot_dimension_numbers<[1], [0], [0], [1], [0, 0, 1, 1], [], []>} : vector<8x80xf32>, vector<80x120xf32>, vector<8x120xf32> -> vector<8x120xf32>
    %101 = vector.broadcast %95 : vector<1x120xf32> to vector<8x120xf32>
    %102 = arith.addf %101, %100 : vector<8x120xf32>
    %103 = vector.extract_strided_slice %94 {offsets = [1, 0, 0], sizes = [1, 8, 80], strides = [1, 1, 1]} : vector<5x8x80xf32> to vector<1x8x80xf32>
    %104 = vector.shape_cast %103 : vector<1x8x80xf32> to vector<8x80xf32>
    %c1_61 = arith.constant 1 : index
    %c0_62 = arith.constant 0 : index
    %c0_63 = arith.constant 0 : index
    %105 = vector.load %arg10[%c1_61, %c0_62, %c0_63] : memref<5x80x120xf32, #tpu.memory_space<vmem>>, vector<1x80x120xf32>
    %106 = vector.shape_cast %105 : vector<1x80x120xf32> to vector<80x120xf32>
    %cst_64 = arith.constant dense<0.000000e+00> : vector<8x120xf32>
    %107 = tpu.matmul %104, %106, %cst_64 {dimension_numbers = #tpu.dot_dimension_numbers<[1], [0], [0], [1], [0, 0, 1, 1], [], []>} : vector<8x80xf32>, vector<80x120xf32>, vector<8x120xf32> -> vector<8x120xf32>
    %108 = arith.addf %102, %107 : vector<8x120xf32>
    %109 = vector.extract_strided_slice %94 {offsets = [2, 0, 0], sizes = [1, 8, 80], strides = [1, 1, 1]} : vector<5x8x80xf32> to vector<1x8x80xf32>
    %110 = vector.shape_cast %109 : vector<1x8x80xf32> to vector<8x80xf32>
    %c2_65 = arith.constant 2 : index
    %c0_66 = arith.constant 0 : index
    %c0_67 = arith.constant 0 : index
    %111 = vector.load %arg10[%c2_65, %c0_66, %c0_67] : memref<5x80x120xf32, #tpu.memory_space<vmem>>, vector<1x80x120xf32>
    %112 = vector.shape_cast %111 : vector<1x80x120xf32> to vector<80x120xf32>
    %cst_68 = arith.constant dense<0.000000e+00> : vector<8x120xf32>
    %113 = tpu.matmul %110, %112, %cst_68 {dimension_numbers = #tpu.dot_dimension_numbers<[1], [0], [0], [1], [0, 0, 1, 1], [], []>} : vector<8x80xf32>, vector<80x120xf32>, vector<8x120xf32> -> vector<8x120xf32>
    %114 = arith.addf %108, %113 : vector<8x120xf32>
    %115 = vector.extract_strided_slice %94 {offsets = [3, 0, 0], sizes = [1, 8, 80], strides = [1, 1, 1]} : vector<5x8x80xf32> to vector<1x8x80xf32>
    %116 = vector.shape_cast %115 : vector<1x8x80xf32> to vector<8x80xf32>
    %c3_69 = arith.constant 3 : index
    %c0_70 = arith.constant 0 : index
    %c0_71 = arith.constant 0 : index
    %117 = vector.load %arg10[%c3_69, %c0_70, %c0_71] : memref<5x80x120xf32, #tpu.memory_space<vmem>>, vector<1x80x120xf32>
    %118 = vector.shape_cast %117 : vector<1x80x120xf32> to vector<80x120xf32>
    %cst_72 = arith.constant dense<0.000000e+00> : vector<8x120xf32>
    %119 = tpu.matmul %116, %118, %cst_72 {dimension_numbers = #tpu.dot_dimension_numbers<[1], [0], [0], [1], [0, 0, 1, 1], [], []>} : vector<8x80xf32>, vector<80x120xf32>, vector<8x120xf32> -> vector<8x120xf32>
    %120 = arith.addf %114, %119 : vector<8x120xf32>
    %121 = vector.extract_strided_slice %94 {offsets = [4, 0, 0], sizes = [1, 8, 80], strides = [1, 1, 1]} : vector<5x8x80xf32> to vector<1x8x80xf32>
    %122 = vector.shape_cast %121 : vector<1x8x80xf32> to vector<8x80xf32>
    %c4_73 = arith.constant 4 : index
    %c0_74 = arith.constant 0 : index
    %c0_75 = arith.constant 0 : index
    %123 = vector.load %arg10[%c4_73, %c0_74, %c0_75] : memref<5x80x120xf32, #tpu.memory_space<vmem>>, vector<1x80x120xf32>
    %124 = vector.shape_cast %123 : vector<1x80x120xf32> to vector<80x120xf32>
    %cst_76 = arith.constant dense<0.000000e+00> : vector<8x120xf32>
    %125 = tpu.matmul %122, %124, %cst_76 {dimension_numbers = #tpu.dot_dimension_numbers<[1], [0], [0], [1], [0, 0, 1, 1], [], []>} : vector<8x80xf32>, vector<80x120xf32>, vector<8x120xf32> -> vector<8x120xf32>
    %126 = arith.addf %120, %125 : vector<8x120xf32>
    %cst_77 = arith.constant 0.000000e+00 : f32
    %127 = vector.broadcast %cst_77 : f32 to vector<8x120xf32>
    %128 = arith.maximumf %126, %127 : vector<8x120xf32>
    %c0_78 = arith.constant 0 : index
    %c0_79 = arith.constant 0 : index
    %129 = vector.load %arg12[%c0_78, %c0_79] : memref<120x84xf32, #tpu.memory_space<vmem>>, vector<120x84xf32>
    %cst_80 = arith.constant dense<0.000000e+00> : vector<8x84xf32>
    %130 = tpu.matmul %128, %129, %cst_80 {dimension_numbers = #tpu.dot_dimension_numbers<[1], [0], [0], [1], [0, 0, 1, 1], [], []>} : vector<8x120xf32>, vector<120x84xf32>, vector<8x84xf32> -> vector<8x84xf32>
    %c0_81 = arith.constant 0 : index
    %c0_82 = arith.constant 0 : index
    %131 = vector.load %arg13[%c0_81, %c0_82] : memref<1x84xf32, #tpu.memory_space<vmem>>, vector<1x84xf32>
    %132 = vector.broadcast %131 : vector<1x84xf32> to vector<8x84xf32>
    %133 = arith.addf %130, %132 : vector<8x84xf32>
    %cst_83 = arith.constant 0.000000e+00 : f32
    %134 = vector.broadcast %cst_83 : f32 to vector<8x84xf32>
    %135 = arith.maximumf %133, %134 : vector<8x84xf32>
    %c0_84 = arith.constant 0 : index
    %c0_85 = arith.constant 0 : index
    %136 = vector.load %arg14[%c0_84, %c0_85] : memref<84x128xf32, #tpu.memory_space<vmem>>, vector<84x128xf32>
    %cst_86 = arith.constant dense<0.000000e+00> : vector<8x128xf32>
    %137 = tpu.matmul %135, %136, %cst_86 {dimension_numbers = #tpu.dot_dimension_numbers<[1], [0], [0], [1], [0, 0, 1, 1], [], []>} : vector<8x84xf32>, vector<84x128xf32>, vector<8x128xf32> -> vector<8x128xf32>
    %c0_87 = arith.constant 0 : index
    %c0_88 = arith.constant 0 : index
    %138 = vector.load %arg15[%c0_87, %c0_88] : memref<1x128xf32, #tpu.memory_space<vmem>>, vector<1x128xf32>
    %139 = vector.broadcast %138 : vector<1x128xf32> to vector<8x128xf32>
    %140 = arith.addf %137, %139 : vector<8x128xf32>
    %c0_89 = arith.constant 0 : index
    %c0_90 = arith.constant 0 : index
    %141 = vector.load %arg16[%c0_89, %c0_90] : memref<8x128xf32, #tpu.memory_space<vmem>>, vector<8x128xf32>
    tpu.vector_store %arg16[%c0_89, %c0_90], %140 {strides = array<i32>} : memref<8x128xf32, #tpu.memory_space<vmem>>, vector<8x128xf32>,
    return
  }
  func.func @transform_0(%arg0: i32) -> (i32, i32, i32) {
    %c0_i32 = arith.constant 0 : i32
    %c0_i32_0 = arith.constant 0 : i32
    %c0_i32_1 = arith.constant 0 : i32
    return %c0_i32, %arg0, %c0_i32_0 : i32, i32, i32
  }
  func.func @transform_1(%arg0: i32) -> (i32, i32, i32) {
    %c0_i32 = arith.constant 0 : i32
    %c0_i32_0 = arith.constant 0 : i32
    %c0_i32_1 = arith.constant 0 : i32
    %c0_i32_2 = arith.constant 0 : i32
    return %c0_i32, %c0_i32_0, %c0_i32_1 : i32, i32, i32
  }
  func.func @transform_2(%arg0: i32) -> (i32, i32) {
    %c0_i32 = arith.constant 0 : i32
    %c0_i32_0 = arith.constant 0 : i32
    %c0_i32_1 = arith.constant 0 : i32
    return %c0_i32, %c0_i32_0 : i32, i32
  }
  func.func @transform_3(%arg0: i32) -> (i32, i32) {
    %c0_i32 = arith.constant 0 : i32
    %c0_i32_0 = arith.constant 0 : i32
    %c0_i32_1 = arith.constant 0 : i32
    return %c0_i32, %c0_i32_0 : i32, i32
  }
  func.func @transform_4(%arg0: i32) -> (i32, i32) {
    %c0_i32 = arith.constant 0 : i32
    %c0_i32_0 = arith.constant 0 : i32
    %c0_i32_1 = arith.constant 0 : i32
    return %c0_i32, %c0_i32_0 : i32, i32
  }
  func.func @transform_5(%arg0: i32) -> (i32, i32, i32) {
    %c0_i32 = arith.constant 0 : i32
    %c0_i32_0 = arith.constant 0 : i32
    %c0_i32_1 = arith.constant 0 : i32
    %c0_i32_2 = arith.constant 0 : i32
    return %c0_i32, %c0_i32_0, %c0_i32_1 : i32, i32, i32
  }
  func.func @transform_6(%arg0: i32) -> (i32, i32) {
    %c0_i32 = arith.constant 0 : i32
    %c0_i32_0 = arith.constant 0 : i32
    %c0_i32_1 = arith.constant 0 : i32
    return %c0_i32, %c0_i32_0 : i32, i32
  }
  func.func @transform_7(%arg0: i32) -> (i32, i32) {
    %c0_i32 = arith.constant 0 : i32
    %c0_i32_0 = arith.constant 0 : i32
    %c0_i32_1 = arith.constant 0 : i32
    return %c0_i32, %c0_i32_0 : i32, i32
  }
  func.func @transform_8(%arg0: i32) -> (i32, i32) {
    %c0_i32 = arith.constant 0 : i32
    %c0_i32_0 = arith.constant 0 : i32
    %c0_i32_1 = arith.constant 0 : i32
    return %c0_i32, %c0_i32_0 : i32, i32
  }
  func.func @transform_9(%arg0: i32) -> (i32, i32, i32) {
    %c0_i32 = arith.constant 0 : i32
    %c0_i32_0 = arith.constant 0 : i32
    %c0_i32_1 = arith.constant 0 : i32
    %c0_i32_2 = arith.constant 0 : i32
    return %c0_i32, %c0_i32_0, %c0_i32_1 : i32, i32, i32
  }
  func.func @transform_10(%arg0: i32) -> (i32, i32) {
    %c0_i32 = arith.constant 0 : i32
    %c0_i32_0 = arith.constant 0 : i32
    %c0_i32_1 = arith.constant 0 : i32
    return %c0_i32, %c0_i32_0 : i32, i32
  }
  func.func @transform_11(%arg0: i32) -> (i32, i32) {
    %c0_i32 = arith.constant 0 : i32
    %c0_i32_0 = arith.constant 0 : i32
    %c0_i32_1 = arith.constant 0 : i32
    return %c0_i32, %c0_i32_0 : i32, i32
  }
  func.func @transform_12(%arg0: i32) -> (i32, i32) {
    %c0_i32 = arith.constant 0 : i32
    %c0_i32_0 = arith.constant 0 : i32
    %c0_i32_1 = arith.constant 0 : i32
    return %c0_i32, %c0_i32_0 : i32, i32
  }
  func.func @transform_13(%arg0: i32) -> (i32, i32) {
    %c0_i32 = arith.constant 0 : i32
    %c0_i32_0 = arith.constant 0 : i32
    %c0_i32_1 = arith.constant 0 : i32
    return %c0_i32, %c0_i32_0 : i32, i32
  }
  func.func @transform_14(%arg0: i32) -> (i32, i32) {
    %c0_i32 = arith.constant 0 : i32
    %c0_i32_0 = arith.constant 0 : i32
    %c0_i32_1 = arith.constant 0 : i32
    return %c0_i32, %c0_i32_0 : i32, i32
  }
  func.func @transform_15(%arg0: i32) -> (i32, i32) {
    %c0_i32 = arith.constant 0 : i32
    %c0_i32_0 = arith.constant 0 : i32
    return %arg0, %c0_i32 : i32, i32
  }
}

</mosaic_0001>

<llo_original>
// kernel: net_forward.1
$region0: #{net_forward.1}
  #allocation0 [shape = 'u32[]', space=smem, size = 0x4, offset = 0x4, fixed_abs, tag = 'smem constant byte address 0x4 - core index']
  #allocation1 [shape = 'u32[144,128]{1,0:T(1,128)}', space=vmem, size = 0x12000, scoped, tag = 'internal scratch']
  %s0 = inlined_call_operand.vmem [shape: f32[32,8,96], index: 0, kind: input, shape index: {}]
  %s1 = inlined_call_operand.vmem [shape: f32[5,96,168], index: 1, kind: input, shape index: {}]
  %s2 = inlined_call_operand.vmem [shape: f32[1,168], index: 2, kind: input, shape index: {}]
  %s3 = inlined_call_operand.vmem [shape: f32[168,84], index: 3, kind: input, shape index: {}]
  %s4 = inlined_call_operand.vmem [shape: f32[168,84], index: 4, kind: input, shape index: {}]
  %s5 = inlined_call_operand.vmem [shape: f32[5,84,160], index: 5, kind: input, shape index: {}]
  %s6 = inlined_call_operand.vmem [shape: f32[1,160], index: 6, kind: input, shape index: {}]
  %s7 = inlined_call_operand.vmem [shape: f32[160,80], index: 7, kind: input, shape index: {}]
  %s8 = inlined_call_operand.vmem [shape: f32[160,80], index: 8, kind: input, shape index: {}]
  %s9 = inlined_call_operand.vmem [shape: f32[5,80,120], index: 9, kind: input, shape index: {}]
  %s10 = inlined_call_operand.vmem [shape: f32[1,120], index: 10, kind: input, shape index: {}]
  %s11 = inlined_call_operand.vmem [shape: f32[120,84], index: 11, kind: input, shape index: {}]
  %s12 = inlined_call_operand.vmem [shape: f32[1,84], index: 12, kind: input, shape index: {}]
  %s13 = inlined_call_operand.vmem [shape: f32[84,128], index: 13, kind: input, shape index: {}]
  %s14 = inlined_call_operand.vmem [shape: f32[1,128], index: 14, kind: input, shape index: {}]
  %s15 = inlined_call_operand.vmem [shape: f32[8,128], index: 15, kind: output, shape index: {}]
  %s16 = sld [smem:[#allocation0]]
  $region70: #{net_forward.1} parent=0
    _
  %s18 = ssub.s32 1, %s16
  %s19 = scalar_select 0, %s18, %s16
  // Predicated region
  $region2: #{net_forward.1} parent=0 // pred_check
    _
  $region3: #{net_forward.1} parent=0 // pred_check_branch
    %21 = sbr.rel (0) target = $region5
  $region4: #{net_forward.1} parent=0 // pred_region
    _
  $region5: #{net_forward.1} parent=0 // pred_fallthru
    _
  // Predicated region
  $region6: #{net_forward.1} parent=0 // pred_check
    _
  $region7: #{net_forward.1} parent=0 // pred_check_branch
    %23 = sbr.rel (0) target = $region9
  $region8: #{net_forward.1} parent=0 // pred_region
    _
  $region9: #{net_forward.1} parent=0 // pred_fallthru
    _
  // Predicated region
  $region10: #{net_forward.1} parent=0 // pred_check
    _
  $region11: #{net_forward.1} parent=0 // pred_check_branch
    %25 = sbr.rel (0) target = $region13
  $region12: #{net_forward.1} parent=0 // pred_region
    _
  $region13: #{net_forward.1} parent=0 // pred_fallthru
    _
  // Predicated region
  $region14: #{net_forward.1} parent=0 // pred_check
    _
  $region15: #{net_forward.1} parent=0 // pred_check_branch
    %27 = sbr.rel (0) target = $region17
  $region16: #{net_forward.1} parent=0 // pred_region
    _
  $region17: #{net_forward.1} parent=0 // pred_fallthru
    _
  // Predicated region
  $region18: #{net_forward.1} parent=0 // pred_check
    _
  $region19: #{net_forward.1} parent=0 // pred_check_branch
    %29 = sbr.rel (0) target = $region21
  $region20: #{net_forward.1} parent=0 // pred_region
    _
  $region21: #{net_forward.1} parent=0 // pred_fallthru
    _
  // Predicated region
  $region22: #{net_forward.1} parent=0 // pred_check
    _
  $region23: #{net_forward.1} parent=0 // pred_check_branch
    %31 = sbr.rel (0) target = $region25
  $region24: #{net_forward.1} parent=0 // pred_region
    _
  $region25: #{net_forward.1} parent=0 // pred_fallthru
    _
  // Predicated region
  $region26: #{net_forward.1} parent=0 // pred_check
    _
  $region27: #{net_forward.1} parent=0 // pred_check_branch
    %33 = sbr.rel (0) target = $region29
  $region28: #{net_forward.1} parent=0 // pred_region
    _
  $region29: #{net_forward.1} parent=0 // pred_fallthru
    _
  // Predicated region
  $region30: #{net_forward.1} parent=0 // pred_check
    _
  $region31: #{net_forward.1} parent=0 // pred_check_branch
    %35 = sbr.rel (0) target = $region33
  $region32: #{net_forward.1} parent=0 // pred_region
    _
  $region33: #{net_forward.1} parent=0 // pred_fallthru
    _
  // Predicated region
  $region34: #{net_forward.1} parent=0 // pred_check
    _
  $region35: #{net_forward.1} parent=0 // pred_check_branch
    %37 = sbr.rel (0) target = $region37
  $region36: #{net_forward.1} parent=0 // pred_region
    _
  $region37: #{net_forward.1} parent=0 // pred_fallthru
    _
  // Predicated region
  $region38: #{net_forward.1} parent=0 // pred_check
    _
  $region39: #{net_forward.1} parent=0 // pred_check_branch
    %39 = sbr.rel (0) target = $region41
  $region40: #{net_forward.1} parent=0 // pred_region
    _
  $region41: #{net_forward.1} parent=0 // pred_fallthru
    _
  // Predicated region
  $region42: #{net_forward.1} parent=0 // pred_check
    _
  $region43: #{net_forward.1} parent=0 // pred_check_branch
    %41 = sbr.rel (0) target = $region45
  $region44: #{net_forward.1} parent=0 // pred_region
    _
  $region45: #{net_forward.1} parent=0 // pred_fallthru
    _
  // Predicated region
  $region46: #{net_forward.1} parent=0 // pred_check
    _
  $region47: #{net_forward.1} parent=0 // pred_check_branch
    %43 = sbr.rel (0) target = $region49
  $region48: #{net_forward.1} parent=0 // pred_region
    _
  $region49: #{net_forward.1} parent=0 // pred_fallthru
    _
  // Predicated region
  $region50: #{net_forward.1} parent=0 // pred_check
    _
  $region51: #{net_forward.1} parent=0 // pred_check_branch
    %45 = sbr.rel (0) target = $region53
  $region52: #{net_forward.1} parent=0 // pred_region
    _
  $region53: #{net_forward.1} parent=0 // pred_fallthru
    _
  // Predicated region
  $region54: #{net_forward.1} parent=0 // pred_check
    _
  $region55: #{net_forward.1} parent=0 // pred_check_branch
    %47 = sbr.rel (0) target = $region57
  $region56: #{net_forward.1} parent=0 // pred_region
    _
  $region57: #{net_forward.1} parent=0 // pred_fallthru
    _
  // Predicated region
  $region58: #{net_forward.1} parent=0 // pred_check
    _
  $region59: #{net_forward.1} parent=0 // pred_check_branch
    %49 = sbr.rel (0) target = $region61
  $region60: #{net_forward.1} parent=0 // pred_region
    _
  $region61: #{net_forward.1} parent=0 // pred_fallthru
    _
  %v50 = vld [vmem:[%s0] sm:$0xff]
  %v51 = vld [vmem:[%s0 + $0x8] sm:$0xff]
  %v52 = vld [vmem:[%s0 + $0x10] sm:$0xff]
  %v53 = vld [vmem:[%s0 + $0x18] sm:$0xff]
  %v54 = vld [vmem:[%s0 + $0x20] sm:$0xff]
  %v55 = vld [vmem:[%s0 + $0x28] sm:$0xff]
  %v56 = vld [vmem:[%s0 + $0x30] sm:$0xff]
  %v57 = vld [vmem:[%s0 + $0x38] sm:$0xff]
  %v58 = vld [vmem:[%s0 + $0x40] sm:$0xff]
  %v59 = vld [vmem:[%s0 + $0x48] sm:$0xff]
  %v60 = vld [vmem:[%s0 + $0x50] sm:$0xff]
  %v61 = vld [vmem:[%s0 + $0x58] sm:$0xff]
  %v62 = vld [vmem:[%s0 + $0x60] sm:$0xff]
  %v63 = vld [vmem:[%s0 + $0x68] sm:$0xff]
  %v64 = vld [vmem:[%s0 + $0x70] sm:$0xff]
  %v65 = vld [vmem:[%s0 + $0x78] sm:$0xff]
  %v66 = vld [vmem:[%s0 + $0x80] sm:$0xff]
  %v67 = vld [vmem:[%s0 + $0x88] sm:$0xff]
  %v68 = vld [vmem:[%s0 + $0x90] sm:$0xff]
  %v69 = vld [vmem:[%s0 + $0x98] sm:$0xff]
  %v70 = vld [vmem:[%s0 + $0xa0] sm:$0xff]
  %v71 = vld [vmem:[%s0 + $0xa8] sm:$0xff]
  %v72 = vld [vmem:[%s0 + $0xb0] sm:$0xff]
  %v73 = vld [vmem:[%s0 + $0xb8] sm:$0xff]
  %v74 = vld [vmem:[%s0 + $0xc0] sm:$0xff]
  %v75 = vld [vmem:[%s0 + $0xc8] sm:$0xff]
  %v76 = vld [vmem:[%s0 + $0xd0] sm:$0xff]
  %v77 = vld [vmem:[%s0 + $0xd8] sm:$0xff]
  %v78 = vld [vmem:[%s0 + $0xe0] sm:$0xff]
  %v79 = vld [vmem:[%s0 + $0xe8] sm:$0xff]
  %v80 = vld [vmem:[%s0 + $0xf0] sm:$0xff]
  %v81 = vld [vmem:[%s0 + $0xf8] sm:$0xff]
  %v82 = vld [vmem:[%s1] sm:$0xff]
  %v83 = vld [vmem:[%s1 + $0x8] sm:$0xff]
  %v84 = vld [vmem:[%s1 + $0x10] sm:$0xff]
  %v85 = vld [vmem:[%s1 + $0x18] sm:$0xff]
  %v86 = vld [vmem:[%s1 + $0x20] sm:$0xff]
  %v87 = vld [vmem:[%s1 + $0x28] sm:$0xff]
  %v88 = vld [vmem:[%s1 + $0x30] sm:$0xff]
  %v89 = vld [vmem:[%s1 + $0x38] sm:$0xff]
  %v90 = vld [vmem:[%s1 + $0x40] sm:$0xff]
  %v91 = vld [vmem:[%s1 + $0x48] sm:$0xff]
  %v92 = vld [vmem:[%s1 + $0x50] sm:$0xff]
  %v93 = vld [vmem:[%s1 + $0x58] sm:$0xff]
  %v94 = vld [vmem:[%s1 + $0x60] sm:$0xff]
  %v95 = vld [vmem:[%s1 + $0x68] sm:$0xff]
  %v96 = vld [vmem:[%s1 + $0x70] sm:$0xff]
  %v97 = vld [vmem:[%s1 + $0x78] sm:$0xff]
  %v98 = vld [vmem:[%s1 + $0x80] sm:$0xff]
  %v99 = vld [vmem:[%s1 + $0x88] sm:$0xff]
  %v100 = vld [vmem:[%s1 + $0x90] sm:$0xff]
  %v101 = vld [vmem:[%s1 + $0x98] sm:$0xff]
  %v102 = vld [vmem:[%s1 + $0xa0] sm:$0xff]
  %v103 = vld [vmem:[%s1 + $0xa8] sm:$0xff]
  %v104 = vld [vmem:[%s1 + $0xb0] sm:$0xff]
  %v105 = vld [vmem:[%s1 + $0xb8] sm:$0xff]
  %s106 = scalar_lea.vmem %s1, 192
  %v107 = vld [vmem:[%s106] sm:$0xff]
  %v108 = vld [vmem:[%s106 + $0x8] sm:$0xff]
  %v109 = vld [vmem:[%s106 + $0x10] sm:$0xff]
  %v110 = vld [vmem:[%s106 + $0x18] sm:$0xff]
  %v111 = vld [vmem:[%s106 + $0x20] sm:$0xff]
  %v112 = vld [vmem:[%s106 + $0x28] sm:$0xff]
  %v113 = vld [vmem:[%s106 + $0x30] sm:$0xff]
  %v114 = vld [vmem:[%s106 + $0x38] sm:$0xff]
  %v115 = vld [vmem:[%s106 + $0x40] sm:$0xff]
  %v116 = vld [vmem:[%s106 + $0x48] sm:$0xff]
  %v117 = vld [vmem:[%s106 + $0x50] sm:$0xff]
  %v118 = vld [vmem:[%s106 + $0x58] sm:$0xff]
  %v119 = vld [vmem:[%s106 + $0x60] sm:$0xff]
  %v120 = vld [vmem:[%s106 + $0x68] sm:$0xff]
  %v121 = vld [vmem:[%s106 + $0x70] sm:$0xff]
  %v122 = vld [vmem:[%s106 + $0x78] sm:$0xff]
  %v123 = vld [vmem:[%s106 + $0x80] sm:$0xff]
  %v124 = vld [vmem:[%s106 + $0x88] sm:$0xff]
  %v125 = vld [vmem:[%s106 + $0x90] sm:$0xff]
  %v126 = vld [vmem:[%s106 + $0x98] sm:$0xff]
  %v127 = vld [vmem:[%s106 + $0xa0] sm:$0xff]
  %v128 = vld [vmem:[%s106 + $0xa8] sm:$0xff]
  %v129 = vld [vmem:[%s106 + $0xb0] sm:$0xff]
  %v130 = vld [vmem:[%s106 + $0xb8] sm:$0xff]
  %vm131 = vcmask 785408
  %v133 = vsel %vm131, %v51, 0
  %v136 = vsel %vm131, %v52, 0
  %v139 = vsel %vm131, %v53, 0
  %v142 = vsel %vm131, %v54, 0
  %v145 = vsel %vm131, %v55, 0
  %v148 = vsel %vm131, %v56, 0
  %v151 = vsel %vm131, %v57, 0
  %v154 = vsel %vm131, %v58, 0
  %v157 = vsel %vm131, %v59, 0
  %v160 = vsel %vm131, %v60, 0
  %v163 = vsel %vm131, %v61, 0
  %v166 = vsel %vm131, %v62, 0
  %v169 = vsel %vm131, %v63, 0
  %v172 = vsel %vm131, %v64, 0
  %v175 = vsel %vm131, %v65, 0
  %v178 = vsel %vm131, %v66, 0
  %v181 = vsel %vm131, %v67, 0
  %v184 = vsel %vm131, %v68, 0
  %v187 = vsel %vm131, %v69, 0
  %v190 = vsel %vm131, %v70, 0
  %v193 = vsel %vm131, %v71, 0
  %v196 = vsel %vm131, %v72, 0
  %v199 = vsel %vm131, %v73, 0
  %v202 = vsel %vm131, %v74, 0
  %v205 = vsel %vm131, %v75, 0
  %v208 = vsel %vm131, %v76, 0
  %v211 = vsel %vm131, %v77, 0
  %v214 = vsel %vm131, %v78, 0
  %216 = vmatprep.subr.mxu0 0.0
  %217 = vmatpush1.msra.mxu0 0.0
  %218 = vmatprep.subr.mxu0 0.0
  %219 = vmatpush1.msra.mxu0 0.0
  %220 = vmatprep.subr.mxu0 0.0
  %221 = vmatpush1.msra.mxu0 0.0
  %222 = vmatprep.subr.mxu0 0.0
  %223 = vmatpush1.msra.mxu0 0.0
  %224 = vmatprep.subr.mxu0 %v130
  %225 = vmatpush1.msra.mxu0 %v129
  %226 = vmatprep.subr.mxu0 %v128
  %227 = vmatpush1.msra.mxu0 %v127
  %228 = vmatprep.subr.mxu0 %v126
  %229 = vmatpush1.msra.mxu0 %v125
  %230 = vmatprep.subr.mxu0 %v124
  %231 = vmatpush1.msra.mxu0 %v123
  %232 = vmatprep.subr.mxu0 %v122
  %233 = vmatpush1.msra.mxu0 %v121
  %234 = vmatprep.subr.mxu0 %v120
  %235 = vmatpush1.msra.mxu0 %v119
  %236 = vmatprep.subr.mxu0 %v118
  %237 = vmatpush1.msra.mxu0 %v117
  %238 = vmatprep.subr.mxu0 %v116
  %239 = vmatpush1.msra.mxu0 %v115
  %240 = vmatprep.subr.mxu0 %v114
  %241 = vmatpush1.msra.mxu0 %v113
  %242 = vmatprep.subr.mxu0 %v112
  %243 = vmatpush1.msra.mxu0 %v111
  %244 = vmatprep.subr.mxu0 %v110
  %245 = vmatpush1.msra.mxu0 %v109
  %246 = vmatprep.subr.mxu0 %v108
  %247 = vmatpush1.msra.mxu0 %v107
  %248 = vmatprep.subr.mxu0 0.0
  %249 = vmatpush2.msra.mxu0 0.0
  %250 = vmatprep.subr.mxu0 0.0
  %251 = vmatpush2.msra.mxu0 0.0
  %252 = vmatprep.subr.mxu0 0.0
  %253 = vmatpush2.msra.mxu0 0.0
  %254 = vmatprep.subr.mxu0 0.0
  %255 = vmatpush2.msra.mxu0 0.0
  %256 = vmatprep.subr.mxu0 0.0
  %257 = vmatpush2.msra.mxu0 0.0
  %258 = vmatprep.subr.mxu0 0.0
  %259 = vmatpush2.msra.mxu0 0.0
  %260 = vmatprep.subr.mxu0 0.0
  %261 = vmatpush2.msra.mxu0 0.0
  %262 = vmatprep.subr.mxu0 0.0
  %263 = vmatpush2.msra.mxu0 0.0
  %264 = vmatprep.subr.mxu0 0.0
  %265 = vmatpush2.msra.mxu0 0.0
  %266 = vmatprep.subr.mxu0 0.0
  %267 = vmatpush2.msra.mxu0 0.0
  %268 = vmatprep.subr.mxu0 0.0
  %269 = vmatpush2.msra.mxu0 0.0
  %270 = vmatprep.subr.mxu0 0.0
  %271 = vmatpush2.msra.mxu0 0.0
  %272 = vmatprep.subr.mxu0 0.0
  %273 = vmatpush2.msra.mxu0 0.0
  %274 = vmatprep.subr.mxu0 0.0
  %275 = vmatpush2.msra.mxu0 0.0
  %276 = vmatprep.subr.mxu0 0.0
  %277 = vmatpush2.msra.mxu0 0.0
  %278 = vmatprep.subr.mxu0 0.0
  %279 = vmatpush2.msra.mxu0 0.0
  %280 = vmatprep.mubr.f32.mxu0 0.0
  %281 = vmatmul.mubr.f32.gmra.mxu0 %v133
  %v282 = vpop.f32.mrf.mxu0
  %v283 = vadd.f32 0.0, %v282
  %v284 = vpop.f32.mrf.mxu0
  %v285 = vadd.f32 0.0, %v284
  %286 = vmatprep.mubr.f32.mxu0 0.0
  %287 = vmatmul.mubr.f32.gmra.mxu0 %v136
  %v288 = vpop.f32.mrf.mxu0
  %v289 = vadd.f32 0.0, %v288
  %v290 = vpop.f32.mrf.mxu0
  %v291 = vadd.f32 0.0, %v290
  %292 = vmatprep.mubr.f32.mxu0 0.0
  %293 = vmatmul.mubr.f32.gmra.mxu0 %v139
  %v294 = vpop.f32.mrf.mxu0
  %v295 = vadd.f32 0.0, %v294
  %v296 = vpop.f32.mrf.mxu0
  %v297 = vadd.f32 0.0, %v296
  %298 = vmatprep.mubr.f32.mxu0 0.0
  %299 = vmatmul.mubr.f32.gmra.mxu0 %v142
  %v300 = vpop.f32.mrf.mxu0
  %v301 = vadd.f32 0.0, %v300
  %v302 = vpop.f32.mrf.mxu0
  %v303 = vadd.f32 0.0, %v302
  %304 = vmatprep.mubr.f32.mxu0 0.0
  %305 = vmatmul.mubr.f32.gmra.mxu0 %v145
  %v306 = vpop.f32.mrf.mxu0
  %v307 = vadd.f32 0.0, %v306
  %v308 = vpop.f32.mrf.mxu0
  %v309 = vadd.f32 0.0, %v308
  %310 = vmatprep.mubr.f32.mxu0 0.0
  %311 = vmatmul.mubr.f32.gmra.mxu0 %v148
  %v312 = vpop.f32.mrf.mxu0
  %v313 = vadd.f32 0.0, %v312
  %v314 = vpop.f32.mrf.mxu0
  %v315 = vadd.f32 0.0, %v314
  %316 = vmatprep.mubr.f32.mxu0 0.0
  %317 = vmatmul.mubr.f32.gmra.mxu0 %v151
  %v318 = vpop.f32.mrf.mxu0
  %v319 = vadd.f32 0.0, %v318
  %v320 = vpop.f32.mrf.mxu0
  %v321 = vadd.f32 0.0, %v320
  %322 = vmatprep.mubr.f32.mxu0 0.0
  %323 = vmatmul.mubr.f32.gmra.mxu0 %v154
  %v324 = vpop.f32.mrf.mxu0
  %v325 = vadd.f32 0.0, %v324
  %v326 = vpop.f32.mrf.mxu0
  %v327 = vadd.f32 0.0, %v326
  %328 = vmatprep.mubr.f32.mxu0 0.0
  %329 = vmatmul.mubr.f32.gmra.mxu0 %v157
  %v330 = vpop.f32.mrf.mxu0
  %v331 = vadd.f32 0.0, %v330
  %v332 = vpop.f32.mrf.mxu0
  %v333 = vadd.f32 0.0, %v332
  %334 = vmatprep.mubr.f32.mxu0 0.0
  %335 = vmatmul.mubr.f32.gmra.mxu0 %v160
  %v336 = vpop.f32.mrf.mxu0
  %v337 = vadd.f32 0.0, %v336
  %v338 = vpop.f32.mrf.mxu0
  %v339 = vadd.f32 0.0, %v338
  %340 = vmatprep.mubr.f32.mxu0 0.0
  %341 = vmatmul.mubr.f32.gmra.mxu0 %v163
  %v342 = vpop.f32.mrf.mxu0
  %v343 = vadd.f32 0.0, %v342
  %v344 = vpop.f32.mrf.mxu0
  %v345 = vadd.f32 0.0, %v344
  %346 = vmatprep.mubr.f32.mxu0 0.0
  %347 = vmatmul.mubr.f32.gmra.mxu0 %v166
  %v348 = vpop.f32.mrf.mxu0
  %v349 = vadd.f32 0.0, %v348
  %v350 = vpop.f32.mrf.mxu0
  %v351 = vadd.f32 0.0, %v350
  %352 = vmatprep.mubr.f32.mxu0 0.0
  %353 = vmatmul.mubr.f32.gmra.mxu0 %v169
  %v354 = vpop.f32.mrf.mxu0
  %v355 = vadd.f32 0.0, %v354
  %v356 = vpop.f32.mrf.mxu0
  %v357 = vadd.f32 0.0, %v356
  %358 = vmatprep.mubr.f32.mxu0 0.0
  %359 = vmatmul.mubr.f32.gmra.mxu0 %v172
  %v360 = vpop.f32.mrf.mxu0
  %v361 = vadd.f32 0.0, %v360
  %v362 = vpop.f32.mrf.mxu0
  %v363 = vadd.f32 0.0, %v362
  %364 = vmatprep.mubr.f32.mxu0 0.0
  %365 = vmatmul.mubr.f32.gmra.mxu0 %v175
  %v366 = vpop.f32.mrf.mxu0
  %v367 = vadd.f32 0.0, %v366
  %v368 = vpop.f32.mrf.mxu0
  %v369 = vadd.f32 0.0, %v368
  %370 = vmatprep.mubr.f32.mxu0 0.0
  %371 = vmatmul.mubr.f32.gmra.mxu0 %v178
  %v372 = vpop.f32.mrf.mxu0
  %v373 = vadd.f32 0.0, %v372
  %v374 = vpop.f32.mrf.mxu0
  %v375 = vadd.f32 0.0, %v374
  %376 = vmatprep.mubr.f32.mxu0 0.0
  %377 = vmatmul.mubr.f32.gmra.mxu0 %v181
  %v378 = vpop.f32.mrf.mxu0
  %v379 = vadd.f32 0.0, %v378
  %v380 = vpop.f32.mrf.mxu0
  %v381 = vadd.f32 0.0, %v380
  %382 = vmatprep.mubr.f32.mxu0 0.0
  %383 = vmatmul.mubr.f32.gmra.mxu0 %v184
  %v384 = vpop.f32.mrf.mxu0
  %v385 = vadd.f32 0.0, %v384
  %v386 = vpop.f32.mrf.mxu0
  %v387 = vadd.f32 0.0, %v386
  %388 = vmatprep.mubr.f32.mxu0 0.0
  %389 = vmatmul.mubr.f32.gmra.mxu0 %v187
  %v390 = vpop.f32.mrf.mxu0
  %v391 = vadd.f32 0.0, %v390
  %v392 = vpop.f32.mrf.mxu0
  %v393 = vadd.f32 0.0, %v392
  %394 = vmatprep.mubr.f32.mxu0 0.0
  %395 = vmatmul.mubr.f32.gmra.mxu0 %v190
  %v396 = vpop.f32.mrf.mxu0
  %v397 = vadd.f32 0.0, %v396
  %v398 = vpop.f32.mrf.mxu0
  %v399 = vadd.f32 0.0, %v398
  %400 = vmatprep.mubr.f32.mxu0 0.0
  %401 = vmatmul.mubr.f32.gmra.mxu0 %v193
  %v402 = vpop.f32.mrf.mxu0
  %v403 = vadd.f32 0.0, %v402
  %v404 = vpop.f32.mrf.mxu0
  %v405 = vadd.f32 0.0, %v404
  %406 = vmatprep.mubr.f32.mxu0 0.0
  %407 = vmatmul.mubr.f32.gmra.mxu0 %v196
  %v408 = vpop.f32.mrf.mxu0
  %v409 = vadd.f32 0.0, %v408
  %v410 = vpop.f32.mrf.mxu0
  %v411 = vadd.f32 0.0, %v410
  %412 = vmatprep.mubr.f32.mxu0 0.0
  %413 = vmatmul.mubr.f32.gmra.mxu0 %v199
  %v414 = vpop.f32.mrf.mxu0
  %v415 = vadd.f32 0.0, %v414
  %v416 = vpop.f32.mrf.mxu0
  %v417 = vadd.f32 0.0, %v416
  %418 = vmatprep.mubr.f32.mxu0 0.0
  %419 = vmatmul.mubr.f32.gmra.mxu0 %v202
  %v420 = vpop.f32.mrf.mxu0
  %v421 = vadd.f32 0.0, %v420
  %v422 = vpop.f32.mrf.mxu0
  %v423 = vadd.f32 0.0, %v422
  %424 = vmatprep.mubr.f32.mxu0 0.0
  %425 = vmatmul.mubr.f32.gmra.mxu0 %v205
  %v426 = vpop.f32.mrf.mxu0
  %v427 = vadd.f32 0.0, %v426
  %v428 = vpop.f32.mrf.mxu0
  %v429 = vadd.f32 0.0, %v428
  %430 = vmatprep.mubr.f32.mxu0 0.0
  %431 = vmatmul.mubr.f32.gmra.mxu0 %v208
  %v432 = vpop.f32.mrf.mxu0
  %v433 = vadd.f32 0.0, %v432
  %v434 = vpop.f32.mrf.mxu0
  %v435 = vadd.f32 0.0, %v434
  %436 = vmatprep.mubr.f32.mxu0 0.0
  %437 = vmatmul.mubr.f32.gmra.mxu0 %v211
  %v438 = vpop.f32.mrf.mxu0
  %v439 = vadd.f32 0.0, %v438
  %v440 = vpop.f32.mrf.mxu0
  %v441 = vadd.f32 0.0, %v440
  %442 = vmatprep.mubr.f32.mxu0 0.0
  %443 = vmatmul.mubr.f32.gmra.mxu0 %v214
  %v444 = vpop.f32.mrf.mxu0
  %v445 = vadd.f32 0.0, %v444
  %v446 = vpop.f32.mrf.mxu0
  %v447 = vadd.f32 0.0, %v446
  %448 = vdwg.mxu0
  %v450 = vsel %vm131, %v50, 0
  %452 = vmatprep.subr.mxu0 0.0
  %453 = vmatpush1.msra.mxu0 0.0
  %454 = vmatprep.subr.mxu0 0.0
  %455 = vmatpush1.msra.mxu0 0.0
  %456 = vmatprep.subr.mxu0 0.0
  %457 = vmatpush1.msra.mxu0 0.0
  %458 = vmatprep.subr.mxu0 0.0
  %459 = vmatpush1.msra.mxu0 0.0
  %460 = vmatprep.subr.mxu0 %v105
  %461 = vmatpush1.msra.mxu0 %v104
  %462 = vmatprep.subr.mxu0 %v103
  %463 = vmatpush1.msra.mxu0 %v102
  %464 = vmatprep.subr.mxu0 %v101
  %465 = vmatpush1.msra.mxu0 %v100
  %466 = vmatprep.subr.mxu0 %v99
  %467 = vmatpush1.msra.mxu0 %v98
  %468 = vmatprep.subr.mxu0 %v97
  %469 = vmatpush1.msra.mxu0 %v96
  %470 = vmatprep.subr.mxu0 %v95
  %471 = vmatpush1.msra.mxu0 %v94
  %472 = vmatprep.subr.mxu0 %v93
  %473 = vmatpush1.msra.mxu0 %v92
  %474 = vmatprep.subr.mxu0 %v91
  %475 = vmatpush1.msra.mxu0 %v90
  %476 = vmatprep.subr.mxu0 %v89
  %477 = vmatpush1.msra.mxu0 %v88
  %478 = vmatprep.subr.mxu0 %v87
  %479 = vmatpush1.msra.mxu0 %v86
  %480 = vmatprep.subr.mxu0 %v85
  %481 = vmatpush1.msra.mxu0 %v84
  %482 = vmatprep.subr.mxu0 %v83
  %483 = vmatpush1.msra.mxu0 %v82
  %484 = vmatprep.subr.mxu0 0.0
  %485 = vmatpush2.msra.mxu0 0.0
  %486 = vmatprep.subr.mxu0 0.0
  %487 = vmatpush2.msra.mxu0 0.0
  %488 = vmatprep.subr.mxu0 0.0
  %489 = vmatpush2.msra.mxu0 0.0
  %490 = vmatprep.subr.mxu0 0.0
  %491 = vmatpush2.msra.mxu0 0.0
  %492 = vmatprep.subr.mxu0 0.0
  %493 = vmatpush2.msra.mxu0 0.0
  %494 = vmatprep.subr.mxu0 0.0
  %495 = vmatpush2.msra.mxu0 0.0
  %496 = vmatprep.subr.mxu0 0.0
  %497 = vmatpush2.msra.mxu0 0.0
  %498 = vmatprep.subr.mxu0 0.0
  %499 = vmatpush2.msra.mxu0 0.0
  %500 = vmatprep.subr.mxu0 0.0
  %501 = vmatpush2.msra.mxu0 0.0
  %502 = vmatprep.subr.mxu0 0.0
  %503 = vmatpush2.msra.mxu0 0.0
  %504 = vmatprep.subr.mxu0 0.0
  %505 = vmatpush2.msra.mxu0 0.0
  %506 = vmatprep.subr.mxu0 0.0
  %507 = vmatpush2.msra.mxu0 0.0
  %508 = vmatprep.subr.mxu0 0.0
  %509 = vmatpush2.msra.mxu0 0.0
  %510 = vmatprep.subr.mxu0 0.0
  %511 = vmatpush2.msra.mxu0 0.0
  %512 = vmatprep.subr.mxu0 0.0
  %513 = vmatpush2.msra.mxu0 0.0
  %514 = vmatprep.subr.mxu0 0.0
  %515 = vmatpush2.msra.mxu0 0.0
  %516 = vmatprep.mubr.f32.mxu0 0.0
  %517 = vmatmul.mubr.f32.gmra.mxu0 %v450
  %v518 = vpop.f32.mrf.mxu0
  %v519 = vadd.f32 %v283, %v518
  %v520 = vpop.f32.mrf.mxu0
  %v521 = vadd.f32 %v285, %v520
  %522 = vmatprep.mubr.f32.mxu0 0.0
  %523 = vmatmul.mubr.f32.gmra.mxu0 %v133
  %v524 = vpop.f32.mrf.mxu0
  %v525 = vadd.f32 %v289, %v524
  %v526 = vpop.f32.mrf.mxu0
  %v527 = vadd.f32 %v291, %v526
  %528 = vmatprep.mubr.f32.mxu0 0.0
  %529 = vmatmul.mubr.f32.gmra.mxu0 %v136
  %v530 = vpop.f32.mrf.mxu0
  %v531 = vadd.f32 %v295, %v530
  %v532 = vpop.f32.mrf.mxu0
  %v533 = vadd.f32 %v297, %v532
  %534 = vmatprep.mubr.f32.mxu0 0.0
  %535 = vmatmul.mubr.f32.gmra.mxu0 %v139
  %v536 = vpop.f32.mrf.mxu0
  %v537 = vadd.f32 %v301, %v536
  %v538 = vpop.f32.mrf.mxu0
  %v539 = vadd.f32 %v303, %v538
  %540 = vmatprep.mubr.f32.mxu0 0.0
  %541 = vmatmul.mubr.f32.gmra.mxu0 %v142
  %v542 = vpop.f32.mrf.mxu0
  %v543 = vadd.f32 %v307, %v542
  %v544 = vpop.f32.mrf.mxu0
  %v545 = vadd.f32 %v309, %v544
  %546 = vmatprep.mubr.f32.mxu0 0.0
  %547 = vmatmul.mubr.f32.gmra.mxu0 %v145
  %v548 = vpop.f32.mrf.mxu0
  %v549 = vadd.f32 %v313, %v548
  %v550 = vpop.f32.mrf.mxu0
  %v551 = vadd.f32 %v315, %v550
  %552 = vmatprep.mubr.f32.mxu0 0.0
  %553 = vmatmul.mubr.f32.gmra.mxu0 %v148
  %v554 = vpop.f32.mrf.mxu0
  %v555 = vadd.f32 %v319, %v554
  %v556 = vpop.f32.mrf.mxu0
  %v557 = vadd.f32 %v321, %v556
  %558 = vmatprep.mubr.f32.mxu0 0.0
  %559 = vmatmul.mubr.f32.gmra.mxu0 %v151
  %v560 = vpop.f32.mrf.mxu0
  %v561 = vadd.f32 %v325, %v560
  %v562 = vpop.f32.mrf.mxu0
  %v563 = vadd.f32 %v327, %v562
  %564 = vmatprep.mubr.f32.mxu0 0.0
  %565 = vmatmul.mubr.f32.gmra.mxu0 %v154
  %v566 = vpop.f32.mrf.mxu0
  %v567 = vadd.f32 %v331, %v566
  %v568 = vpop.f32.mrf.mxu0
  %v569 = vadd.f32 %v333, %v568
  %570 = vmatprep.mubr.f32.mxu0 0.0
  %571 = vmatmul.mubr.f32.gmra.mxu0 %v157
  %v572 = vpop.f32.mrf.mxu0
  %v573 = vadd.f32 %v337, %v572
  %v574 = vpop.f32.mrf.mxu0
  %v575 = vadd.f32 %v339, %v574
  %576 = vmatprep.mubr.f32.mxu0 0.0
  %577 = vmatmul.mubr.f32.gmra.mxu0 %v160
  %v578 = vpop.f32.mrf.mxu0
  %v579 = vadd.f32 %v343, %v578
  %v580 = vpop.f32.mrf.mxu0
  %v581 = vadd.f32 %v345, %v580
  %582 = vmatprep.mubr.f32.mxu0 0.0
  %583 = vmatmul.mubr.f32.gmra.mxu0 %v163
  %v584 = vpop.f32.mrf.mxu0
  %v585 = vadd.f32 %v349, %v584
  %v586 = vpop.f32.mrf.mxu0
  %v587 = vadd.f32 %v351, %v586
  %588 = vmatprep.mubr.f32.mxu0 0.0
  %589 = vmatmul.mubr.f32.gmra.mxu0 %v166
  %v590 = vpop.f32.mrf.mxu0
  %v591 = vadd.f32 %v355, %v590
  %v592 = vpop.f32.mrf.mxu0
  %v593 = vadd.f32 %v357, %v592
  %594 = vmatprep.mubr.f32.mxu0 0.0
  %595 = vmatmul.mubr.f32.gmra.mxu0 %v169
  %v596 = vpop.f32.mrf.mxu0
  %v597 = vadd.f32 %v361, %v596
  %v598 = vpop.f32.mrf.mxu0
  %v599 = vadd.f32 %v363, %v598
  %600 = vmatprep.mubr.f32.mxu0 0.0
  %601 = vmatmul.mubr.f32.gmra.mxu0 %v172
  %v602 = vpop.f32.mrf.mxu0
  %v603 = vadd.f32 %v367, %v602
  %v604 = vpop.f32.mrf.mxu0
  %v605 = vadd.f32 %v369, %v604
  %606 = vmatprep.mubr.f32.mxu0 0.0
  %607 = vmatmul.mubr.f32.gmra.mxu0 %v175
  %v608 = vpop.f32.mrf.mxu0
  %v609 = vadd.f32 %v373, %v608
  %v610 = vpop.f32.mrf.mxu0
  %v611 = vadd.f32 %v375, %v610
  %612 = vmatprep.mubr.f32.mxu0 0.0
  %613 = vmatmul.mubr.f32.gmra.mxu0 %v178
  %v614 = vpop.f32.mrf.mxu0
  %v615 = vadd.f32 %v379, %v614
  %v616 = vpop.f32.mrf.mxu0
  %v617 = vadd.f32 %v381, %v616
  %618 = vmatprep.mubr.f32.mxu0 0.0
  %619 = vmatmul.mubr.f32.gmra.mxu0 %v181
  %v620 = vpop.f32.mrf.mxu0
  %v621 = vadd.f32 %v385, %v620
  %v622 = vpop.f32.mrf.mxu0
  %v623 = vadd.f32 %v387, %v622
  %624 = vmatprep.mubr.f32.mxu0 0.0
  %625 = vmatmul.mubr.f32.gmra.mxu0 %v184
  %v626 = vpop.f32.mrf.mxu0
  %v627 = vadd.f32 %v391, %v626
  %v628 = vpop.f32.mrf.mxu0
  %v629 = vadd.f32 %v393, %v628
  %630 = vmatprep.mubr.f32.mxu0 0.0
  %631 = vmatmul.mubr.f32.gmra.mxu0 %v187
  %v632 = vpop.f32.mrf.mxu0
  %v633 = vadd.f32 %v397, %v632
  %v634 = vpop.f32.mrf.mxu0
  %v635 = vadd.f32 %v399, %v634
  %636 = vmatprep.mubr.f32.mxu0 0.0
  %637 = vmatmul.mubr.f32.gmra.mxu0 %v190
  %v638 = vpop.f32.mrf.mxu0
  %v639 = vadd.f32 %v403, %v638
  %v640 = vpop.f32.mrf.mxu0
  %v641 = vadd.f32 %v405, %v640
  %642 = vmatprep.mubr.f32.mxu0 0.0
  %643 = vmatmul.mubr.f32.gmra.mxu0 %v193
  %v644 = vpop.f32.mrf.mxu0
  %v645 = vadd.f32 %v409, %v644
  %v646 = vpop.f32.mrf.mxu0
  %v647 = vadd.f32 %v411, %v646
  %648 = vmatprep.mubr.f32.mxu0 0.0
  %649 = vmatmul.mubr.f32.gmra.mxu0 %v196
  %v650 = vpop.f32.mrf.mxu0
  %v651 = vadd.f32 %v415, %v650
  %v652 = vpop.f32.mrf.mxu0
  %v653 = vadd.f32 %v417, %v652
  %654 = vmatprep.mubr.f32.mxu0 0.0
  %655 = vmatmul.mubr.f32.gmra.mxu0 %v199
  %v656 = vpop.f32.mrf.mxu0
  %v657 = vadd.f32 %v421, %v656
  %v658 = vpop.f32.mrf.mxu0
  %v659 = vadd.f32 %v423, %v658
  %660 = vmatprep.mubr.f32.mxu0 0.0
  %661 = vmatmul.mubr.f32.gmra.mxu0 %v202
  %v662 = vpop.f32.mrf.mxu0
  %v663 = vadd.f32 %v427, %v662
  %v664 = vpop.f32.mrf.mxu0
  %v665 = vadd.f32 %v429, %v664
  %666 = vmatprep.mubr.f32.mxu0 0.0
  %667 = vmatmul.mubr.f32.gmra.mxu0 %v205
  %v668 = vpop.f32.mrf.mxu0
  %v669 = vadd.f32 %v433, %v668
  %v670 = vpop.f32.mrf.mxu0
  %v671 = vadd.f32 %v435, %v670
  %672 = vmatprep.mubr.f32.mxu0 0.0
  %673 = vmatmul.mubr.f32.gmra.mxu0 %v208
  %v674 = vpop.f32.mrf.mxu0
  %v675 = vadd.f32 %v439, %v674
  %v676 = vpop.f32.mrf.mxu0
  %v677 = vadd.f32 %v441, %v676
  %678 = vmatprep.mubr.f32.mxu0 0.0
  %679 = vmatmul.mubr.f32.gmra.mxu0 %v211
  %v680 = vpop.f32.mrf.mxu0
  %v681 = vadd.f32 %v445, %v680
  %v682 = vpop.f32.mrf.mxu0
  %v683 = vadd.f32 %v447, %v682
  %684 = vdwg.mxu0
  %s685 = scalar_lea.vmem %s1, 384
  %v686 = vld [vmem:[%s685] sm:$0xff]
  %v687 = vld [vmem:[%s685 + $0x8] sm:$0xff]
  %v688 = vld [vmem:[%s685 + $0x10] sm:$0xff]
  %v689 = vld [vmem:[%s685 + $0x18] sm:$0xff]
  %v690 = vld [vmem:[%s685 + $0x20] sm:$0xff]
  %v691 = vld [vmem:[%s685 + $0x28] sm:$0xff]
  %v692 = vld [vmem:[%s685 + $0x30] sm:$0xff]
  %v693 = vld [vmem:[%s685 + $0x38] sm:$0xff]
  %v694 = vld [vmem:[%s685 + $0x40] sm:$0xff]
  %v695 = vld [vmem:[%s685 + $0x48] sm:$0xff]
  %v696 = vld [vmem:[%s685 + $0x50] sm:$0xff]
  %v697 = vld [vmem:[%s685 + $0x58] sm:$0xff]
  %v698 = vld [vmem:[%s685 + $0x60] sm:$0xff]
  %v699 = vld [vmem:[%s685 + $0x68] sm:$0xff]
  %v700 = vld [vmem:[%s685 + $0x70] sm:$0xff]
  %v701 = vld [vmem:[%s685 + $0x78] sm:$0xff]
  %v702 = vld [vmem:[%s685 + $0x80] sm:$0xff]
  %v703 = vld [vmem:[%s685 + $0x88] sm:$0xff]
  %v704 = vld [vmem:[%s685 + $0x90] sm:$0xff]
  %v705 = vld [vmem:[%s685 + $0x98] sm:$0xff]
  %v706 = vld [vmem:[%s685 + $0xa0] sm:$0xff]
  %v707 = vld [vmem:[%s685 + $0xa8] sm:$0xff]
  %v708 = vld [vmem:[%s685 + $0xb0] sm:$0xff]
  %v709 = vld [vmem:[%s685 + $0xb8] sm:$0xff]
  %v711 = vsel %vm131, %v79, 0
  %713 = vmatprep.subr.mxu0 0.0
  %714 = vmatpush1.msra.mxu0 0.0
  %715 = vmatprep.subr.mxu0 0.0
  %716 = vmatpush1.msra.mxu0 0.0
  %717 = vmatprep.subr.mxu0 0.0
  %718 = vmatpush1.msra.mxu0 0.0
  %719 = vmatprep.subr.mxu0 0.0
  %720 = vmatpush1.msra.mxu0 0.0
  %721 = vmatprep.subr.mxu0 %v709
  %722 = vmatpush1.msra.mxu0 %v708
  %723 = vmatprep.subr.mxu0 %v707
  %724 = vmatpush1.msra.mxu0 %v706
  %725 = vmatprep.subr.mxu0 %v705
  %726 = vmatpush1.msra.mxu0 %v704
  %727 = vmatprep.subr.mxu0 %v703
  %728 = vmatpush1.msra.mxu0 %v702
  %729 = vmatprep.subr.mxu0 %v701
  %730 = vmatpush1.msra.mxu0 %v700
  %731 = vmatprep.subr.mxu0 %v699
  %732 = vmatpush1.msra.mxu0 %v698
  %733 = vmatprep.subr.mxu0 %v697
  %734 = vmatpush1.msra.mxu0 %v696
  %735 = vmatprep.subr.mxu0 %v695
  %736 = vmatpush1.msra.mxu0 %v694
  %737 = vmatprep.subr.mxu0 %v693
  %738 = vmatpush1.msra.mxu0 %v692
  %739 = vmatprep.subr.mxu0 %v691
  %740 = vmatpush1.msra.mxu0 %v690
  %741 = vmatprep.subr.mxu0 %v689
  %742 = vmatpush1.msra.mxu0 %v688
  %743 = vmatprep.subr.mxu0 %v687
  %744 = vmatpush1.msra.mxu0 %v686
  %745 = vmatprep.subr.mxu0 0.0
  %746 = vmatpush2.msra.mxu0 0.0
  %747 = vmatprep.subr.mxu0 0.0
  %748 = vmatpush2.msra.mxu0 0.0
  %749 = vmatprep.subr.mxu0 0.0
  %750 = vmatpush2.msra.mxu0 0.0
  %751 = vmatprep.subr.mxu0 0.0
  %752 = vmatpush2.msra.mxu0 0.0
  %753 = vmatprep.subr.mxu0 0.0
  %754 = vmatpush2.msra.mxu0 0.0
  %755 = vmatprep.subr.mxu0 0.0
  %756 = vmatpush2.msra.mxu0 0.0
  %757 = vmatprep.subr.mxu0 0.0
  %758 = vmatpush2.msra.mxu0 0.0
  %759 = vmatprep.subr.mxu0 0.0
  %760 = vmatpush2.msra.mxu0 0.0
  %761 = vmatprep.subr.mxu0 0.0
  %762 = vmatpush2.msra.mxu0 0.0
  %763 = vmatprep.subr.mxu0 0.0
  %764 = vmatpush2.msra.mxu0 0.0
  %765 = vmatprep.subr.mxu0 0.0
  %766 = vmatpush2.msra.mxu0 0.0
  %767 = vmatprep.subr.mxu0 0.0
  %768 = vmatpush2.msra.mxu0 0.0
  %769 = vmatprep.subr.mxu0 0.0
  %770 = vmatpush2.msra.mxu0 0.0
  %771 = vmatprep.subr.mxu0 0.0
  %772 = vmatpush2.msra.mxu0 0.0
  %773 = vmatprep.subr.mxu0 0.0
  %774 = vmatpush2.msra.mxu0 0.0
  %775 = vmatprep.subr.mxu0 0.0
  %776 = vmatpush2.msra.mxu0 0.0
  %777 = vmatprep.mubr.f32.mxu0 0.0
  %778 = vmatmul.mubr.f32.gmra.mxu0 %v136
  %v779 = vpop.f32.mrf.mxu0
  %v780 = vadd.f32 0.0, %v779
  %v781 = vpop.f32.mrf.mxu0
  %v782 = vadd.f32 0.0, %v781
  %783 = vmatprep.mubr.f32.mxu0 0.0
  %784 = vmatmul.mubr.f32.gmra.mxu0 %v139
  %v785 = vpop.f32.mrf.mxu0
  %v786 = vadd.f32 0.0, %v785
  %v787 = vpop.f32.mrf.mxu0
  %v788 = vadd.f32 0.0, %v787
  %789 = vmatprep.mubr.f32.mxu0 0.0
  %790 = vmatmul.mubr.f32.gmra.mxu0 %v142
  %v791 = vpop.f32.mrf.mxu0
  %v792 = vadd.f32 0.0, %v791
  %v793 = vpop.f32.mrf.mxu0
  %v794 = vadd.f32 0.0, %v793
  %795 = vmatprep.mubr.f32.mxu0 0.0
  %796 = vmatmul.mubr.f32.gmra.mxu0 %v145
  %v797 = vpop.f32.mrf.mxu0
  %v798 = vadd.f32 0.0, %v797
  %v799 = vpop.f32.mrf.mxu0
  %v800 = vadd.f32 0.0, %v799
  %801 = vmatprep.mubr.f32.mxu0 0.0
  %802 = vmatmul.mubr.f32.gmra.mxu0 %v148
  %v803 = vpop.f32.mrf.mxu0
  %v804 = vadd.f32 0.0, %v803
  %v805 = vpop.f32.mrf.mxu0
  %v806 = vadd.f32 0.0, %v805
  %807 = vmatprep.mubr.f32.mxu0 0.0
  %808 = vmatmul.mubr.f32.gmra.mxu0 %v151
  %v809 = vpop.f32.mrf.mxu0
  %v810 = vadd.f32 0.0, %v809
  %v811 = vpop.f32.mrf.mxu0
  %v812 = vadd.f32 0.0, %v811
  %813 = vmatprep.mubr.f32.mxu0 0.0
  %814 = vmatmul.mubr.f32.gmra.mxu0 %v154
  %v815 = vpop.f32.mrf.mxu0
  %v816 = vadd.f32 0.0, %v815
  %v817 = vpop.f32.mrf.mxu0
  %v818 = vadd.f32 0.0, %v817
  %819 = vmatprep.mubr.f32.mxu0 0.0
  %820 = vmatmul.mubr.f32.gmra.mxu0 %v157
  %v821 = vpop.f32.mrf.mxu0
  %v822 = vadd.f32 0.0, %v821
  %v823 = vpop.f32.mrf.mxu0
  %v824 = vadd.f32 0.0, %v823
  %825 = vmatprep.mubr.f32.mxu0 0.0
  %826 = vmatmul.mubr.f32.gmra.mxu0 %v160
  %v827 = vpop.f32.mrf.mxu0
  %v828 = vadd.f32 0.0, %v827
  %v829 = vpop.f32.mrf.mxu0
  %v830 = vadd.f32 0.0, %v829
  %831 = vmatprep.mubr.f32.mxu0 0.0
  %832 = vmatmul.mubr.f32.gmra.mxu0 %v163
  %v833 = vpop.f32.mrf.mxu0
  %v834 = vadd.f32 0.0, %v833
  %v835 = vpop.f32.mrf.mxu0
  %v836 = vadd.f32 0.0, %v835
  %837 = vmatprep.mubr.f32.mxu0 0.0
  %838 = vmatmul.mubr.f32.gmra.mxu0 %v166
  %v839 = vpop.f32.mrf.mxu0
  %v840 = vadd.f32 0.0, %v839
  %v841 = vpop.f32.mrf.mxu0
  %v842 = vadd.f32 0.0, %v841
  %843 = vmatprep.mubr.f32.mxu0 0.0
  %844 = vmatmul.mubr.f32.gmra.mxu0 %v169
  %v845 = vpop.f32.mrf.mxu0
  %v846 = vadd.f32 0.0, %v845
  %v847 = vpop.f32.mrf.mxu0
  %v848 = vadd.f32 0.0, %v847
  %849 = vmatprep.mubr.f32.mxu0 0.0
  %850 = vmatmul.mubr.f32.gmra.mxu0 %v172
  %v851 = vpop.f32.mrf.mxu0
  %v852 = vadd.f32 0.0, %v851
  %v853 = vpop.f32.mrf.mxu0
  %v854 = vadd.f32 0.0, %v853
  %855 = vmatprep.mubr.f32.mxu0 0.0
  %856 = vmatmul.mubr.f32.gmra.mxu0 %v175
  %v857 = vpop.f32.mrf.mxu0
  %v858 = vadd.f32 0.0, %v857
  %v859 = vpop.f32.mrf.mxu0
  %v860 = vadd.f32 0.0, %v859
  %861 = vmatprep.mubr.f32.mxu0 0.0
  %862 = vmatmul.mubr.f32.gmra.mxu0 %v178
  %v863 = vpop.f32.mrf.mxu0
  %v864 = vadd.f32 0.0, %v863
  %v865 = vpop.f32.mrf.mxu0
  %v866 = vadd.f32 0.0, %v865
  %867 = vmatprep.mubr.f32.mxu0 0.0
  %868 = vmatmul.mubr.f32.gmra.mxu0 %v181
  %v869 = vpop.f32.mrf.mxu0
  %v870 = vadd.f32 0.0, %v869
  %v871 = vpop.f32.mrf.mxu0
  %v872 = vadd.f32 0.0, %v871
  %873 = vmatprep.mubr.f32.mxu0 0.0
  %874 = vmatmul.mubr.f32.gmra.mxu0 %v184
  %v875 = vpop.f32.mrf.mxu0
  %v876 = vadd.f32 0.0, %v875
  %v877 = vpop.f32.mrf.mxu0
  %v878 = vadd.f32 0.0, %v877
  %879 = vmatprep.mubr.f32.mxu0 0.0
  %880 = vmatmul.mubr.f32.gmra.mxu0 %v187
  %v881 = vpop.f32.mrf.mxu0
  %v882 = vadd.f32 0.0, %v881
  %v883 = vpop.f32.mrf.mxu0
  %v884 = vadd.f32 0.0, %v883
  %885 = vmatprep.mubr.f32.mxu0 0.0
  %886 = vmatmul.mubr.f32.gmra.mxu0 %v190
  %v887 = vpop.f32.mrf.mxu0
  %v888 = vadd.f32 0.0, %v887
  %v889 = vpop.f32.mrf.mxu0
  %v890 = vadd.f32 0.0, %v889
  %891 = vmatprep.mubr.f32.mxu0 0.0
  %892 = vmatmul.mubr.f32.gmra.mxu0 %v193
  %v893 = vpop.f32.mrf.mxu0
  %v894 = vadd.f32 0.0, %v893
  %v895 = vpop.f32.mrf.mxu0
  %v896 = vadd.f32 0.0, %v895
  %897 = vmatprep.mubr.f32.mxu0 0.0
  %898 = vmatmul.mubr.f32.gmra.mxu0 %v196
  %v899 = vpop.f32.mrf.mxu0
  %v900 = vadd.f32 0.0, %v899
  %v901 = vpop.f32.mrf.mxu0
  %v902 = vadd.f32 0.0, %v901
  %903 = vmatprep.mubr.f32.mxu0 0.0
  %904 = vmatmul.mubr.f32.gmra.mxu0 %v199
  %v905 = vpop.f32.mrf.mxu0
  %v906 = vadd.f32 0.0, %v905
  %v907 = vpop.f32.mrf.mxu0
  %v908 = vadd.f32 0.0, %v907
  %909 = vmatprep.mubr.f32.mxu0 0.0
  %910 = vmatmul.mubr.f32.gmra.mxu0 %v202
  %v911 = vpop.f32.mrf.mxu0
  %v912 = vadd.f32 0.0, %v911
  %v913 = vpop.f32.mrf.mxu0
  %v914 = vadd.f32 0.0, %v913
  %915 = vmatprep.mubr.f32.mxu0 0.0
  %916 = vmatmul.mubr.f32.gmra.mxu0 %v205
  %v917 = vpop.f32.mrf.mxu0
  %v918 = vadd.f32 0.0, %v917
  %v919 = vpop.f32.mrf.mxu0
  %v920 = vadd.f32 0.0, %v919
  %921 = vmatprep.mubr.f32.mxu0 0.0
  %922 = vmatmul.mubr.f32.gmra.mxu0 %v208
  %v923 = vpop.f32.mrf.mxu0
  %v924 = vadd.f32 0.0, %v923
  %v925 = vpop.f32.mrf.mxu0
  %v926 = vadd.f32 0.0, %v925
  %927 = vmatprep.mubr.f32.mxu0 0.0
  %928 = vmatmul.mubr.f32.gmra.mxu0 %v211
  %v929 = vpop.f32.mrf.mxu0
  %v930 = vadd.f32 0.0, %v929
  %v931 = vpop.f32.mrf.mxu0
  %v932 = vadd.f32 0.0, %v931
  %933 = vmatprep.mubr.f32.mxu0 0.0
  %934 = vmatmul.mubr.f32.gmra.mxu0 %v214
  %v935 = vpop.f32.mrf.mxu0
  %v936 = vadd.f32 0.0, %v935
  %v937 = vpop.f32.mrf.mxu0
  %v938 = vadd.f32 0.0, %v937
  %939 = vmatprep.mubr.f32.mxu0 0.0
  %940 = vmatmul.mubr.f32.gmra.mxu0 %v711
  %v941 = vpop.f32.mrf.mxu0
  %v942 = vadd.f32 0.0, %v941
  %v943 = vpop.f32.mrf.mxu0
  %v944 = vadd.f32 0.0, %v943
  %945 = vdwg.mxu0
  %v946 = vadd.f32 %v519, %v780
  %v947 = vadd.f32 %v521, %v782
  %v948 = vadd.f32 %v525, %v786
  %v949 = vadd.f32 %v527, %v788
  %v950 = vadd.f32 %v531, %v792
  %v951 = vadd.f32 %v533, %v794
  %v952 = vadd.f32 %v537, %v798
  %v953 = vadd.f32 %v539, %v800
  %v954 = vadd.f32 %v543, %v804
  %v955 = vadd.f32 %v545, %v806
  %v956 = vadd.f32 %v549, %v810
  %v957 = vadd.f32 %v551, %v812
  %v958 = vadd.f32 %v555, %v816
  %v959 = vadd.f32 %v557, %v818
  %v960 = vadd.f32 %v561, %v822
  %v961 = vadd.f32 %v563, %v824
  %v962 = vadd.f32 %v567, %v828
  %v963 = vadd.f32 %v569, %v830
  %v964 = vadd.f32 %v573, %v834
  %v965 = vadd.f32 %v575, %v836
  %v966 = vadd.f32 %v579, %v840
  %v967 = vadd.f32 %v581, %v842
  %v968 = vadd.f32 %v585, %v846
  %v969 = vadd.f32 %v587, %v848
  %v970 = vadd.f32 %v591, %v852
  %v971 = vadd.f32 %v593, %v854
  %v972 = vadd.f32 %v597, %v858
  %v973 = vadd.f32 %v599, %v860
  %v974 = vadd.f32 %v603, %v864
  %v975 = vadd.f32 %v605, %v866
  %v976 = vadd.f32 %v609, %v870
  %v977 = vadd.f32 %v611, %v872
  %v978 = vadd.f32 %v615, %v876
  %v979 = vadd.f32 %v617, %v878
  %v980 = vadd.f32 %v621, %v882
  %v981 = vadd.f32 %v623, %v884
  %v982 = vadd.f32 %v627, %v888
  %v983 = vadd.f32 %v629, %v890
  %v984 = vadd.f32 %v633, %v894
  %v985 = vadd.f32 %v635, %v896
  %v986 = vadd.f32 %v639, %v900
  %v987 = vadd.f32 %v641, %v902
  %v988 = vadd.f32 %v645, %v906
  %v989 = vadd.f32 %v647, %v908
  %v990 = vadd.f32 %v651, %v912
  %v991 = vadd.f32 %v653, %v914
  %v992 = vadd.f32 %v657, %v918
  %v993 = vadd.f32 %v659, %v920
  %v994 = vadd.f32 %v663, %v924
  %v995 = vadd.f32 %v665, %v926
  %v996 = vadd.f32 %v669, %v930
  %v997 = vadd.f32 %v671, %v932
  %v998 = vadd.f32 %v675, %v936
  %v999 = vadd.f32 %v677, %v938
  %v1000 = vadd.f32 %v681, %v942
  %v1001 = vadd.f32 %v683, %v944
  %s1002 = scalar_lea.vmem %s1, 576
  %v1003 = vld [vmem:[%s1002] sm:$0xff]
  %v1004 = vld [vmem:[%s1002 + $0x8] sm:$0xff]
  %v1005 = vld [vmem:[%s1002 + $0x10] sm:$0xff]
  %v1006 = vld [vmem:[%s1002 + $0x18] sm:$0xff]
  %v1007 = vld [vmem:[%s1002 + $0x20] sm:$0xff]
  %v1008 = vld [vmem:[%s1002 + $0x28] sm:$0xff]
  %v1009 = vld [vmem:[%s1002 + $0x30] sm:$0xff]
  %v1010 = vld [vmem:[%s1002 + $0x38] sm:$0xff]
  %v1011 = vld [vmem:[%s1002 + $0x40] sm:$0xff]
  %v1012 = vld [vmem:[%s1002 + $0x48] sm:$0xff]
  %v1013 = vld [vmem:[%s1002 + $0x50] sm:$0xff]
  %v1014 = vld [vmem:[%s1002 + $0x58] sm:$0xff]
  %v1015 = vld [vmem:[%s1002 + $0x60] sm:$0xff]
  %v1016 = vld [vmem:[%s1002 + $0x68] sm:$0xff]
  %v1017 = vld [vmem:[%s1002 + $0x70] sm:$0xff]
  %v1018 = vld [vmem:[%s1002 + $0x78] sm:$0xff]
  %v1019 = vld [vmem:[%s1002 + $0x80] sm:$0xff]
  %v1020 = vld [vmem:[%s1002 + $0x88] sm:$0xff]
  %v1021 = vld [vmem:[%s1002 + $0x90] sm:$0xff]
  %v1022 = vld [vmem:[%s1002 + $0x98] sm:$0xff]
  %v1023 = vld [vmem:[%s1002 + $0xa0] sm:$0xff]
  %v1024 = vld [vmem:[%s1002 + $0xa8] sm:$0xff]
  %v1025 = vld [vmem:[%s1002 + $0xb0] sm:$0xff]
  %v1026 = vld [vmem:[%s1002 + $0xb8] sm:$0xff]
  %v1028 = vsel %vm131, %v80, 0
  %1030 = vmatprep.subr.mxu0 0.0
  %1031 = vmatpush1.msra.mxu0 0.0
  %1032 = vmatprep.subr.mxu0 0.0
  %1033 = vmatpush1.msra.mxu0 0.0
  %1034 = vmatprep.subr.mxu0 0.0
  %1035 = vmatpush1.msra.mxu0 0.0
  %1036 = vmatprep.subr.mxu0 0.0
  %1037 = vmatpush1.msra.mxu0 0.0
  %1038 = vmatprep.subr.mxu0 %v1026
  %1039 = vmatpush1.msra.mxu0 %v1025
  %1040 = vmatprep.subr.mxu0 %v1024
  %1041 = vmatpush1.msra.mxu0 %v1023
  %1042 = vmatprep.subr.mxu0 %v1022
  %1043 = vmatpush1.msra.mxu0 %v1021
  %1044 = vmatprep.subr.mxu0 %v1020
  %1045 = vmatpush1.msra.mxu0 %v1019
  %1046 = vmatprep.subr.mxu0 %v1018
  %1047 = vmatpush1.msra.mxu0 %v1017
  %1048 = vmatprep.subr.mxu0 %v1016
  %1049 = vmatpush1.msra.mxu0 %v1015
  %1050 = vmatprep.subr.mxu0 %v1014
  %1051 = vmatpush1.msra.mxu0 %v1013
  %1052 = vmatprep.subr.mxu0 %v1012
  %1053 = vmatpush1.msra.mxu0 %v1011
  %1054 = vmatprep.subr.mxu0 %v1010
  %1055 = vmatpush1.msra.mxu0 %v1009
  %1056 = vmatprep.subr.mxu0 %v1008
  %1057 = vmatpush1.msra.mxu0 %v1007
  %1058 = vmatprep.subr.mxu0 %v1006
  %1059 = vmatpush1.msra.mxu0 %v1005
  %1060 = vmatprep.subr.mxu0 %v1004
  %1061 = vmatpush1.msra.mxu0 %v1003
  %1062 = vmatprep.subr.mxu0 0.0
  %1063 = vmatpush2.msra.mxu0 0.0
  %1064 = vmatprep.subr.mxu0 0.0
  %1065 = vmatpush2.msra.mxu0 0.0
  %1066 = vmatprep.subr.mxu0 0.0
  %1067 = vmatpush2.msra.mxu0 0.0
  %1068 = vmatprep.subr.mxu0 0.0
  %1069 = vmatpush2.msra.mxu0 0.0
  %1070 = vmatprep.subr.mxu0 0.0
  %1071 = vmatpush2.msra.mxu0 0.0
  %1072 = vmatprep.subr.mxu0 0.0
  %1073 = vmatpush2.msra.mxu0 0.0
  %1074 = vmatprep.subr.mxu0 0.0
  %1075 = vmatpush2.msra.mxu0 0.0
  %1076 = vmatprep.subr.mxu0 0.0
  %1077 = vmatpush2.msra.mxu0 0.0
  %1078 = vmatprep.subr.mxu0 0.0
  %1079 = vmatpush2.msra.mxu0 0.0
  %1080 = vmatprep.subr.mxu0 0.0
  %1081 = vmatpush2.msra.mxu0 0.0
  %1082 = vmatprep.subr.mxu0 0.0
  %1083 = vmatpush2.msra.mxu0 0.0
  %1084 = vmatprep.subr.mxu0 0.0
  %1085 = vmatpush2.msra.mxu0 0.0
  %1086 = vmatprep.subr.mxu0 0.0
  %1087 = vmatpush2.msra.mxu0 0.0
  %1088 = vmatprep.subr.mxu0 0.0
  %1089 = vmatpush2.msra.mxu0 0.0
  %1090 = vmatprep.subr.mxu0 0.0
  %1091 = vmatpush2.msra.mxu0 0.0
  %1092 = vmatprep.subr.mxu0 0.0
  %1093 = vmatpush2.msra.mxu0 0.0
  %1094 = vmatprep.mubr.f32.mxu0 0.0
  %1095 = vmatmul.mubr.f32.gmra.mxu0 %v139
  %v1096 = vpop.f32.mrf.mxu0
  %v1097 = vadd.f32 0.0, %v1096
  %v1098 = vpop.f32.mrf.mxu0
  %v1099 = vadd.f32 0.0, %v1098
  %1100 = vmatprep.mubr.f32.mxu0 0.0
  %1101 = vmatmul.mubr.f32.gmra.mxu0 %v142
  %v1102 = vpop.f32.mrf.mxu0
  %v1103 = vadd.f32 0.0, %v1102
  %v1104 = vpop.f32.mrf.mxu0
  %v1105 = vadd.f32 0.0, %v1104
  %1106 = vmatprep.mubr.f32.mxu0 0.0
  %1107 = vmatmul.mubr.f32.gmra.mxu0 %v145
  %v1108 = vpop.f32.mrf.mxu0
  %v1109 = vadd.f32 0.0, %v1108
  %v1110 = vpop.f32.mrf.mxu0
  %v1111 = vadd.f32 0.0, %v1110
  %1112 = vmatprep.mubr.f32.mxu0 0.0
  %1113 = vmatmul.mubr.f32.gmra.mxu0 %v148
  %v1114 = vpop.f32.mrf.mxu0
  %v1115 = vadd.f32 0.0, %v1114
  %v1116 = vpop.f32.mrf.mxu0
  %v1117 = vadd.f32 0.0, %v1116
  %1118 = vmatprep.mubr.f32.mxu0 0.0
  %1119 = vmatmul.mubr.f32.gmra.mxu0 %v151
  %v1120 = vpop.f32.mrf.mxu0
  %v1121 = vadd.f32 0.0, %v1120
  %v1122 = vpop.f32.mrf.mxu0
  %v1123 = vadd.f32 0.0, %v1122
  %1124 = vmatprep.mubr.f32.mxu0 0.0
  %1125 = vmatmul.mubr.f32.gmra.mxu0 %v154
  %v1126 = vpop.f32.mrf.mxu0
  %v1127 = vadd.f32 0.0, %v1126
  %v1128 = vpop.f32.mrf.mxu0
  %v1129 = vadd.f32 0.0, %v1128
  %1130 = vmatprep.mubr.f32.mxu0 0.0
  %1131 = vmatmul.mubr.f32.gmra.mxu0 %v157
  %v1132 = vpop.f32.mrf.mxu0
  %v1133 = vadd.f32 0.0, %v1132
  %v1134 = vpop.f32.mrf.mxu0
  %v1135 = vadd.f32 0.0, %v1134
  %1136 = vmatprep.mubr.f32.mxu0 0.0
  %1137 = vmatmul.mubr.f32.gmra.mxu0 %v160
  %v1138 = vpop.f32.mrf.mxu0
  %v1139 = vadd.f32 0.0, %v1138
  %v1140 = vpop.f32.mrf.mxu0
  %v1141 = vadd.f32 0.0, %v1140
  %1142 = vmatprep.mubr.f32.mxu0 0.0
  %1143 = vmatmul.mubr.f32.gmra.mxu0 %v163
  %v1144 = vpop.f32.mrf.mxu0
  %v1145 = vadd.f32 0.0, %v1144
  %v1146 = vpop.f32.mrf.mxu0
  %v1147 = vadd.f32 0.0, %v1146
  %1148 = vmatprep.mubr.f32.mxu0 0.0
  %1149 = vmatmul.mubr.f32.gmra.mxu0 %v166
  %v1150 = vpop.f32.mrf.mxu0
  %v1151 = vadd.f32 0.0, %v1150
  %v1152 = vpop.f32.mrf.mxu0
  %v1153 = vadd.f32 0.0, %v1152
  %1154 = vmatprep.mubr.f32.mxu0 0.0
  %1155 = vmatmul.mubr.f32.gmra.mxu0 %v169
  %v1156 = vpop.f32.mrf.mxu0
  %v1157 = vadd.f32 0.0, %v1156
  %v1158 = vpop.f32.mrf.mxu0
  %v1159 = vadd.f32 0.0, %v1158
  %1160 = vmatprep.mubr.f32.mxu0 0.0
  %1161 = vmatmul.mubr.f32.gmra.mxu0 %v172
  %v1162 = vpop.f32.mrf.mxu0
  %v1163 = vadd.f32 0.0, %v1162
  %v1164 = vpop.f32.mrf.mxu0
  %v1165 = vadd.f32 0.0, %v1164
  %1166 = vmatprep.mubr.f32.mxu0 0.0
  %1167 = vmatmul.mubr.f32.gmra.mxu0 %v175
  %v1168 = vpop.f32.mrf.mxu0
  %v1169 = vadd.f32 0.0, %v1168
  %v1170 = vpop.f32.mrf.mxu0
  %v1171 = vadd.f32 0.0, %v1170
  %1172 = vmatprep.mubr.f32.mxu0 0.0
  %1173 = vmatmul.mubr.f32.gmra.mxu0 %v178
  %v1174 = vpop.f32.mrf.mxu0
  %v1175 = vadd.f32 0.0, %v1174
  %v1176 = vpop.f32.mrf.mxu0
  %v1177 = vadd.f32 0.0, %v1176
  %1178 = vmatprep.mubr.f32.mxu0 0.0
  %1179 = vmatmul.mubr.f32.gmra.mxu0 %v181
  %v1180 = vpop.f32.mrf.mxu0
  %v1181 = vadd.f32 0.0, %v1180
  %v1182 = vpop.f32.mrf.mxu0
  %v1183 = vadd.f32 0.0, %v1182
  %1184 = vmatprep.mubr.f32.mxu0 0.0
  %1185 = vmatmul.mubr.f32.gmra.mxu0 %v184
  %v1186 = vpop.f32.mrf.mxu0
  %v1187 = vadd.f32 0.0, %v1186
  %v1188 = vpop.f32.mrf.mxu0
  %v1189 = vadd.f32 0.0, %v1188
  %1190 = vmatprep.mubr.f32.mxu0 0.0
  %1191 = vmatmul.mubr.f32.gmra.mxu0 %v187
  %v1192 = vpop.f32.mrf.mxu0
  %v1193 = vadd.f32 0.0, %v1192
  %v1194 = vpop.f32.mrf.mxu0
  %v1195 = vadd.f32 0.0, %v1194
  %1196 = vmatprep.mubr.f32.mxu0 0.0
  %1197 = vmatmul.mubr.f32.gmra.mxu0 %v190
  %v1198 = vpop.f32.mrf.mxu0
  %v1199 = vadd.f32 0.0, %v1198
  %v1200 = vpop.f32.mrf.mxu0
  %v1201 = vadd.f32 0.0, %v1200
  %1202 = vmatprep.mubr.f32.mxu0 0.0
  %1203 = vmatmul.mubr.f32.gmra.mxu0 %v193
  %v1204 = vpop.f32.mrf.mxu0
  %v1205 = vadd.f32 0.0, %v1204
  %v1206 = vpop.f32.mrf.mxu0
  %v1207 = vadd.f32 0.0, %v1206
  %1208 = vmatprep.mubr.f32.mxu0 0.0
  %1209 = vmatmul.mubr.f32.gmra.mxu0 %v196
  %v1210 = vpop.f32.mrf.mxu0
  %v1211 = vadd.f32 0.0, %v1210
  %v1212 = vpop.f32.mrf.mxu0
  %v1213 = vadd.f32 0.0, %v1212
  %1214 = vmatprep.mubr.f32.mxu0 0.0
  %1215 = vmatmul.mubr.f32.gmra.mxu0 %v199
  %v1216 = vpop.f32.mrf.mxu0
  %v1217 = vadd.f32 0.0, %v1216
  %v1218 = vpop.f32.mrf.mxu0
  %v1219 = vadd.f32 0.0, %v1218
  %1220 = vmatprep.mubr.f32.mxu0 0.0
  %1221 = vmatmul.mubr.f32.gmra.mxu0 %v202
  %v1222 = vpop.f32.mrf.mxu0
  %v1223 = vadd.f32 0.0, %v1222
  %v1224 = vpop.f32.mrf.mxu0
  %v1225 = vadd.f32 0.0, %v1224
  %1226 = vmatprep.mubr.f32.mxu0 0.0
  %1227 = vmatmul.mubr.f32.gmra.mxu0 %v205
  %v1228 = vpop.f32.mrf.mxu0
  %v1229 = vadd.f32 0.0, %v1228
  %v1230 = vpop.f32.mrf.mxu0
  %v1231 = vadd.f32 0.0, %v1230
  %1232 = vmatprep.mubr.f32.mxu0 0.0
  %1233 = vmatmul.mubr.f32.gmra.mxu0 %v208
  %v1234 = vpop.f32.mrf.mxu0
  %v1235 = vadd.f32 0.0, %v1234
  %v1236 = vpop.f32.mrf.mxu0
  %v1237 = vadd.f32 0.0, %v1236
  %1238 = vmatprep.mubr.f32.mxu0 0.0
  %1239 = vmatmul.mubr.f32.gmra.mxu0 %v211
  %v1240 = vpop.f32.mrf.mxu0
  %v1241 = vadd.f32 0.0, %v1240
  %v1242 = vpop.f32.mrf.mxu0
  %v1243 = vadd.f32 0.0, %v1242
  %1244 = vmatprep.mubr.f32.mxu0 0.0
  %1245 = vmatmul.mubr.f32.gmra.mxu0 %v214
  %v1246 = vpop.f32.mrf.mxu0
  %v1247 = vadd.f32 0.0, %v1246
  %v1248 = vpop.f32.mrf.mxu0
  %v1249 = vadd.f32 0.0, %v1248
  %1250 = vmatprep.mubr.f32.mxu0 0.0
  %1251 = vmatmul.mubr.f32.gmra.mxu0 %v711
  %v1252 = vpop.f32.mrf.mxu0
  %v1253 = vadd.f32 0.0, %v1252
  %v1254 = vpop.f32.mrf.mxu0
  %v1255 = vadd.f32 0.0, %v1254
  %1256 = vmatprep.mubr.f32.mxu0 0.0
  %1257 = vmatmul.mubr.f32.gmra.mxu0 %v1028
  %v1258 = vpop.f32.mrf.mxu0
  %v1259 = vadd.f32 0.0, %v1258
  %v1260 = vpop.f32.mrf.mxu0
  %v1261 = vadd.f32 0.0, %v1260
  %1262 = vdwg.mxu0
  %v1263 = vadd.f32 %v946, %v1097
  %v1264 = vadd.f32 %v947, %v1099
  %v1265 = vadd.f32 %v948, %v1103
  %v1266 = vadd.f32 %v949, %v1105
  %v1267 = vadd.f32 %v950, %v1109
  %v1268 = vadd.f32 %v951, %v1111
  %v1269 = vadd.f32 %v952, %v1115
  %v1270 = vadd.f32 %v953, %v1117
  %v1271 = vadd.f32 %v954, %v1121
  %v1272 = vadd.f32 %v955, %v1123
  %v1273 = vadd.f32 %v956, %v1127
  %v1274 = vadd.f32 %v957, %v1129
  %v1275 = vadd.f32 %v958, %v1133
  %v1276 = vadd.f32 %v959, %v1135
  %v1277 = vadd.f32 %v960, %v1139
  %v1278 = vadd.f32 %v961, %v1141
  %v1279 = vadd.f32 %v962, %v1145
  %v1280 = vadd.f32 %v963, %v1147
  %v1281 = vadd.f32 %v964, %v1151
  %v1282 = vadd.f32 %v965, %v1153
  %v1283 = vadd.f32 %v966, %v1157
  %v1284 = vadd.f32 %v967, %v1159
  %v1285 = vadd.f32 %v968, %v1163
  %v1286 = vadd.f32 %v969, %v1165
  %v1287 = vadd.f32 %v970, %v1169
  %v1288 = vadd.f32 %v971, %v1171
  %v1289 = vadd.f32 %v972, %v1175
  %v1290 = vadd.f32 %v973, %v1177
  %v1291 = vadd.f32 %v974, %v1181
  %v1292 = vadd.f32 %v975, %v1183
  %v1293 = vadd.f32 %v976, %v1187
  %v1294 = vadd.f32 %v977, %v1189
  %v1295 = vadd.f32 %v978, %v1193
  %v1296 = vadd.f32 %v979, %v1195
  %v1297 = vadd.f32 %v980, %v1199
  %v1298 = vadd.f32 %v981, %v1201
  %v1299 = vadd.f32 %v982, %v1205
  %v1300 = vadd.f32 %v983, %v1207
  %v1301 = vadd.f32 %v984, %v1211
  %v1302 = vadd.f32 %v985, %v1213
  %v1303 = vadd.f32 %v986, %v1217
  %v1304 = vadd.f32 %v987, %v1219
  %v1305 = vadd.f32 %v988, %v1223
  %v1306 = vadd.f32 %v989, %v1225
  %v1307 = vadd.f32 %v990, %v1229
  %v1308 = vadd.f32 %v991, %v1231
  %v1309 = vadd.f32 %v992, %v1235
  %v1310 = vadd.f32 %v993, %v1237
  %v1311 = vadd.f32 %v994, %v1241
  %v1312 = vadd.f32 %v995, %v1243
  %v1313 = vadd.f32 %v996, %v1247
  %v1314 = vadd.f32 %v997, %v1249
  %v1315 = vadd.f32 %v998, %v1253
  %v1316 = vadd.f32 %v999, %v1255
  %v1317 = vadd.f32 %v1000, %v1259
  %v1318 = vadd.f32 %v1001, %v1261
  %s1319 = scalar_lea.vmem %s1, 768
  %v1320 = vld [vmem:[%s1319] sm:$0xff]
  %v1321 = vld [vmem:[%s1319 + $0x8] sm:$0xff]
  %v1322 = vld [vmem:[%s1319 + $0x10] sm:$0xff]
  %v1323 = vld [vmem:[%s1319 + $0x18] sm:$0xff]
  %v1324 = vld [vmem:[%s1319 + $0x20] sm:$0xff]
  %v1325 = vld [vmem:[%s1319 + $0x28] sm:$0xff]
  %v1326 = vld [vmem:[%s1319 + $0x30] sm:$0xff]
  %v1327 = vld [vmem:[%s1319 + $0x38] sm:$0xff]
  %v1328 = vld [vmem:[%s1319 + $0x40] sm:$0xff]
  %v1329 = vld [vmem:[%s1319 + $0x48] sm:$0xff]
  %v1330 = vld [vmem:[%s1319 + $0x50] sm:$0xff]
  %v1331 = vld [vmem:[%s1319 + $0x58] sm:$0xff]
  %v1332 = vld [vmem:[%s1319 + $0x60] sm:$0xff]
  %v1333 = vld [vmem:[%s1319 + $0x68] sm:$0xff]
  %v1334 = vld [vmem:[%s1319 + $0x70] sm:$0xff]
  %v1335 = vld [vmem:[%s1319 + $0x78] sm:$0xff]
  %v1336 = vld [vmem:[%s1319 + $0x80] sm:$0xff]
  %v1337 = vld [vmem:[%s1319 + $0x88] sm:$0xff]
  %v1338 = vld [vmem:[%s1319 + $0x90] sm:$0xff]
  %v1339 = vld [vmem:[%s1319 + $0x98] sm:$0xff]
  %v1340 = vld [vmem:[%s1319 + $0xa0] sm:$0xff]
  %v1341 = vld [vmem:[%s1319 + $0xa8] sm:$0xff]
  %v1342 = vld [vmem:[%s1319 + $0xb0] sm:$0xff]
  %v1343 = vld [vmem:[%s1319 + $0xb8] sm:$0xff]
  %v1345 = vsel %vm131, %v81, 0
  %1347 = vmatprep.subr.mxu0 0.0
  %1348 = vmatpush1.msra.mxu0 0.0
  %1349 = vmatprep.subr.mxu0 0.0
  %1350 = vmatpush1.msra.mxu0 0.0
  %1351 = vmatprep.subr.mxu0 0.0
  %1352 = vmatpush1.msra.mxu0 0.0
  %1353 = vmatprep.subr.mxu0 0.0
  %1354 = vmatpush1.msra.mxu0 0.0
  %1355 = vmatprep.subr.mxu0 %v1343
  %1356 = vmatpush1.msra.mxu0 %v1342
  %1357 = vmatprep.subr.mxu0 %v1341
  %1358 = vmatpush1.msra.mxu0 %v1340
  %1359 = vmatprep.subr.mxu0 %v1339
  %1360 = vmatpush1.msra.mxu0 %v1338
  %1361 = vmatprep.subr.mxu0 %v1337
  %1362 = vmatpush1.msra.mxu0 %v1336
  %1363 = vmatprep.subr.mxu0 %v1335
  %1364 = vmatpush1.msra.mxu0 %v1334
  %1365 = vmatprep.subr.mxu0 %v1333
  %1366 = vmatpush1.msra.mxu0 %v1332
  %1367 = vmatprep.subr.mxu0 %v1331
  %1368 = vmatpush1.msra.mxu0 %v1330
  %1369 = vmatprep.subr.mxu0 %v1329
  %1370 = vmatpush1.msra.mxu0 %v1328
  %1371 = vmatprep.subr.mxu0 %v1327
  %1372 = vmatpush1.msra.mxu0 %v1326
  %1373 = vmatprep.subr.mxu0 %v1325
  %1374 = vmatpush1.msra.mxu0 %v1324
  %1375 = vmatprep.subr.mxu0 %v1323
  %1376 = vmatpush1.msra.mxu0 %v1322
  %1377 = vmatprep.subr.mxu0 %v1321
  %1378 = vmatpush1.msra.mxu0 %v1320
  %1379 = vmatprep.subr.mxu0 0.0
  %1380 = vmatpush2.msra.mxu0 0.0
  %1381 = vmatprep.subr.mxu0 0.0
  %1382 = vmatpush2.msra.mxu0 0.0
  %1383 = vmatprep.subr.mxu0 0.0
  %1384 = vmatpush2.msra.mxu0 0.0
  %1385 = vmatprep.subr.mxu0 0.0
  %1386 = vmatpush2.msra.mxu0 0.0
  %1387 = vmatprep.subr.mxu0 0.0
  %1388 = vmatpush2.msra.mxu0 0.0
  %1389 = vmatprep.subr.mxu0 0.0
  %1390 = vmatpush2.msra.mxu0 0.0
  %1391 = vmatprep.subr.mxu0 0.0
  %1392 = vmatpush2.msra.mxu0 0.0
  %1393 = vmatprep.subr.mxu0 0.0
  %1394 = vmatpush2.msra.mxu0 0.0
  %1395 = vmatprep.subr.mxu0 0.0
  %1396 = vmatpush2.msra.mxu0 0.0
  %1397 = vmatprep.subr.mxu0 0.0
  %1398 = vmatpush2.msra.mxu0 0.0
  %1399 = vmatprep.subr.mxu0 0.0
  %1400 = vmatpush2.msra.mxu0 0.0
  %1401 = vmatprep.subr.mxu0 0.0
  %1402 = vmatpush2.msra.mxu0 0.0
  %1403 = vmatprep.subr.mxu0 0.0
  %1404 = vmatpush2.msra.mxu0 0.0
  %1405 = vmatprep.subr.mxu0 0.0
  %1406 = vmatpush2.msra.mxu0 0.0
  %1407 = vmatprep.subr.mxu0 0.0
  %1408 = vmatpush2.msra.mxu0 0.0
  %1409 = vmatprep.subr.mxu0 0.0
  %1410 = vmatpush2.msra.mxu0 0.0
  %1411 = vmatprep.mubr.f32.mxu0 0.0
  %1412 = vmatmul.mubr.f32.gmra.mxu0 %v142
  %v1413 = vpop.f32.mrf.mxu0
  %v1414 = vadd.f32 0.0, %v1413
  %v1415 = vpop.f32.mrf.mxu0
  %v1416 = vadd.f32 0.0, %v1415
  %1417 = vmatprep.mubr.f32.mxu0 0.0
  %1418 = vmatmul.mubr.f32.gmra.mxu0 %v145
  %v1419 = vpop.f32.mrf.mxu0
  %v1420 = vadd.f32 0.0, %v1419
  %v1421 = vpop.f32.mrf.mxu0
  %v1422 = vadd.f32 0.0, %v1421
  %1423 = vmatprep.mubr.f32.mxu0 0.0
  %1424 = vmatmul.mubr.f32.gmra.mxu0 %v148
  %v1425 = vpop.f32.mrf.mxu0
  %v1426 = vadd.f32 0.0, %v1425
  %v1427 = vpop.f32.mrf.mxu0
  %v1428 = vadd.f32 0.0, %v1427
  %1429 = vmatprep.mubr.f32.mxu0 0.0
  %1430 = vmatmul.mubr.f32.gmra.mxu0 %v151
  %v1431 = vpop.f32.mrf.mxu0
  %v1432 = vadd.f32 0.0, %v1431
  %v1433 = vpop.f32.mrf.mxu0
  %v1434 = vadd.f32 0.0, %v1433
  %1435 = vmatprep.mubr.f32.mxu0 0.0
  %1436 = vmatmul.mubr.f32.gmra.mxu0 %v154
  %v1437 = vpop.f32.mrf.mxu0
  %v1438 = vadd.f32 0.0, %v1437
  %v1439 = vpop.f32.mrf.mxu0
  %v1440 = vadd.f32 0.0, %v1439
  %1441 = vmatprep.mubr.f32.mxu0 0.0
  %1442 = vmatmul.mubr.f32.gmra.mxu0 %v157
  %v1443 = vpop.f32.mrf.mxu0
  %v1444 = vadd.f32 0.0, %v1443
  %v1445 = vpop.f32.mrf.mxu0
  %v1446 = vadd.f32 0.0, %v1445
  %1447 = vmatprep.mubr.f32.mxu0 0.0
  %1448 = vmatmul.mubr.f32.gmra.mxu0 %v160
  %v1449 = vpop.f32.mrf.mxu0
  %v1450 = vadd.f32 0.0, %v1449
  %v1451 = vpop.f32.mrf.mxu0
  %v1452 = vadd.f32 0.0, %v1451
  %1453 = vmatprep.mubr.f32.mxu0 0.0
  %1454 = vmatmul.mubr.f32.gmra.mxu0 %v163
  %v1455 = vpop.f32.mrf.mxu0
  %v1456 = vadd.f32 0.0, %v1455
  %v1457 = vpop.f32.mrf.mxu0
  %v1458 = vadd.f32 0.0, %v1457
  %1459 = vmatprep.mubr.f32.mxu0 0.0
  %1460 = vmatmul.mubr.f32.gmra.mxu0 %v166
  %v1461 = vpop.f32.mrf.mxu0
  %v1462 = vadd.f32 0.0, %v1461
  %v1463 = vpop.f32.mrf.mxu0
  %v1464 = vadd.f32 0.0, %v1463
  %1465 = vmatprep.mubr.f32.mxu0 0.0
  %1466 = vmatmul.mubr.f32.gmra.mxu0 %v169
  %v1467 = vpop.f32.mrf.mxu0
  %v1468 = vadd.f32 0.0, %v1467
  %v1469 = vpop.f32.mrf.mxu0
  %v1470 = vadd.f32 0.0, %v1469
  %1471 = vmatprep.mubr.f32.mxu0 0.0
  %1472 = vmatmul.mubr.f32.gmra.mxu0 %v172
  %v1473 = vpop.f32.mrf.mxu0
  %v1474 = vadd.f32 0.0, %v1473
  %v1475 = vpop.f32.mrf.mxu0
  %v1476 = vadd.f32 0.0, %v1475
  %1477 = vmatprep.mubr.f32.mxu0 0.0
  %1478 = vmatmul.mubr.f32.gmra.mxu0 %v175
  %v1479 = vpop.f32.mrf.mxu0
  %v1480 = vadd.f32 0.0, %v1479
  %v1481 = vpop.f32.mrf.mxu0
  %v1482 = vadd.f32 0.0, %v1481
  %1483 = vmatprep.mubr.f32.mxu0 0.0
  %1484 = vmatmul.mubr.f32.gmra.mxu0 %v178
  %v1485 = vpop.f32.mrf.mxu0
  %v1486 = vadd.f32 0.0, %v1485
  %v1487 = vpop.f32.mrf.mxu0
  %v1488 = vadd.f32 0.0, %v1487
  %1489 = vmatprep.mubr.f32.mxu0 0.0
  %1490 = vmatmul.mubr.f32.gmra.mxu0 %v181
  %v1491 = vpop.f32.mrf.mxu0
  %v1492 = vadd.f32 0.0, %v1491
  %v1493 = vpop.f32.mrf.mxu0
  %v1494 = vadd.f32 0.0, %v1493
  %1495 = vmatprep.mubr.f32.mxu0 0.0
  %1496 = vmatmul.mubr.f32.gmra.mxu0 %v184
  %v1497 = vpop.f32.mrf.mxu0
  %v1498 = vadd.f32 0.0, %v1497
  %v1499 = vpop.f32.mrf.mxu0
  %v1500 = vadd.f32 0.0, %v1499
  %1501 = vmatprep.mubr.f32.mxu0 0.0
  %1502 = vmatmul.mubr.f32.gmra.mxu0 %v187
  %v1503 = vpop.f32.mrf.mxu0
  %v1504 = vadd.f32 0.0, %v1503
  %v1505 = vpop.f32.mrf.mxu0
  %v1506 = vadd.f32 0.0, %v1505
  %1507 = vmatprep.mubr.f32.mxu0 0.0
  %1508 = vmatmul.mubr.f32.gmra.mxu0 %v190
  %v1509 = vpop.f32.mrf.mxu0
  %v1510 = vadd.f32 0.0, %v1509
  %v1511 = vpop.f32.mrf.mxu0
  %v1512 = vadd.f32 0.0, %v1511
  %1513 = vmatprep.mubr.f32.mxu0 0.0
  %1514 = vmatmul.mubr.f32.gmra.mxu0 %v193
  %v1515 = vpop.f32.mrf.mxu0
  %v1516 = vadd.f32 0.0, %v1515
  %v1517 = vpop.f32.mrf.mxu0
  %v1518 = vadd.f32 0.0, %v1517
  %1519 = vmatprep.mubr.f32.mxu0 0.0
  %1520 = vmatmul.mubr.f32.gmra.mxu0 %v196
  %v1521 = vpop.f32.mrf.mxu0
  %v1522 = vadd.f32 0.0, %v1521
  %v1523 = vpop.f32.mrf.mxu0
  %v1524 = vadd.f32 0.0, %v1523
  %1525 = vmatprep.mubr.f32.mxu0 0.0
  %1526 = vmatmul.mubr.f32.gmra.mxu0 %v199
  %v1527 = vpop.f32.mrf.mxu0
  %v1528 = vadd.f32 0.0, %v1527
  %v1529 = vpop.f32.mrf.mxu0
  %v1530 = vadd.f32 0.0, %v1529
  %1531 = vmatprep.mubr.f32.mxu0 0.0
  %1532 = vmatmul.mubr.f32.gmra.mxu0 %v202
  %v1533 = vpop.f32.mrf.mxu0
  %v1534 = vadd.f32 0.0, %v1533
  %v1535 = vpop.f32.mrf.mxu0
  %v1536 = vadd.f32 0.0, %v1535
  %1537 = vmatprep.mubr.f32.mxu0 0.0
  %1538 = vmatmul.mubr.f32.gmra.mxu0 %v205
  %v1539 = vpop.f32.mrf.mxu0
  %v1540 = vadd.f32 0.0, %v1539
  %v1541 = vpop.f32.mrf.mxu0
  %v1542 = vadd.f32 0.0, %v1541
  %1543 = vmatprep.mubr.f32.mxu0 0.0
  %1544 = vmatmul.mubr.f32.gmra.mxu0 %v208
  %v1545 = vpop.f32.mrf.mxu0
  %v1546 = vadd.f32 0.0, %v1545
  %v1547 = vpop.f32.mrf.mxu0
  %v1548 = vadd.f32 0.0, %v1547
  %1549 = vmatprep.mubr.f32.mxu0 0.0
  %1550 = vmatmul.mubr.f32.gmra.mxu0 %v211
  %v1551 = vpop.f32.mrf.mxu0
  %v1552 = vadd.f32 0.0, %v1551
  %v1553 = vpop.f32.mrf.mxu0
  %v1554 = vadd.f32 0.0, %v1553
  %1555 = vmatprep.mubr.f32.mxu0 0.0
  %1556 = vmatmul.mubr.f32.gmra.mxu0 %v214
  %v1557 = vpop.f32.mrf.mxu0
  %v1558 = vadd.f32 0.0, %v1557
  %v1559 = vpop.f32.mrf.mxu0
  %v1560 = vadd.f32 0.0, %v1559
  %1561 = vmatprep.mubr.f32.mxu0 0.0
  %1562 = vmatmul.mubr.f32.gmra.mxu0 %v711
  %v1563 = vpop.f32.mrf.mxu0
  %v1564 = vadd.f32 0.0, %v1563
  %v1565 = vpop.f32.mrf.mxu0
  %v1566 = vadd.f32 0.0, %v1565
  %1567 = vmatprep.mubr.f32.mxu0 0.0
  %1568 = vmatmul.mubr.f32.gmra.mxu0 %v1028
  %v1569 = vpop.f32.mrf.mxu0
  %v1570 = vadd.f32 0.0, %v1569
  %v1571 = vpop.f32.mrf.mxu0
  %v1572 = vadd.f32 0.0, %v1571
  %1573 = vmatprep.mubr.f32.mxu0 0.0
  %1574 = vmatmul.mubr.f32.gmra.mxu0 %v1345
  %v1575 = vpop.f32.mrf.mxu0
  %v1576 = vadd.f32 0.0, %v1575
  %v1577 = vpop.f32.mrf.mxu0
  %v1578 = vadd.f32 0.0, %v1577
  %1579 = vdwg.mxu0
  %v1580 = vadd.f32 %v1263, %v1414
  %v1581 = vadd.f32 %v1264, %v1416
  %v1582 = vadd.f32 %v1265, %v1420
  %v1583 = vadd.f32 %v1266, %v1422
  %v1584 = vadd.f32 %v1267, %v1426
  %v1585 = vadd.f32 %v1268, %v1428
  %v1586 = vadd.f32 %v1269, %v1432
  %v1587 = vadd.f32 %v1270, %v1434
  %v1588 = vadd.f32 %v1271, %v1438
  %v1589 = vadd.f32 %v1272, %v1440
  %v1590 = vadd.f32 %v1273, %v1444
  %v1591 = vadd.f32 %v1274, %v1446
  %v1592 = vadd.f32 %v1275, %v1450
  %v1593 = vadd.f32 %v1276, %v1452
  %v1594 = vadd.f32 %v1277, %v1456
  %v1595 = vadd.f32 %v1278, %v1458
  %v1596 = vadd.f32 %v1279, %v1462
  %v1597 = vadd.f32 %v1280, %v1464
  %v1598 = vadd.f32 %v1281, %v1468
  %v1599 = vadd.f32 %v1282, %v1470
  %v1600 = vadd.f32 %v1283, %v1474
  %v1601 = vadd.f32 %v1284, %v1476
  %v1602 = vadd.f32 %v1285, %v1480
  %v1603 = vadd.f32 %v1286, %v1482
  %v1604 = vadd.f32 %v1287, %v1486
  %v1605 = vadd.f32 %v1288, %v1488
  %v1606 = vadd.f32 %v1289, %v1492
  %v1607 = vadd.f32 %v1290, %v1494
  %v1608 = vadd.f32 %v1291, %v1498
  %v1609 = vadd.f32 %v1292, %v1500
  %v1610 = vadd.f32 %v1293, %v1504
  %v1611 = vadd.f32 %v1294, %v1506
  %v1612 = vadd.f32 %v1295, %v1510
  %v1613 = vadd.f32 %v1296, %v1512
  %v1614 = vadd.f32 %v1297, %v1516
  %v1615 = vadd.f32 %v1298, %v1518
  %v1616 = vadd.f32 %v1299, %v1522
  %v1617 = vadd.f32 %v1300, %v1524
  %v1618 = vadd.f32 %v1301, %v1528
  %v1619 = vadd.f32 %v1302, %v1530
  %v1620 = vadd.f32 %v1303, %v1534
  %v1621 = vadd.f32 %v1304, %v1536
  %v1622 = vadd.f32 %v1305, %v1540
  %v1623 = vadd.f32 %v1306, %v1542
  %v1624 = vadd.f32 %v1307, %v1546
  %v1625 = vadd.f32 %v1308, %v1548
  %v1626 = vadd.f32 %v1309, %v1552
  %v1627 = vadd.f32 %v1310, %v1554
  %v1628 = vadd.f32 %v1311, %v1558
  %v1629 = vadd.f32 %v1312, %v1560
  %v1630 = vadd.f32 %v1313, %v1564
  %v1631 = vadd.f32 %v1314, %v1566
  %v1632 = vadd.f32 %v1315, %v1570
  %v1633 = vadd.f32 %v1316, %v1572
  %v1634 = vadd.f32 %v1317, %v1576
  %v1635 = vadd.f32 %v1318, %v1578
  %v1636 = vld [vmem:[%s2] sm:$0x3]
  %v1638 = vlaneseq
  %v1639 = vshrl.u32 %v1638, 7
  %v1640 = vsub.s32 0, %v1639
  %v1641 = vrot.slane %v1636, %v1640
  %v1642 = vlaneseq
  %v1643 = vshrl.u32 %v1642, 7
  %v1644 = vsub.s32 1, %v1643
  %v1645 = vrot.slane %v1636, %v1644
  %v1648 = vadd.f32 %v1580, %v1641
  %v1649 = vadd.f32 %v1581, %v1645
  %v1650 = vadd.f32 %v1582, %v1641
  %v1651 = vadd.f32 %v1583, %v1645
  %v1652 = vadd.f32 %v1584, %v1641
  %v1653 = vadd.f32 %v1585, %v1645
  %v1654 = vadd.f32 %v1586, %v1641
  %v1655 = vadd.f32 %v1587, %v1645
  %v1656 = vadd.f32 %v1588, %v1641
  %v1657 = vadd.f32 %v1589, %v1645
  %v1658 = vadd.f32 %v1590, %v1641
  %v1659 = vadd.f32 %v1591, %v1645
  %v1660 = vadd.f32 %v1592, %v1641
  %v1661 = vadd.f32 %v1593, %v1645
  %v1662 = vadd.f32 %v1594, %v1641
  %v1663 = vadd.f32 %v1595, %v1645
  %v1664 = vadd.f32 %v1596, %v1641
  %v1665 = vadd.f32 %v1597, %v1645
  %v1666 = vadd.f32 %v1598, %v1641
  %v1667 = vadd.f32 %v1599, %v1645
  %v1668 = vadd.f32 %v1600, %v1641
  %v1669 = vadd.f32 %v1601, %v1645
  %v1670 = vadd.f32 %v1602, %v1641
  %v1671 = vadd.f32 %v1603, %v1645
  %v1672 = vadd.f32 %v1604, %v1641
  %v1673 = vadd.f32 %v1605, %v1645
  %v1674 = vadd.f32 %v1606, %v1641
  %v1675 = vadd.f32 %v1607, %v1645
  %v1676 = vadd.f32 %v1608, %v1641
  %v1677 = vadd.f32 %v1609, %v1645
  %v1678 = vadd.f32 %v1610, %v1641
  %v1679 = vadd.f32 %v1611, %v1645
  %v1680 = vadd.f32 %v1612, %v1641
  %v1681 = vadd.f32 %v1613, %v1645
  %v1682 = vadd.f32 %v1614, %v1641
  %v1683 = vadd.f32 %v1615, %v1645
  %v1684 = vadd.f32 %v1616, %v1641
  %v1685 = vadd.f32 %v1617, %v1645
  %v1686 = vadd.f32 %v1618, %v1641
  %v1687 = vadd.f32 %v1619, %v1645
  %v1688 = vadd.f32 %v1620, %v1641
  %v1689 = vadd.f32 %v1621, %v1645
  %v1690 = vadd.f32 %v1622, %v1641
  %v1691 = vadd.f32 %v1623, %v1645
  %v1692 = vadd.f32 %v1624, %v1641
  %v1693 = vadd.f32 %v1625, %v1645
  %v1694 = vadd.f32 %v1626, %v1641
  %v1695 = vadd.f32 %v1627, %v1645
  %v1696 = vadd.f32 %v1628, %v1641
  %v1697 = vadd.f32 %v1629, %v1645
  %v1698 = vadd.f32 %v1630, %v1641
  %v1699 = vadd.f32 %v1631, %v1645
  %v1700 = vadd.f32 %v1632, %v1641
  %v1701 = vadd.f32 %v1633, %v1645
  %v1702 = vadd.f32 %v1634, %v1641
  %v1703 = vadd.f32 %v1635, %v1645
  %v1704 = vmax.f32 %v1648, 0.0
  %v1705 = vmax.f32 %v1649, 0.0
  %v1706 = vmax.f32 %v1650, 0.0
  %v1707 = vmax.f32 %v1651, 0.0
  %v1708 = vmax.f32 %v1652, 0.0
  %v1709 = vmax.f32 %v1653, 0.0
  %v1710 = vmax.f32 %v1654, 0.0
  %v1711 = vmax.f32 %v1655, 0.0
  %v1712 = vmax.f32 %v1656, 0.0
  %v1713 = vmax.f32 %v1657, 0.0
  %v1714 = vmax.f32 %v1658, 0.0
  %v1715 = vmax.f32 %v1659, 0.0
  %v1716 = vmax.f32 %v1660, 0.0
  %v1717 = vmax.f32 %v1661, 0.0
  %v1718 = vmax.f32 %v1662, 0.0
  %v1719 = vmax.f32 %v1663, 0.0
  %v1720 = vmax.f32 %v1664, 0.0
  %v1721 = vmax.f32 %v1665, 0.0
  %v1722 = vmax.f32 %v1666, 0.0
  %v1723 = vmax.f32 %v1667, 0.0
  %v1724 = vmax.f32 %v1668, 0.0
  %v1725 = vmax.f32 %v1669, 0.0
  %v1726 = vmax.f32 %v1670, 0.0
  %v1727 = vmax.f32 %v1671, 0.0
  %v1728 = vmax.f32 %v1672, 0.0
  %v1729 = vmax.f32 %v1673, 0.0
  %v1730 = vmax.f32 %v1674, 0.0
  %v1731 = vmax.f32 %v1675, 0.0
  %v1732 = vmax.f32 %v1676, 0.0
  %v1733 = vmax.f32 %v1677, 0.0
  %v1734 = vmax.f32 %v1678, 0.0
  %v1735 = vmax.f32 %v1679, 0.0
  %v1736 = vmax.f32 %v1680, 0.0
  %v1737 = vmax.f32 %v1681, 0.0
  %v1738 = vmax.f32 %v1682, 0.0
  %v1739 = vmax.f32 %v1683, 0.0
  %v1740 = vmax.f32 %v1684, 0.0
  %v1741 = vmax.f32 %v1685, 0.0
  %v1742 = vmax.f32 %v1686, 0.0
  %v1743 = vmax.f32 %v1687, 0.0
  %v1744 = vmax.f32 %v1688, 0.0
  %v1745 = vmax.f32 %v1689, 0.0
  %v1746 = vmax.f32 %v1690, 0.0
  %v1747 = vmax.f32 %v1691, 0.0
  %v1748 = vmax.f32 %v1692, 0.0
  %v1749 = vmax.f32 %v1693, 0.0
  %v1750 = vmax.f32 %v1694, 0.0
  %v1751 = vmax.f32 %v1695, 0.0
  %v1752 = vmax.f32 %v1696, 0.0
  %v1753 = vmax.f32 %v1697, 0.0
  %v1754 = vmax.f32 %v1698, 0.0
  %v1755 = vmax.f32 %v1699, 0.0
  %v1756 = vmax.f32 %v1700, 0.0
  %v1757 = vmax.f32 %v1701, 0.0
  %v1758 = vmax.f32 %v1702, 0.0
  %v1759 = vmax.f32 %v1703, 0.0
  %v1760 = vmax.f32 %v1704, %v1706
  %v1761 = vmax.f32 %v1705, %v1707
  %v1762 = vmax.f32 %v1708, %v1710
  %v1763 = vmax.f32 %v1709, %v1711
  %v1764 = vmax.f32 %v1712, %v1714
  %v1765 = vmax.f32 %v1713, %v1715
  %v1766 = vmax.f32 %v1716, %v1718
  %v1767 = vmax.f32 %v1717, %v1719
  %v1768 = vmax.f32 %v1720, %v1722
  %v1769 = vmax.f32 %v1721, %v1723
  %v1770 = vmax.f32 %v1724, %v1726
  %v1771 = vmax.f32 %v1725, %v1727
  %v1772 = vmax.f32 %v1728, %v1730
  %v1773 = vmax.f32 %v1729, %v1731
  %v1774 = vmax.f32 %v1732, %v1734
  %v1775 = vmax.f32 %v1733, %v1735
  %v1776 = vmax.f32 %v1736, %v1738
  %v1777 = vmax.f32 %v1737, %v1739
  %v1778 = vmax.f32 %v1740, %v1742
  %v1779 = vmax.f32 %v1741, %v1743
  %v1780 = vmax.f32 %v1744, %v1746
  %v1781 = vmax.f32 %v1745, %v1747
  %v1782 = vmax.f32 %v1748, %v1750
  %v1783 = vmax.f32 %v1749, %v1751
  %v1784 = vmax.f32 %v1752, %v1754
  %v1785 = vmax.f32 %v1753, %v1755
  %v1786 = vmax.f32 %v1756, %v1758
  %v1787 = vmax.f32 %v1757, %v1759
  %v1788 = vld [vmem:[%s3] sm:$0xff]
  %v1789 = vld [vmem:[%s3 + $0x8] sm:$0xff]
  %v1790 = vld [vmem:[%s3 + $0x10] sm:$0xff]
  %v1791 = vld [vmem:[%s3 + $0x18] sm:$0xff]
  %v1792 = vld [vmem:[%s3 + $0x20] sm:$0xff]
  %v1793 = vld [vmem:[%s3 + $0x28] sm:$0xff]
  %v1794 = vld [vmem:[%s3 + $0x30] sm:$0xff]
  %v1795 = vld [vmem:[%s3 + $0x38] sm:$0xff]
  %v1796 = vld [vmem:[%s3 + $0x40] sm:$0xff]
  %v1797 = vld [vmem:[%s3 + $0x48] sm:$0xff]
  %v1798 = vld [vmem:[%s3 + $0x50] sm:$0xff]
  %v1799 = vld [vmem:[%s3 + $0x58] sm:$0xff]
  %v1800 = vld [vmem:[%s3 + $0x60] sm:$0xff]
  %v1801 = vld [vmem:[%s3 + $0x68] sm:$0xff]
  %v1802 = vld [vmem:[%s3 + $0x70] sm:$0xff]
  %v1803 = vld [vmem:[%s3 + $0x78] sm:$0xff]
  %v1804 = vld [vmem:[%s3 + $0x80] sm:$0xff]
  %v1805 = vld [vmem:[%s3 + $0x88] sm:$0xff]
  %v1806 = vld [vmem:[%s3 + $0x90] sm:$0xff]
  %v1807 = vld [vmem:[%s3 + $0x98] sm:$0xff]
  %v1808 = vld [vmem:[%s3 + $0xa0] sm:$0xff]
  %vm1809 = vcmask 326656
  %v1811 = vsel %vm1809, %v1761, 0
  %v1814 = vsel %vm1809, %v1763, 0
  %v1817 = vsel %vm1809, %v1765, 0
  %v1820 = vsel %vm1809, %v1767, 0
  %v1823 = vsel %vm1809, %v1769, 0
  %v1826 = vsel %vm1809, %v1771, 0
  %v1829 = vsel %vm1809, %v1773, 0
  %v1832 = vsel %vm1809, %v1775, 0
  %v1835 = vsel %vm1809, %v1777, 0
  %v1838 = vsel %vm1809, %v1779, 0
  %v1841 = vsel %vm1809, %v1781, 0
  %v1844 = vsel %vm1809, %v1783, 0
  %v1847 = vsel %vm1809, %v1785, 0
  %v1850 = vsel %vm1809, %v1787, 0
  %1852 = vmatprep.subr.mxu0 0.0
  %1853 = vmatpush1.msra.mxu0 %v1803
  %1854 = vmatprep.subr.mxu0 0.0
  %1855 = vmatpush1.msra.mxu0 %v1802
  %1856 = vmatprep.subr.mxu0 0.0
  %1857 = vmatpush1.msra.mxu0 %v1801
  %1858 = vmatprep.subr.mxu0 0.0
  %1859 = vmatpush1.msra.mxu0 %v1800
  %1860 = vmatprep.subr.mxu0 0.0
  %1861 = vmatpush1.msra.mxu0 %v1799
  %1862 = vmatprep.subr.mxu0 0.0
  %1863 = vmatpush1.msra.mxu0 %v1798
  %1864 = vmatprep.subr.mxu0 0.0
  %1865 = vmatpush1.msra.mxu0 %v1797
  %1866 = vmatprep.subr.mxu0 0.0
  %1867 = vmatpush1.msra.mxu0 %v1796
  %1868 = vmatprep.subr.mxu0 0.0
  %1869 = vmatpush1.msra.mxu0 %v1795
  %1870 = vmatprep.subr.mxu0 0.0
  %1871 = vmatpush1.msra.mxu0 %v1794
  %1872 = vmatprep.subr.mxu0 0.0
  %1873 = vmatpush1.msra.mxu0 %v1793
  %1874 = vmatprep.subr.mxu0 0.0
  %1875 = vmatpush1.msra.mxu0 %v1792
  %1876 = vmatprep.subr.mxu0 0.0
  %1877 = vmatpush1.msra.mxu0 %v1791
  %1878 = vmatprep.subr.mxu0 0.0
  %1879 = vmatpush1.msra.mxu0 %v1790
  %1880 = vmatprep.subr.mxu0 0.0
  %1881 = vmatpush1.msra.mxu0 %v1789
  %1882 = vmatprep.subr.mxu0 0.0
  %1883 = vmatpush1.msra.mxu0 %v1788
  %1884 = vmatprep.subr.mxu0 0.0
  %1885 = vmatpush2.msra.mxu0 0.0
  %1886 = vmatprep.subr.mxu0 0.0
  %1887 = vmatpush2.msra.mxu0 0.0
  %1888 = vmatprep.subr.mxu0 0.0
  %1889 = vmatpush2.msra.mxu0 0.0
  %1890 = vmatprep.subr.mxu0 0.0
  %1891 = vmatpush2.msra.mxu0 0.0
  %1892 = vmatprep.subr.mxu0 0.0
  %1893 = vmatpush2.msra.mxu0 0.0
  %1894 = vmatprep.subr.mxu0 0.0
  %1895 = vmatpush2.msra.mxu0 0.0
  %1896 = vmatprep.subr.mxu0 0.0
  %1897 = vmatpush2.msra.mxu0 0.0
  %1898 = vmatprep.subr.mxu0 0.0
  %1899 = vmatpush2.msra.mxu0 0.0
  %1900 = vmatprep.subr.mxu0 0.0
  %1901 = vmatpush2.msra.mxu0 0.0
  %1902 = vmatprep.subr.mxu0 0.0
  %1903 = vmatpush2.msra.mxu0 0.0
  %1904 = vmatprep.subr.mxu0 0.0
  %1905 = vmatpush2.msra.mxu0 0.0
  %1906 = vmatprep.subr.mxu0 0.0
  %1907 = vmatpush2.msra.mxu0 %v1808
  %1908 = vmatprep.subr.mxu0 0.0
  %1909 = vmatpush2.msra.mxu0 %v1807
  %1910 = vmatprep.subr.mxu0 0.0
  %1911 = vmatpush2.msra.mxu0 %v1806
  %1912 = vmatprep.subr.mxu0 0.0
  %1913 = vmatpush2.msra.mxu0 %v1805
  %1914 = vmatprep.subr.mxu0 0.0
  %1915 = vmatpush2.msra.mxu0 %v1804
  %1916 = vmatprep.mubr.f32.mxu0 %v1811
  %1917 = vmatmul.mubr.f32.gmra.mxu0 %v1760
  %v1918 = vpop.f32.mrf.mxu0
  %v1919 = vadd.f32 0.0, %v1918
  %v1920 = vpop.f32.mrf.mxu0
  %1921 = vmatprep.mubr.f32.mxu0 %v1814
  %1922 = vmatmul.mubr.f32.gmra.mxu0 %v1762
  %v1923 = vpop.f32.mrf.mxu0
  %v1924 = vadd.f32 0.0, %v1923
  %v1925 = vpop.f32.mrf.mxu0
  %1926 = vmatprep.mubr.f32.mxu0 %v1817
  %1927 = vmatmul.mubr.f32.gmra.mxu0 %v1764
  %v1928 = vpop.f32.mrf.mxu0
  %v1929 = vadd.f32 0.0, %v1928
  %v1930 = vpop.f32.mrf.mxu0
  %1931 = vmatprep.mubr.f32.mxu0 %v1820
  %1932 = vmatmul.mubr.f32.gmra.mxu0 %v1766
  %v1933 = vpop.f32.mrf.mxu0
  %v1934 = vadd.f32 0.0, %v1933
  %v1935 = vpop.f32.mrf.mxu0
  %1936 = vmatprep.mubr.f32.mxu0 %v1823
  %1937 = vmatmul.mubr.f32.gmra.mxu0 %v1768
  %v1938 = vpop.f32.mrf.mxu0
  %v1939 = vadd.f32 0.0, %v1938
  %v1940 = vpop.f32.mrf.mxu0
  %1941 = vmatprep.mubr.f32.mxu0 %v1826
  %1942 = vmatmul.mubr.f32.gmra.mxu0 %v1770
  %v1943 = vpop.f32.mrf.mxu0
  %v1944 = vadd.f32 0.0, %v1943
  %v1945 = vpop.f32.mrf.mxu0
  %1946 = vmatprep.mubr.f32.mxu0 %v1829
  %1947 = vmatmul.mubr.f32.gmra.mxu0 %v1772
  %v1948 = vpop.f32.mrf.mxu0
  %v1949 = vadd.f32 0.0, %v1948
  %v1950 = vpop.f32.mrf.mxu0
  %1951 = vmatprep.mubr.f32.mxu0 %v1832
  %1952 = vmatmul.mubr.f32.gmra.mxu0 %v1774
  %v1953 = vpop.f32.mrf.mxu0
  %v1954 = vadd.f32 0.0, %v1953
  %v1955 = vpop.f32.mrf.mxu0
  %1956 = vmatprep.mubr.f32.mxu0 %v1835
  %1957 = vmatmul.mubr.f32.gmra.mxu0 %v1776
  %v1958 = vpop.f32.mrf.mxu0
  %v1959 = vadd.f32 0.0, %v1958
  %v1960 = vpop.f32.mrf.mxu0
  %1961 = vmatprep.mubr.f32.mxu0 %v1838
  %1962 = vmatmul.mubr.f32.gmra.mxu0 %v1778
  %v1963 = vpop.f32.mrf.mxu0
  %v1964 = vadd.f32 0.0, %v1963
  %v1965 = vpop.f32.mrf.mxu0
  %1966 = vmatprep.mubr.f32.mxu0 %v1841
  %1967 = vmatmul.mubr.f32.gmra.mxu0 %v1780
  %v1968 = vpop.f32.mrf.mxu0
  %v1969 = vadd.f32 0.0, %v1968
  %v1970 = vpop.f32.mrf.mxu0
  %1971 = vmatprep.mubr.f32.mxu0 %v1844
  %1972 = vmatmul.mubr.f32.gmra.mxu0 %v1782
  %v1973 = vpop.f32.mrf.mxu0
  %v1974 = vadd.f32 0.0, %v1973
  %v1975 = vpop.f32.mrf.mxu0
  %1976 = vmatprep.mubr.f32.mxu0 %v1847
  %1977 = vmatmul.mubr.f32.gmra.mxu0 %v1784
  %v1978 = vpop.f32.mrf.mxu0
  %v1979 = vadd.f32 0.0, %v1978
  %v1980 = vpop.f32.mrf.mxu0
  %1981 = vmatprep.mubr.f32.mxu0 %v1850
  %1982 = vmatmul.mubr.f32.gmra.mxu0 %v1786
  %v1983 = vpop.f32.mrf.mxu0
  %v1984 = vadd.f32 0.0, %v1983
  %v1985 = vpop.f32.mrf.mxu0
  %1986 = vdwg.mxu0
  %v1987 = vld [vmem:[%s4] sm:$0xff]
  %v1988 = vld [vmem:[%s4 + $0x8] sm:$0xff]
  %v1989 = vld [vmem:[%s4 + $0x10] sm:$0xff]
  %v1990 = vld [vmem:[%s4 + $0x18] sm:$0xff]
  %v1991 = vld [vmem:[%s4 + $0x20] sm:$0xff]
  %v1992 = vld [vmem:[%s4 + $0x28] sm:$0xff]
  %v1993 = vld [vmem:[%s4 + $0x30] sm:$0xff]
  %v1994 = vld [vmem:[%s4 + $0x38] sm:$0xff]
  %v1995 = vld [vmem:[%s4 + $0x40] sm:$0xff]
  %v1996 = vld [vmem:[%s4 + $0x48] sm:$0xff]
  %v1997 = vld [vmem:[%s4 + $0x50] sm:$0xff]
  %v1998 = vld [vmem:[%s4 + $0x58] sm:$0xff]
  %v1999 = vld [vmem:[%s4 + $0x60] sm:$0xff]
  %v2000 = vld [vmem:[%s4 + $0x68] sm:$0xff]
  %v2001 = vld [vmem:[%s4 + $0x70] sm:$0xff]
  %v2002 = vld [vmem:[%s4 + $0x78] sm:$0xff]
  %v2003 = vld [vmem:[%s4 + $0x80] sm:$0xff]
  %v2004 = vld [vmem:[%s4 + $0x88] sm:$0xff]
  %v2005 = vld [vmem:[%s4 + $0x90] sm:$0xff]
  %v2006 = vld [vmem:[%s4 + $0x98] sm:$0xff]
  %v2007 = vld [vmem:[%s4 + $0xa0] sm:$0xff]
  %2008 = vmatprep.subr.mxu0 0.0
  %2009 = vmatpush1.msra.mxu0 %v2002
  %2010 = vmatprep.subr.mxu0 0.0
  %2011 = vmatpush1.msra.mxu0 %v2001
  %2012 = vmatprep.subr.mxu0 0.0
  %2013 = vmatpush1.msra.mxu0 %v2000
  %2014 = vmatprep.subr.mxu0 0.0
  %2015 = vmatpush1.msra.mxu0 %v1999
  %2016 = vmatprep.subr.mxu0 0.0
  %2017 = vmatpush1.msra.mxu0 %v1998
  %2018 = vmatprep.subr.mxu0 0.0
  %2019 = vmatpush1.msra.mxu0 %v1997
  %2020 = vmatprep.subr.mxu0 0.0
  %2021 = vmatpush1.msra.mxu0 %v1996
  %2022 = vmatprep.subr.mxu0 0.0
  %2023 = vmatpush1.msra.mxu0 %v1995
  %2024 = vmatprep.subr.mxu0 0.0
  %2025 = vmatpush1.msra.mxu0 %v1994
  %2026 = vmatprep.subr.mxu0 0.0
  %2027 = vmatpush1.msra.mxu0 %v1993
  %2028 = vmatprep.subr.mxu0 0.0
  %2029 = vmatpush1.msra.mxu0 %v1992
  %2030 = vmatprep.subr.mxu0 0.0
  %2031 = vmatpush1.msra.mxu0 %v1991
  %2032 = vmatprep.subr.mxu0 0.0
  %2033 = vmatpush1.msra.mxu0 %v1990
  %2034 = vmatprep.subr.mxu0 0.0
  %2035 = vmatpush1.msra.mxu0 %v1989
  %2036 = vmatprep.subr.mxu0 0.0
  %2037 = vmatpush1.msra.mxu0 %v1988
  %2038 = vmatprep.subr.mxu0 0.0
  %2039 = vmatpush1.msra.mxu0 %v1987
  %2040 = vmatprep.subr.mxu0 0.0
  %2041 = vmatpush2.msra.mxu0 0.0
  %2042 = vmatprep.subr.mxu0 0.0
  %2043 = vmatpush2.msra.mxu0 0.0
  %2044 = vmatprep.subr.mxu0 0.0
  %2045 = vmatpush2.msra.mxu0 0.0
  %2046 = vmatprep.subr.mxu0 0.0
  %2047 = vmatpush2.msra.mxu0 0.0
  %2048 = vmatprep.subr.mxu0 0.0
  %2049 = vmatpush2.msra.mxu0 0.0
  %2050 = vmatprep.subr.mxu0 0.0
  %2051 = vmatpush2.msra.mxu0 0.0
  %2052 = vmatprep.subr.mxu0 0.0
  %2053 = vmatpush2.msra.mxu0 0.0
  %2054 = vmatprep.subr.mxu0 0.0
  %2055 = vmatpush2.msra.mxu0 0.0
  %2056 = vmatprep.subr.mxu0 0.0
  %2057 = vmatpush2.msra.mxu0 0.0
  %2058 = vmatprep.subr.mxu0 0.0
  %2059 = vmatpush2.msra.mxu0 0.0
  %2060 = vmatprep.subr.mxu0 0.0
  %2061 = vmatpush2.msra.mxu0 0.0
  %2062 = vmatprep.subr.mxu0 0.0
  %2063 = vmatpush2.msra.mxu0 %v2007
  %2064 = vmatprep.subr.mxu0 0.0
  %2065 = vmatpush2.msra.mxu0 %v2006
  %2066 = vmatprep.subr.mxu0 0.0
  %2067 = vmatpush2.msra.mxu0 %v2005
  %2068 = vmatprep.subr.mxu0 0.0
  %2069 = vmatpush2.msra.mxu0 %v2004
  %2070 = vmatprep.subr.mxu0 0.0
  %2071 = vmatpush2.msra.mxu0 %v2003
  %2072 = vmatprep.mubr.f32.mxu0 %v1811
  %2073 = vmatmul.mubr.f32.gmra.mxu0 %v1760
  %v2074 = vpop.f32.mrf.mxu0
  %v2075 = vadd.f32 0.0, %v2074
  %v2076 = vpop.f32.mrf.mxu0
  %2077 = vmatprep.mubr.f32.mxu0 %v1814
  %2078 = vmatmul.mubr.f32.gmra.mxu0 %v1762
  %v2079 = vpop.f32.mrf.mxu0
  %v2080 = vadd.f32 0.0, %v2079
  %v2081 = vpop.f32.mrf.mxu0
  %2082 = vmatprep.mubr.f32.mxu0 %v1817
  %2083 = vmatmul.mubr.f32.gmra.mxu0 %v1764
  %v2084 = vpop.f32.mrf.mxu0
  %v2085 = vadd.f32 0.0, %v2084
  %v2086 = vpop.f32.mrf.mxu0
  %2087 = vmatprep.mubr.f32.mxu0 %v1820
  %2088 = vmatmul.mubr.f32.gmra.mxu0 %v1766
  %v2089 = vpop.f32.mrf.mxu0
  %v2090 = vadd.f32 0.0, %v2089
  %v2091 = vpop.f32.mrf.mxu0
  %2092 = vmatprep.mubr.f32.mxu0 %v1823
  %2093 = vmatmul.mubr.f32.gmra.mxu0 %v1768
  %v2094 = vpop.f32.mrf.mxu0
  %v2095 = vadd.f32 0.0, %v2094
  %v2096 = vpop.f32.mrf.mxu0
  %2097 = vmatprep.mubr.f32.mxu0 %v1826
  %2098 = vmatmul.mubr.f32.gmra.mxu0 %v1770
  %v2099 = vpop.f32.mrf.mxu0
  %v2100 = vadd.f32 0.0, %v2099
  %v2101 = vpop.f32.mrf.mxu0
  %2102 = vmatprep.mubr.f32.mxu0 %v1829
  %2103 = vmatmul.mubr.f32.gmra.mxu0 %v1772
  %v2104 = vpop.f32.mrf.mxu0
  %v2105 = vadd.f32 0.0, %v2104
  %v2106 = vpop.f32.mrf.mxu0
  %2107 = vmatprep.mubr.f32.mxu0 %v1832
  %2108 = vmatmul.mubr.f32.gmra.mxu0 %v1774
  %v2109 = vpop.f32.mrf.mxu0
  %v2110 = vadd.f32 0.0, %v2109
  %v2111 = vpop.f32.mrf.mxu0
  %2112 = vmatprep.mubr.f32.mxu0 %v1835
  %2113 = vmatmul.mubr.f32.gmra.mxu0 %v1776
  %v2114 = vpop.f32.mrf.mxu0
  %v2115 = vadd.f32 0.0, %v2114
  %v2116 = vpop.f32.mrf.mxu0
  %2117 = vmatprep.mubr.f32.mxu0 %v1838
  %2118 = vmatmul.mubr.f32.gmra.mxu0 %v1778
  %v2119 = vpop.f32.mrf.mxu0
  %v2120 = vadd.f32 0.0, %v2119
  %v2121 = vpop.f32.mrf.mxu0
  %2122 = vmatprep.mubr.f32.mxu0 %v1841
  %2123 = vmatmul.mubr.f32.gmra.mxu0 %v1780
  %v2124 = vpop.f32.mrf.mxu0
  %v2125 = vadd.f32 0.0, %v2124
  %v2126 = vpop.f32.mrf.mxu0
  %2127 = vmatprep.mubr.f32.mxu0 %v1844
  %2128 = vmatmul.mubr.f32.gmra.mxu0 %v1782
  %v2129 = vpop.f32.mrf.mxu0
  %v2130 = vadd.f32 0.0, %v2129
  %v2131 = vpop.f32.mrf.mxu0
  %2132 = vmatprep.mubr.f32.mxu0 %v1847
  %2133 = vmatmul.mubr.f32.gmra.mxu0 %v1784
  %v2134 = vpop.f32.mrf.mxu0
  %v2135 = vadd.f32 0.0, %v2134
  %v2136 = vpop.f32.mrf.mxu0
  %2137 = vmatprep.mubr.f32.mxu0 %v1850
  %2138 = vmatmul.mubr.f32.gmra.mxu0 %v1786
  %v2139 = vpop.f32.mrf.mxu0
  %v2140 = vadd.f32 0.0, %v2139
  %v2141 = vpop.f32.mrf.mxu0
  %2142 = vdwg.mxu0
  %v2143 = vmax.f32 %v1919, %v2075
  %v2144 = vmax.f32 %v1924, %v2080
  %v2145 = vmax.f32 %v1929, %v2085
  %v2146 = vmax.f32 %v1934, %v2090
  %v2147 = vmax.f32 %v1939, %v2095
  %v2148 = vmax.f32 %v1944, %v2100
  %v2149 = vmax.f32 %v1949, %v2105
  %v2150 = vmax.f32 %v1954, %v2110
  %v2151 = vmax.f32 %v1959, %v2115
  %v2152 = vmax.f32 %v1964, %v2120
  %v2153 = vmax.f32 %v1969, %v2125
  %v2154 = vmax.f32 %v1974, %v2130
  %v2155 = vmax.f32 %v1979, %v2135
  %v2156 = vmax.f32 %v1984, %v2140
  %v2157 = vld [vmem:[%s5] sm:$0xff]
  %v2158 = vld [vmem:[%s5 + $0x8] sm:$0xff]
  %v2159 = vld [vmem:[%s5 + $0x10] sm:$0xff]
  %v2160 = vld [vmem:[%s5 + $0x18] sm:$0xff]
  %v2161 = vld [vmem:[%s5 + $0x20] sm:$0xff]
  %v2162 = vld [vmem:[%s5 + $0x28] sm:$0xff]
  %v2163 = vld [vmem:[%s5 + $0x30] sm:$0xff]
  %v2164 = vld [vmem:[%s5 + $0x38] sm:$0xff]
  %v2165 = vld [vmem:[%s5 + $0x40] sm:$0xff]
  %v2166 = vld [vmem:[%s5 + $0x48] sm:$0xff]
  %v2167 = vld [vmem:[%s5 + $0x50] sm:$0xff]
  %v2168 = vld [vmem:[%s5 + $0x58] sm:$0xff]
  %v2169 = vld [vmem:[%s5 + $0x60] sm:$0xff]
  %v2170 = vld [vmem:[%s5 + $0x68] sm:$0xff]
  %v2171 = vld [vmem:[%s5 + $0x70] sm:$0xff]
  %v2172 = vld [vmem:[%s5 + $0x78] sm:$0xff]
  %v2173 = vld [vmem:[%s5 + $0x80] sm:$0xff]
  %v2174 = vld [vmem:[%s5 + $0x88] sm:$0xff]
  %v2175 = vld [vmem:[%s5 + $0x90] sm:$0xff]
  %v2176 = vld [vmem:[%s5 + $0x98] sm:$0xff]
  %v2177 = vld [vmem:[%s5 + $0xa0] sm:$0xf]
  %v2178 = vld [vmem:[%s5 + $0xa8] sm:$0xf]
  %s2179 = scalar_lea.vmem %s5, 176
  %v2180 = vld [vmem:[%s2179] sm:$0xff]
  %v2181 = vld [vmem:[%s2179 + $0x8] sm:$0xff]
  %v2182 = vld [vmem:[%s2179 + $0x10] sm:$0xff]
  %v2183 = vld [vmem:[%s2179 + $0x18] sm:$0xff]
  %v2184 = vld [vmem:[%s2179 + $0x20] sm:$0xff]
  %v2185 = vld [vmem:[%s2179 + $0x28] sm:$0xff]
  %v2186 = vld [vmem:[%s2179 + $0x30] sm:$0xff]
  %v2187 = vld [vmem:[%s2179 + $0x38] sm:$0xff]
  %v2188 = vld [vmem:[%s2179 + $0x40] sm:$0xff]
  %v2189 = vld [vmem:[%s2179 + $0x48] sm:$0xff]
  %v2190 = vld [vmem:[%s2179 + $0x50] sm:$0xff]
  %v2191 = vld [vmem:[%s2179 + $0x58] sm:$0xff]
  %v2192 = vld [vmem:[%s2179 + $0x60] sm:$0xff]
  %v2193 = vld [vmem:[%s2179 + $0x68] sm:$0xff]
  %v2194 = vld [vmem:[%s2179 + $0x70] sm:$0xff]
  %v2195 = vld [vmem:[%s2179 + $0x78] sm:$0xff]
  %v2196 = vld [vmem:[%s2179 + $0x80] sm:$0xff]
  %v2197 = vld [vmem:[%s2179 + $0x88] sm:$0xff]
  %v2198 = vld [vmem:[%s2179 + $0x90] sm:$0xff]
  %v2199 = vld [vmem:[%s2179 + $0x98] sm:$0xff]
  %v2200 = vld [vmem:[%s2179 + $0xa0] sm:$0xf]
  %v2201 = vld [vmem:[%s2179 + $0xa8] sm:$0xf]
  %vm2202 = vcmask 687104
  %v2204 = vsel %vm2202, %v2144, 0
  %v2207 = vsel %vm2202, %v2145, 0
  %v2210 = vsel %vm2202, %v2146, 0
  %v2213 = vsel %vm2202, %v2147, 0
  %v2216 = vsel %vm2202, %v2148, 0
  %v2219 = vsel %vm2202, %v2149, 0
  %v2222 = vsel %vm2202, %v2150, 0
  %v2225 = vsel %vm2202, %v2151, 0
  %v2228 = vsel %vm2202, %v2152, 0
  %v2231 = vsel %vm2202, %v2153, 0
  %vm2233 = vcmask 1043456
  %v2235 = vsel %vm2233, %v2200, 0
  %v2238 = vsel %vm2233, %v2201, 0
  %2240 = vmatprep.subr.mxu0 0.0
  %2241 = vmatpush1.msra.mxu0 0.0
  %2242 = vmatprep.subr.mxu0 0.0
  %2243 = vmatpush1.msra.mxu0 0.0
  %2244 = vmatprep.subr.mxu0 0.0
  %2245 = vmatpush1.msra.mxu0 0.0
  %2246 = vmatprep.subr.mxu0 0.0
  %2247 = vmatpush1.msra.mxu0 0.0
  %2248 = vmatprep.subr.mxu0 0.0
  %2249 = vmatpush1.msra.mxu0 0.0
  %2250 = vmatprep.subr.mxu0 %v2238
  %2251 = vmatpush1.msra.mxu0 %v2235
  %2252 = vmatprep.subr.mxu0 %v2199
  %2253 = vmatpush1.msra.mxu0 %v2198
  %2254 = vmatprep.subr.mxu0 %v2197
  %2255 = vmatpush1.msra.mxu0 %v2196
  %2256 = vmatprep.subr.mxu0 %v2195
  %2257 = vmatpush1.msra.mxu0 %v2194
  %2258 = vmatprep.subr.mxu0 %v2193
  %2259 = vmatpush1.msra.mxu0 %v2192
  %2260 = vmatprep.subr.mxu0 %v2191
  %2261 = vmatpush1.msra.mxu0 %v2190
  %2262 = vmatprep.subr.mxu0 %v2189
  %2263 = vmatpush1.msra.mxu0 %v2188
  %2264 = vmatprep.subr.mxu0 %v2187
  %2265 = vmatpush1.msra.mxu0 %v2186
  %2266 = vmatprep.subr.mxu0 %v2185
  %2267 = vmatpush1.msra.mxu0 %v2184
  %2268 = vmatprep.subr.mxu0 %v2183
  %2269 = vmatpush1.msra.mxu0 %v2182
  %2270 = vmatprep.subr.mxu0 %v2181
  %2271 = vmatpush1.msra.mxu0 %v2180
  %2272 = vmatprep.subr.mxu0 0.0
  %2273 = vmatpush2.msra.mxu0 0.0
  %2274 = vmatprep.subr.mxu0 0.0
  %2275 = vmatpush2.msra.mxu0 0.0
  %2276 = vmatprep.subr.mxu0 0.0
  %2277 = vmatpush2.msra.mxu0 0.0
  %2278 = vmatprep.subr.mxu0 0.0
  %2279 = vmatpush2.msra.mxu0 0.0
  %2280 = vmatprep.subr.mxu0 0.0
  %2281 = vmatpush2.msra.mxu0 0.0
  %2282 = vmatprep.subr.mxu0 0.0
  %2283 = vmatpush2.msra.mxu0 0.0
  %2284 = vmatprep.subr.mxu0 0.0
  %2285 = vmatpush2.msra.mxu0 0.0
  %2286 = vmatprep.subr.mxu0 0.0
  %2287 = vmatpush2.msra.mxu0 0.0
  %2288 = vmatprep.subr.mxu0 0.0
  %2289 = vmatpush2.msra.mxu0 0.0
  %2290 = vmatprep.subr.mxu0 0.0
  %2291 = vmatpush2.msra.mxu0 0.0
  %2292 = vmatprep.subr.mxu0 0.0
  %2293 = vmatpush2.msra.mxu0 0.0
  %2294 = vmatprep.subr.mxu0 0.0
  %2295 = vmatpush2.msra.mxu0 0.0
  %2296 = vmatprep.subr.mxu0 0.0
  %2297 = vmatpush2.msra.mxu0 0.0
  %2298 = vmatprep.subr.mxu0 0.0
  %2299 = vmatpush2.msra.mxu0 0.0
  %2300 = vmatprep.subr.mxu0 0.0
  %2301 = vmatpush2.msra.mxu0 0.0
  %2302 = vmatprep.subr.mxu0 0.0
  %2303 = vmatpush2.msra.mxu0 0.0
  %2304 = vmatprep.mubr.f32.mxu0 0.0
  %2305 = vmatmul.mubr.f32.gmra.mxu0 %v2204
  %v2306 = vpop.f32.mrf.mxu0
  %v2307 = vadd.f32 0.0, %v2306
  %v2308 = vpop.f32.mrf.mxu0
  %v2309 = vadd.f32 0.0, %v2308
  %2310 = vmatprep.mubr.f32.mxu0 0.0
  %2311 = vmatmul.mubr.f32.gmra.mxu0 %v2207
  %v2312 = vpop.f32.mrf.mxu0
  %v2313 = vadd.f32 0.0, %v2312
  %v2314 = vpop.f32.mrf.mxu0
  %v2315 = vadd.f32 0.0, %v2314
  %2316 = vmatprep.mubr.f32.mxu0 0.0
  %2317 = vmatmul.mubr.f32.gmra.mxu0 %v2210
  %v2318 = vpop.f32.mrf.mxu0
  %v2319 = vadd.f32 0.0, %v2318
  %v2320 = vpop.f32.mrf.mxu0
  %v2321 = vadd.f32 0.0, %v2320
  %2322 = vmatprep.mubr.f32.mxu0 0.0
  %2323 = vmatmul.mubr.f32.gmra.mxu0 %v2213
  %v2324 = vpop.f32.mrf.mxu0
  %v2325 = vadd.f32 0.0, %v2324
  %v2326 = vpop.f32.mrf.mxu0
  %v2327 = vadd.f32 0.0, %v2326
  %2328 = vmatprep.mubr.f32.mxu0 0.0
  %2329 = vmatmul.mubr.f32.gmra.mxu0 %v2216
  %v2330 = vpop.f32.mrf.mxu0
  %v2331 = vadd.f32 0.0, %v2330
  %v2332 = vpop.f32.mrf.mxu0
  %v2333 = vadd.f32 0.0, %v2332
  %2334 = vmatprep.mubr.f32.mxu0 0.0
  %2335 = vmatmul.mubr.f32.gmra.mxu0 %v2219
  %v2336 = vpop.f32.mrf.mxu0
  %v2337 = vadd.f32 0.0, %v2336
  %v2338 = vpop.f32.mrf.mxu0
  %v2339 = vadd.f32 0.0, %v2338
  %2340 = vmatprep.mubr.f32.mxu0 0.0
  %2341 = vmatmul.mubr.f32.gmra.mxu0 %v2222
  %v2342 = vpop.f32.mrf.mxu0
  %v2343 = vadd.f32 0.0, %v2342
  %v2344 = vpop.f32.mrf.mxu0
  %v2345 = vadd.f32 0.0, %v2344
  %2346 = vmatprep.mubr.f32.mxu0 0.0
  %2347 = vmatmul.mubr.f32.gmra.mxu0 %v2225
  %v2348 = vpop.f32.mrf.mxu0
  %v2349 = vadd.f32 0.0, %v2348
  %v2350 = vpop.f32.mrf.mxu0
  %v2351 = vadd.f32 0.0, %v2350
  %2352 = vmatprep.mubr.f32.mxu0 0.0
  %2353 = vmatmul.mubr.f32.gmra.mxu0 %v2228
  %v2354 = vpop.f32.mrf.mxu0
  %v2355 = vadd.f32 0.0, %v2354
  %v2356 = vpop.f32.mrf.mxu0
  %v2357 = vadd.f32 0.0, %v2356
  %2358 = vmatprep.mubr.f32.mxu0 0.0
  %2359 = vmatmul.mubr.f32.gmra.mxu0 %v2231
  %v2360 = vpop.f32.mrf.mxu0
  %v2361 = vadd.f32 0.0, %v2360
  %v2362 = vpop.f32.mrf.mxu0
  %v2363 = vadd.f32 0.0, %v2362
  %2364 = vdwg.mxu0
  %v2366 = vsel %vm2202, %v2143, 0
  %v2369 = vsel %vm2233, %v2177, 0
  %v2372 = vsel %vm2233, %v2178, 0
  %2374 = vmatprep.subr.mxu0 0.0
  %2375 = vmatpush1.msra.mxu0 0.0
  %2376 = vmatprep.subr.mxu0 0.0
  %2377 = vmatpush1.msra.mxu0 0.0
  %2378 = vmatprep.subr.mxu0 0.0
  %2379 = vmatpush1.msra.mxu0 0.0
  %2380 = vmatprep.subr.mxu0 0.0
  %2381 = vmatpush1.msra.mxu0 0.0
  %2382 = vmatprep.subr.mxu0 0.0
  %2383 = vmatpush1.msra.mxu0 0.0
  %2384 = vmatprep.subr.mxu0 %v2372
  %2385 = vmatpush1.msra.mxu0 %v2369
  %2386 = vmatprep.subr.mxu0 %v2176
  %2387 = vmatpush1.msra.mxu0 %v2175
  %2388 = vmatprep.subr.mxu0 %v2174
  %2389 = vmatpush1.msra.mxu0 %v2173
  %2390 = vmatprep.subr.mxu0 %v2172
  %2391 = vmatpush1.msra.mxu0 %v2171
  %2392 = vmatprep.subr.mxu0 %v2170
  %2393 = vmatpush1.msra.mxu0 %v2169
  %2394 = vmatprep.subr.mxu0 %v2168
  %2395 = vmatpush1.msra.mxu0 %v2167
  %2396 = vmatprep.subr.mxu0 %v2166
  %2397 = vmatpush1.msra.mxu0 %v2165
  %2398 = vmatprep.subr.mxu0 %v2164
  %2399 = vmatpush1.msra.mxu0 %v2163
  %2400 = vmatprep.subr.mxu0 %v2162
  %2401 = vmatpush1.msra.mxu0 %v2161
  %2402 = vmatprep.subr.mxu0 %v2160
  %2403 = vmatpush1.msra.mxu0 %v2159
  %2404 = vmatprep.subr.mxu0 %v2158
  %2405 = vmatpush1.msra.mxu0 %v2157
  %2406 = vmatprep.subr.mxu0 0.0
  %2407 = vmatpush2.msra.mxu0 0.0
  %2408 = vmatprep.subr.mxu0 0.0
  %2409 = vmatpush2.msra.mxu0 0.0
  %2410 = vmatprep.subr.mxu0 0.0
  %2411 = vmatpush2.msra.mxu0 0.0
  %2412 = vmatprep.subr.mxu0 0.0
  %2413 = vmatpush2.msra.mxu0 0.0
  %2414 = vmatprep.subr.mxu0 0.0
  %2415 = vmatpush2.msra.mxu0 0.0
  %2416 = vmatprep.subr.mxu0 0.0
  %2417 = vmatpush2.msra.mxu0 0.0
  %2418 = vmatprep.subr.mxu0 0.0
  %2419 = vmatpush2.msra.mxu0 0.0
  %2420 = vmatprep.subr.mxu0 0.0
  %2421 = vmatpush2.msra.mxu0 0.0
  %2422 = vmatprep.subr.mxu0 0.0
  %2423 = vmatpush2.msra.mxu0 0.0
  %2424 = vmatprep.subr.mxu0 0.0
  %2425 = vmatpush2.msra.mxu0 0.0
  %2426 = vmatprep.subr.mxu0 0.0
  %2427 = vmatpush2.msra.mxu0 0.0
  %2428 = vmatprep.subr.mxu0 0.0
  %2429 = vmatpush2.msra.mxu0 0.0
  %2430 = vmatprep.subr.mxu0 0.0
  %2431 = vmatpush2.msra.mxu0 0.0
  %2432 = vmatprep.subr.mxu0 0.0
  %2433 = vmatpush2.msra.mxu0 0.0
  %2434 = vmatprep.subr.mxu0 0.0
  %2435 = vmatpush2.msra.mxu0 0.0
  %2436 = vmatprep.subr.mxu0 0.0
  %2437 = vmatpush2.msra.mxu0 0.0
  %2438 = vmatprep.mubr.f32.mxu0 0.0
  %2439 = vmatmul.mubr.f32.gmra.mxu0 %v2366
  %v2440 = vpop.f32.mrf.mxu0
  %v2441 = vadd.f32 %v2307, %v2440
  %v2442 = vpop.f32.mrf.mxu0
  %v2443 = vadd.f32 %v2309, %v2442
  %2444 = vmatprep.mubr.f32.mxu0 0.0
  %2445 = vmatmul.mubr.f32.gmra.mxu0 %v2204
  %v2446 = vpop.f32.mrf.mxu0
  %v2447 = vadd.f32 %v2313, %v2446
  %v2448 = vpop.f32.mrf.mxu0
  %v2449 = vadd.f32 %v2315, %v2448
  %2450 = vmatprep.mubr.f32.mxu0 0.0
  %2451 = vmatmul.mubr.f32.gmra.mxu0 %v2207
  %v2452 = vpop.f32.mrf.mxu0
  %v2453 = vadd.f32 %v2319, %v2452
  %v2454 = vpop.f32.mrf.mxu0
  %v2455 = vadd.f32 %v2321, %v2454
  %2456 = vmatprep.mubr.f32.mxu0 0.0
  %2457 = vmatmul.mubr.f32.gmra.mxu0 %v2210
  %v2458 = vpop.f32.mrf.mxu0
  %v2459 = vadd.f32 %v2325, %v2458
  %v2460 = vpop.f32.mrf.mxu0
  %v2461 = vadd.f32 %v2327, %v2460
  %2462 = vmatprep.mubr.f32.mxu0 0.0
  %2463 = vmatmul.mubr.f32.gmra.mxu0 %v2213
  %v2464 = vpop.f32.mrf.mxu0
  %v2465 = vadd.f32 %v2331, %v2464
  %v2466 = vpop.f32.mrf.mxu0
  %v2467 = vadd.f32 %v2333, %v2466
  %2468 = vmatprep.mubr.f32.mxu0 0.0
  %2469 = vmatmul.mubr.f32.gmra.mxu0 %v2216
  %v2470 = vpop.f32.mrf.mxu0
  %v2471 = vadd.f32 %v2337, %v2470
  %v2472 = vpop.f32.mrf.mxu0
  %v2473 = vadd.f32 %v2339, %v2472
  %2474 = vmatprep.mubr.f32.mxu0 0.0
  %2475 = vmatmul.mubr.f32.gmra.mxu0 %v2219
  %v2476 = vpop.f32.mrf.mxu0
  %v2477 = vadd.f32 %v2343, %v2476
  %v2478 = vpop.f32.mrf.mxu0
  %v2479 = vadd.f32 %v2345, %v2478
  %2480 = vmatprep.mubr.f32.mxu0 0.0
  %2481 = vmatmul.mubr.f32.gmra.mxu0 %v2222
  %v2482 = vpop.f32.mrf.mxu0
  %v2483 = vadd.f32 %v2349, %v2482
  %v2484 = vpop.f32.mrf.mxu0
  %v2485 = vadd.f32 %v2351, %v2484
  %2486 = vmatprep.mubr.f32.mxu0 0.0
  %2487 = vmatmul.mubr.f32.gmra.mxu0 %v2225
  %v2488 = vpop.f32.mrf.mxu0
  %v2489 = vadd.f32 %v2355, %v2488
  %v2490 = vpop.f32.mrf.mxu0
  %v2491 = vadd.f32 %v2357, %v2490
  %2492 = vmatprep.mubr.f32.mxu0 0.0
  %2493 = vmatmul.mubr.f32.gmra.mxu0 %v2228
  %v2494 = vpop.f32.mrf.mxu0
  %v2495 = vadd.f32 %v2361, %v2494
  %v2496 = vpop.f32.mrf.mxu0
  %v2497 = vadd.f32 %v2363, %v2496
  %2498 = vdwg.mxu0
  %s2499 = scalar_lea.vmem %s5, 352
  %v2500 = vld [vmem:[%s2499] sm:$0xff]
  %v2501 = vld [vmem:[%s2499 + $0x8] sm:$0xff]
  %v2502 = vld [vmem:[%s2499 + $0x10] sm:$0xff]
  %v2503 = vld [vmem:[%s2499 + $0x18] sm:$0xff]
  %v2504 = vld [vmem:[%s2499 + $0x20] sm:$0xff]
  %v2505 = vld [vmem:[%s2499 + $0x28] sm:$0xff]
  %v2506 = vld [vmem:[%s2499 + $0x30] sm:$0xff]
  %v2507 = vld [vmem:[%s2499 + $0x38] sm:$0xff]
  %v2508 = vld [vmem:[%s2499 + $0x40] sm:$0xff]
  %v2509 = vld [vmem:[%s2499 + $0x48] sm:$0xff]
  %v2510 = vld [vmem:[%s2499 + $0x50] sm:$0xff]
  %v2511 = vld [vmem:[%s2499 + $0x58] sm:$0xff]
  %v2512 = vld [vmem:[%s2499 + $0x60] sm:$0xff]
  %v2513 = vld [vmem:[%s2499 + $0x68] sm:$0xff]
  %v2514 = vld [vmem:[%s2499 + $0x70] sm:$0xff]
  %v2515 = vld [vmem:[%s2499 + $0x78] sm:$0xff]
  %v2516 = vld [vmem:[%s2499 + $0x80] sm:$0xff]
  %v2517 = vld [vmem:[%s2499 + $0x88] sm:$0xff]
  %v2518 = vld [vmem:[%s2499 + $0x90] sm:$0xff]
  %v2519 = vld [vmem:[%s2499 + $0x98] sm:$0xff]
  %v2520 = vld [vmem:[%s2499 + $0xa0] sm:$0xf]
  %v2521 = vld [vmem:[%s2499 + $0xa8] sm:$0xf]
  %v2523 = vsel %vm2202, %v2154, 0
  %v2526 = vsel %vm2233, %v2520, 0
  %v2529 = vsel %vm2233, %v2521, 0
  %2531 = vmatprep.subr.mxu0 0.0
  %2532 = vmatpush1.msra.mxu0 0.0
  %2533 = vmatprep.subr.mxu0 0.0
  %2534 = vmatpush1.msra.mxu0 0.0
  %2535 = vmatprep.subr.mxu0 0.0
  %2536 = vmatpush1.msra.mxu0 0.0
  %2537 = vmatprep.subr.mxu0 0.0
  %2538 = vmatpush1.msra.mxu0 0.0
  %2539 = vmatprep.subr.mxu0 0.0
  %2540 = vmatpush1.msra.mxu0 0.0
  %2541 = vmatprep.subr.mxu0 %v2529
  %2542 = vmatpush1.msra.mxu0 %v2526
  %2543 = vmatprep.subr.mxu0 %v2519
  %2544 = vmatpush1.msra.mxu0 %v2518
  %2545 = vmatprep.subr.mxu0 %v2517
  %2546 = vmatpush1.msra.mxu0 %v2516
  %2547 = vmatprep.subr.mxu0 %v2515
  %2548 = vmatpush1.msra.mxu0 %v2514
  %2549 = vmatprep.subr.mxu0 %v2513
  %2550 = vmatpush1.msra.mxu0 %v2512
  %2551 = vmatprep.subr.mxu0 %v2511
  %2552 = vmatpush1.msra.mxu0 %v2510
  %2553 = vmatprep.subr.mxu0 %v2509
  %2554 = vmatpush1.msra.mxu0 %v2508
  %2555 = vmatprep.subr.mxu0 %v2507
  %2556 = vmatpush1.msra.mxu0 %v2506
  %2557 = vmatprep.subr.mxu0 %v2505
  %2558 = vmatpush1.msra.mxu0 %v2504
  %2559 = vmatprep.subr.mxu0 %v2503
  %2560 = vmatpush1.msra.mxu0 %v2502
  %2561 = vmatprep.subr.mxu0 %v2501
  %2562 = vmatpush1.msra.mxu0 %v2500
  %2563 = vmatprep.subr.mxu0 0.0
  %2564 = vmatpush2.msra.mxu0 0.0
  %2565 = vmatprep.subr.mxu0 0.0
  %2566 = vmatpush2.msra.mxu0 0.0
  %2567 = vmatprep.subr.mxu0 0.0
  %2568 = vmatpush2.msra.mxu0 0.0
  %2569 = vmatprep.subr.mxu0 0.0
  %2570 = vmatpush2.msra.mxu0 0.0
  %2571 = vmatprep.subr.mxu0 0.0
  %2572 = vmatpush2.msra.mxu0 0.0
  %2573 = vmatprep.subr.mxu0 0.0
  %2574 = vmatpush2.msra.mxu0 0.0
  %2575 = vmatprep.subr.mxu0 0.0
  %2576 = vmatpush2.msra.mxu0 0.0
  %2577 = vmatprep.subr.mxu0 0.0
  %2578 = vmatpush2.msra.mxu0 0.0
  %2579 = vmatprep.subr.mxu0 0.0
  %2580 = vmatpush2.msra.mxu0 0.0
  %2581 = vmatprep.subr.mxu0 0.0
  %2582 = vmatpush2.msra.mxu0 0.0
  %2583 = vmatprep.subr.mxu0 0.0
  %2584 = vmatpush2.msra.mxu0 0.0
  %2585 = vmatprep.subr.mxu0 0.0
  %2586 = vmatpush2.msra.mxu0 0.0
  %2587 = vmatprep.subr.mxu0 0.0
  %2588 = vmatpush2.msra.mxu0 0.0
  %2589 = vmatprep.subr.mxu0 0.0
  %2590 = vmatpush2.msra.mxu0 0.0
  %2591 = vmatprep.subr.mxu0 0.0
  %2592 = vmatpush2.msra.mxu0 0.0
  %2593 = vmatprep.subr.mxu0 0.0
  %2594 = vmatpush2.msra.mxu0 0.0
  %2595 = vmatprep.mubr.f32.mxu0 0.0
  %2596 = vmatmul.mubr.f32.gmra.mxu0 %v2207
  %v2597 = vpop.f32.mrf.mxu0
  %v2598 = vadd.f32 0.0, %v2597
  %v2599 = vpop.f32.mrf.mxu0
  %v2600 = vadd.f32 0.0, %v2599
  %2601 = vmatprep.mubr.f32.mxu0 0.0
  %2602 = vmatmul.mubr.f32.gmra.mxu0 %v2210
  %v2603 = vpop.f32.mrf.mxu0
  %v2604 = vadd.f32 0.0, %v2603
  %v2605 = vpop.f32.mrf.mxu0
  %v2606 = vadd.f32 0.0, %v2605
  %2607 = vmatprep.mubr.f32.mxu0 0.0
  %2608 = vmatmul.mubr.f32.gmra.mxu0 %v2213
  %v2609 = vpop.f32.mrf.mxu0
  %v2610 = vadd.f32 0.0, %v2609
  %v2611 = vpop.f32.mrf.mxu0
  %v2612 = vadd.f32 0.0, %v2611
  %2613 = vmatprep.mubr.f32.mxu0 0.0
  %2614 = vmatmul.mubr.f32.gmra.mxu0 %v2216
  %v2615 = vpop.f32.mrf.mxu0
  %v2616 = vadd.f32 0.0, %v2615
  %v2617 = vpop.f32.mrf.mxu0
  %v2618 = vadd.f32 0.0, %v2617
  %2619 = vmatprep.mubr.f32.mxu0 0.0
  %2620 = vmatmul.mubr.f32.gmra.mxu0 %v2219
  %v2621 = vpop.f32.mrf.mxu0
  %v2622 = vadd.f32 0.0, %v2621
  %v2623 = vpop.f32.mrf.mxu0
  %v2624 = vadd.f32 0.0, %v2623
  %2625 = vmatprep.mubr.f32.mxu0 0.0
  %2626 = vmatmul.mubr.f32.gmra.mxu0 %v2222
  %v2627 = vpop.f32.mrf.mxu0
  %v2628 = vadd.f32 0.0, %v2627
  %v2629 = vpop.f32.mrf.mxu0
  %v2630 = vadd.f32 0.0, %v2629
  %2631 = vmatprep.mubr.f32.mxu0 0.0
  %2632 = vmatmul.mubr.f32.gmra.mxu0 %v2225
  %v2633 = vpop.f32.mrf.mxu0
  %v2634 = vadd.f32 0.0, %v2633
  %v2635 = vpop.f32.mrf.mxu0
  %v2636 = vadd.f32 0.0, %v2635
  %2637 = vmatprep.mubr.f32.mxu0 0.0
  %2638 = vmatmul.mubr.f32.gmra.mxu0 %v2228
  %v2639 = vpop.f32.mrf.mxu0
  %v2640 = vadd.f32 0.0, %v2639
  %v2641 = vpop.f32.mrf.mxu0
  %v2642 = vadd.f32 0.0, %v2641
  %2643 = vmatprep.mubr.f32.mxu0 0.0
  %2644 = vmatmul.mubr.f32.gmra.mxu0 %v2231
  %v2645 = vpop.f32.mrf.mxu0
  %v2646 = vadd.f32 0.0, %v2645
  %v2647 = vpop.f32.mrf.mxu0
  %v2648 = vadd.f32 0.0, %v2647
  %2649 = vmatprep.mubr.f32.mxu0 0.0
  %2650 = vmatmul.mubr.f32.gmra.mxu0 %v2523
  %v2651 = vpop.f32.mrf.mxu0
  %v2652 = vadd.f32 0.0, %v2651
  %v2653 = vpop.f32.mrf.mxu0
  %v2654 = vadd.f32 0.0, %v2653
  %2655 = vdwg.mxu0
  %v2656 = vadd.f32 %v2441, %v2598
  %v2657 = vadd.f32 %v2443, %v2600
  %v2658 = vadd.f32 %v2447, %v2604
  %v2659 = vadd.f32 %v2449, %v2606
  %v2660 = vadd.f32 %v2453, %v2610
  %v2661 = vadd.f32 %v2455, %v2612
  %v2662 = vadd.f32 %v2459, %v2616
  %v2663 = vadd.f32 %v2461, %v2618
  %v2664 = vadd.f32 %v2465, %v2622
  %v2665 = vadd.f32 %v2467, %v2624
  %v2666 = vadd.f32 %v2471, %v2628
  %v2667 = vadd.f32 %v2473, %v2630
  %v2668 = vadd.f32 %v2477, %v2634
  %v2669 = vadd.f32 %v2479, %v2636
  %v2670 = vadd.f32 %v2483, %v2640
  %v2671 = vadd.f32 %v2485, %v2642
  %v2672 = vadd.f32 %v2489, %v2646
  %v2673 = vadd.f32 %v2491, %v2648
  %v2674 = vadd.f32 %v2495, %v2652
  %v2675 = vadd.f32 %v2497, %v2654
  %s2676 = scalar_lea.vmem %s5, 528
  %v2677 = vld [vmem:[%s2676] sm:$0xff]
  %v2678 = vld [vmem:[%s2676 + $0x8] sm:$0xff]
  %v2679 = vld [vmem:[%s2676 + $0x10] sm:$0xff]
  %v2680 = vld [vmem:[%s2676 + $0x18] sm:$0xff]
  %v2681 = vld [vmem:[%s2676 + $0x20] sm:$0xff]
  %v2682 = vld [vmem:[%s2676 + $0x28] sm:$0xff]
  %v2683 = vld [vmem:[%s2676 + $0x30] sm:$0xff]
  %v2684 = vld [vmem:[%s2676 + $0x38] sm:$0xff]
  %v2685 = vld [vmem:[%s2676 + $0x40] sm:$0xff]
  %v2686 = vld [vmem:[%s2676 + $0x48] sm:$0xff]
  %v2687 = vld [vmem:[%s2676 + $0x50] sm:$0xff]
  %v2688 = vld [vmem:[%s2676 + $0x58] sm:$0xff]
  %v2689 = vld [vmem:[%s2676 + $0x60] sm:$0xff]
  %v2690 = vld [vmem:[%s2676 + $0x68] sm:$0xff]
  %v2691 = vld [vmem:[%s2676 + $0x70] sm:$0xff]
  %v2692 = vld [vmem:[%s2676 + $0x78] sm:$0xff]
  %v2693 = vld [vmem:[%s2676 + $0x80] sm:$0xff]
  %v2694 = vld [vmem:[%s2676 + $0x88] sm:$0xff]
  %v2695 = vld [vmem:[%s2676 + $0x90] sm:$0xff]
  %v2696 = vld [vmem:[%s2676 + $0x98] sm:$0xff]
  %v2697 = vld [vmem:[%s2676 + $0xa0] sm:$0xf]
  %v2698 = vld [vmem:[%s2676 + $0xa8] sm:$0xf]
  %v2700 = vsel %vm2202, %v2155, 0
  %v2703 = vsel %vm2233, %v2697, 0
  %v2706 = vsel %vm2233, %v2698, 0
  %2708 = vmatprep.subr.mxu0 0.0
  %2709 = vmatpush1.msra.mxu0 0.0
  %2710 = vmatprep.subr.mxu0 0.0
  %2711 = vmatpush1.msra.mxu0 0.0
  %2712 = vmatprep.subr.mxu0 0.0
  %2713 = vmatpush1.msra.mxu0 0.0
  %2714 = vmatprep.subr.mxu0 0.0
  %2715 = vmatpush1.msra.mxu0 0.0
  %2716 = vmatprep.subr.mxu0 0.0
  %2717 = vmatpush1.msra.mxu0 0.0
  %2718 = vmatprep.subr.mxu0 %v2706
  %2719 = vmatpush1.msra.mxu0 %v2703
  %2720 = vmatprep.subr.mxu0 %v2696
  %2721 = vmatpush1.msra.mxu0 %v2695
  %2722 = vmatprep.subr.mxu0 %v2694
  %2723 = vmatpush1.msra.mxu0 %v2693
  %2724 = vmatprep.subr.mxu0 %v2692
  %2725 = vmatpush1.msra.mxu0 %v2691
  %2726 = vmatprep.subr.mxu0 %v2690
  %2727 = vmatpush1.msra.mxu0 %v2689
  %2728 = vmatprep.subr.mxu0 %v2688
  %2729 = vmatpush1.msra.mxu0 %v2687
  %2730 = vmatprep.subr.mxu0 %v2686
  %2731 = vmatpush1.msra.mxu0 %v2685
  %2732 = vmatprep.subr.mxu0 %v2684
  %2733 = vmatpush1.msra.mxu0 %v2683
  %2734 = vmatprep.subr.mxu0 %v2682
  %2735 = vmatpush1.msra.mxu0 %v2681
  %2736 = vmatprep.subr.mxu0 %v2680
  %2737 = vmatpush1.msra.mxu0 %v2679
  %2738 = vmatprep.subr.mxu0 %v2678
  %2739 = vmatpush1.msra.mxu0 %v2677
  %2740 = vmatprep.subr.mxu0 0.0
  %2741 = vmatpush2.msra.mxu0 0.0
  %2742 = vmatprep.subr.mxu0 0.0
  %2743 = vmatpush2.msra.mxu0 0.0
  %2744 = vmatprep.subr.mxu0 0.0
  %2745 = vmatpush2.msra.mxu0 0.0
  %2746 = vmatprep.subr.mxu0 0.0
  %2747 = vmatpush2.msra.mxu0 0.0
  %2748 = vmatprep.subr.mxu0 0.0
  %2749 = vmatpush2.msra.mxu0 0.0
  %2750 = vmatprep.subr.mxu0 0.0
  %2751 = vmatpush2.msra.mxu0 0.0
  %2752 = vmatprep.subr.mxu0 0.0
  %2753 = vmatpush2.msra.mxu0 0.0
  %2754 = vmatprep.subr.mxu0 0.0
  %2755 = vmatpush2.msra.mxu0 0.0
  %2756 = vmatprep.subr.mxu0 0.0
  %2757 = vmatpush2.msra.mxu0 0.0
  %2758 = vmatprep.subr.mxu0 0.0
  %2759 = vmatpush2.msra.mxu0 0.0
  %2760 = vmatprep.subr.mxu0 0.0
  %2761 = vmatpush2.msra.mxu0 0.0
  %2762 = vmatprep.subr.mxu0 0.0
  %2763 = vmatpush2.msra.mxu0 0.0
  %2764 = vmatprep.subr.mxu0 0.0
  %2765 = vmatpush2.msra.mxu0 0.0
  %2766 = vmatprep.subr.mxu0 0.0
  %2767 = vmatpush2.msra.mxu0 0.0
  %2768 = vmatprep.subr.mxu0 0.0
  %2769 = vmatpush2.msra.mxu0 0.0
  %2770 = vmatprep.subr.mxu0 0.0
  %2771 = vmatpush2.msra.mxu0 0.0
  %2772 = vmatprep.mubr.f32.mxu0 0.0
  %2773 = vmatmul.mubr.f32.gmra.mxu0 %v2210
  %v2774 = vpop.f32.mrf.mxu0
  %v2775 = vadd.f32 0.0, %v2774
  %v2776 = vpop.f32.mrf.mxu0
  %v2777 = vadd.f32 0.0, %v2776
  %2778 = vmatprep.mubr.f32.mxu0 0.0
  %2779 = vmatmul.mubr.f32.gmra.mxu0 %v2213
  %v2780 = vpop.f32.mrf.mxu0
  %v2781 = vadd.f32 0.0, %v2780
  %v2782 = vpop.f32.mrf.mxu0
  %v2783 = vadd.f32 0.0, %v2782
  %2784 = vmatprep.mubr.f32.mxu0 0.0
  %2785 = vmatmul.mubr.f32.gmra.mxu0 %v2216
  %v2786 = vpop.f32.mrf.mxu0
  %v2787 = vadd.f32 0.0, %v2786
  %v2788 = vpop.f32.mrf.mxu0
  %v2789 = vadd.f32 0.0, %v2788
  %2790 = vmatprep.mubr.f32.mxu0 0.0
  %2791 = vmatmul.mubr.f32.gmra.mxu0 %v2219
  %v2792 = vpop.f32.mrf.mxu0
  %v2793 = vadd.f32 0.0, %v2792
  %v2794 = vpop.f32.mrf.mxu0
  %v2795 = vadd.f32 0.0, %v2794
  %2796 = vmatprep.mubr.f32.mxu0 0.0
  %2797 = vmatmul.mubr.f32.gmra.mxu0 %v2222
  %v2798 = vpop.f32.mrf.mxu0
  %v2799 = vadd.f32 0.0, %v2798
  %v2800 = vpop.f32.mrf.mxu0
  %v2801 = vadd.f32 0.0, %v2800
  %2802 = vmatprep.mubr.f32.mxu0 0.0
  %2803 = vmatmul.mubr.f32.gmra.mxu0 %v2225
  %v2804 = vpop.f32.mrf.mxu0
  %v2805 = vadd.f32 0.0, %v2804
  %v2806 = vpop.f32.mrf.mxu0
  %v2807 = vadd.f32 0.0, %v2806
  %2808 = vmatprep.mubr.f32.mxu0 0.0
  %2809 = vmatmul.mubr.f32.gmra.mxu0 %v2228
  %v2810 = vpop.f32.mrf.mxu0
  %v2811 = vadd.f32 0.0, %v2810
  %v2812 = vpop.f32.mrf.mxu0
  %v2813 = vadd.f32 0.0, %v2812
  %2814 = vmatprep.mubr.f32.mxu0 0.0
  %2815 = vmatmul.mubr.f32.gmra.mxu0 %v2231
  %v2816 = vpop.f32.mrf.mxu0
  %v2817 = vadd.f32 0.0, %v2816
  %v2818 = vpop.f32.mrf.mxu0
  %v2819 = vadd.f32 0.0, %v2818
  %2820 = vmatprep.mubr.f32.mxu0 0.0
  %2821 = vmatmul.mubr.f32.gmra.mxu0 %v2523
  %v2822 = vpop.f32.mrf.mxu0
  %v2823 = vadd.f32 0.0, %v2822
  %v2824 = vpop.f32.mrf.mxu0
  %v2825 = vadd.f32 0.0, %v2824
  %2826 = vmatprep.mubr.f32.mxu0 0.0
  %2827 = vmatmul.mubr.f32.gmra.mxu0 %v2700
  %v2828 = vpop.f32.mrf.mxu0
  %v2829 = vadd.f32 0.0, %v2828
  %v2830 = vpop.f32.mrf.mxu0
  %v2831 = vadd.f32 0.0, %v2830
  %2832 = vdwg.mxu0
  %v2833 = vadd.f32 %v2656, %v2775
  %v2834 = vadd.f32 %v2657, %v2777
  %v2835 = vadd.f32 %v2658, %v2781
  %v2836 = vadd.f32 %v2659, %v2783
  %v2837 = vadd.f32 %v2660, %v2787
  %v2838 = vadd.f32 %v2661, %v2789
  %v2839 = vadd.f32 %v2662, %v2793
  %v2840 = vadd.f32 %v2663, %v2795
  %v2841 = vadd.f32 %v2664, %v2799
  %v2842 = vadd.f32 %v2665, %v2801
  %v2843 = vadd.f32 %v2666, %v2805
  %v2844 = vadd.f32 %v2667, %v2807
  %v2845 = vadd.f32 %v2668, %v2811
  %v2846 = vadd.f32 %v2669, %v2813
  %v2847 = vadd.f32 %v2670, %v2817
  %v2848 = vadd.f32 %v2671, %v2819
  %v2849 = vadd.f32 %v2672, %v2823
  %v2850 = vadd.f32 %v2673, %v2825
  %v2851 = vadd.f32 %v2674, %v2829
  %v2852 = vadd.f32 %v2675, %v2831
  %s2853 = scalar_lea.vmem %s5, 704
  %v2854 = vld [vmem:[%s2853] sm:$0xff]
  %v2855 = vld [vmem:[%s2853 + $0x8] sm:$0xff]
  %v2856 = vld [vmem:[%s2853 + $0x10] sm:$0xff]
  %v2857 = vld [vmem:[%s2853 + $0x18] sm:$0xff]
  %v2858 = vld [vmem:[%s2853 + $0x20] sm:$0xff]
  %v2859 = vld [vmem:[%s2853 + $0x28] sm:$0xff]
  %v2860 = vld [vmem:[%s2853 + $0x30] sm:$0xff]
  %v2861 = vld [vmem:[%s2853 + $0x38] sm:$0xff]
  %v2862 = vld [vmem:[%s2853 + $0x40] sm:$0xff]
  %v2863 = vld [vmem:[%s2853 + $0x48] sm:$0xff]
  %v2864 = vld [vmem:[%s2853 + $0x50] sm:$0xff]
  %v2865 = vld [vmem:[%s2853 + $0x58] sm:$0xff]
  %v2866 = vld [vmem:[%s2853 + $0x60] sm:$0xff]
  %v2867 = vld [vmem:[%s2853 + $0x68] sm:$0xff]
  %v2868 = vld [vmem:[%s2853 + $0x70] sm:$0xff]
  %v2869 = vld [vmem:[%s2853 + $0x78] sm:$0xff]
  %v2870 = vld [vmem:[%s2853 + $0x80] sm:$0xff]
  %v2871 = vld [vmem:[%s2853 + $0x88] sm:$0xff]
  %v2872 = vld [vmem:[%s2853 + $0x90] sm:$0xff]
  %v2873 = vld [vmem:[%s2853 + $0x98] sm:$0xff]
  %v2874 = vld [vmem:[%s2853 + $0xa0] sm:$0xf]
  %v2875 = vld [vmem:[%s2853 + $0xa8] sm:$0xf]
  %v2877 = vsel %vm2202, %v2156, 0
  %v2880 = vsel %vm2233, %v2874, 0
  %v2883 = vsel %vm2233, %v2875, 0
  %2885 = vmatprep.subr.mxu0 0.0
  %2886 = vmatpush1.msra.mxu0 0.0
  %2887 = vmatprep.subr.mxu0 0.0
  %2888 = vmatpush1.msra.mxu0 0.0
  %2889 = vmatprep.subr.mxu0 0.0
  %2890 = vmatpush1.msra.mxu0 0.0
  %2891 = vmatprep.subr.mxu0 0.0
  %2892 = vmatpush1.msra.mxu0 0.0
  %2893 = vmatprep.subr.mxu0 0.0
  %2894 = vmatpush1.msra.mxu0 0.0
  %2895 = vmatprep.subr.mxu0 %v2883
  %2896 = vmatpush1.msra.mxu0 %v2880
  %2897 = vmatprep.subr.mxu0 %v2873
  %2898 = vmatpush1.msra.mxu0 %v2872
  %2899 = vmatprep.subr.mxu0 %v2871
  %2900 = vmatpush1.msra.mxu0 %v2870
  %2901 = vmatprep.subr.mxu0 %v2869
  %2902 = vmatpush1.msra.mxu0 %v2868
  %2903 = vmatprep.subr.mxu0 %v2867
  %2904 = vmatpush1.msra.mxu0 %v2866
  %2905 = vmatprep.subr.mxu0 %v2865
  %2906 = vmatpush1.msra.mxu0 %v2864
  %2907 = vmatprep.subr.mxu0 %v2863
  %2908 = vmatpush1.msra.mxu0 %v2862
  %2909 = vmatprep.subr.mxu0 %v2861
  %2910 = vmatpush1.msra.mxu0 %v2860
  %2911 = vmatprep.subr.mxu0 %v2859
  %2912 = vmatpush1.msra.mxu0 %v2858
  %2913 = vmatprep.subr.mxu0 %v2857
  %2914 = vmatpush1.msra.mxu0 %v2856
  %2915 = vmatprep.subr.mxu0 %v2855
  %2916 = vmatpush1.msra.mxu0 %v2854
  %2917 = vmatprep.subr.mxu0 0.0
  %2918 = vmatpush2.msra.mxu0 0.0
  %2919 = vmatprep.subr.mxu0 0.0
  %2920 = vmatpush2.msra.mxu0 0.0
  %2921 = vmatprep.subr.mxu0 0.0
  %2922 = vmatpush2.msra.mxu0 0.0
  %2923 = vmatprep.subr.mxu0 0.0
  %2924 = vmatpush2.msra.mxu0 0.0
  %2925 = vmatprep.subr.mxu0 0.0
  %2926 = vmatpush2.msra.mxu0 0.0
  %2927 = vmatprep.subr.mxu0 0.0
  %2928 = vmatpush2.msra.mxu0 0.0
  %2929 = vmatprep.subr.mxu0 0.0
  %2930 = vmatpush2.msra.mxu0 0.0
  %2931 = vmatprep.subr.mxu0 0.0
  %2932 = vmatpush2.msra.mxu0 0.0
  %2933 = vmatprep.subr.mxu0 0.0
  %2934 = vmatpush2.msra.mxu0 0.0
  %2935 = vmatprep.subr.mxu0 0.0
  %2936 = vmatpush2.msra.mxu0 0.0
  %2937 = vmatprep.subr.mxu0 0.0
  %2938 = vmatpush2.msra.mxu0 0.0
  %2939 = vmatprep.subr.mxu0 0.0
  %2940 = vmatpush2.msra.mxu0 0.0
  %2941 = vmatprep.subr.mxu0 0.0
  %2942 = vmatpush2.msra.mxu0 0.0
  %2943 = vmatprep.subr.mxu0 0.0
  %2944 = vmatpush2.msra.mxu0 0.0
  %2945 = vmatprep.subr.mxu0 0.0
  %2946 = vmatpush2.msra.mxu0 0.0
  %2947 = vmatprep.subr.mxu0 0.0
  %2948 = vmatpush2.msra.mxu0 0.0
  %2949 = vmatprep.mubr.f32.mxu0 0.0
  %2950 = vmatmul.mubr.f32.gmra.mxu0 %v2213
  %v2951 = vpop.f32.mrf.mxu0
  %v2952 = vadd.f32 0.0, %v2951
  %v2953 = vpop.f32.mrf.mxu0
  %v2954 = vadd.f32 0.0, %v2953
  %2955 = vmatprep.mubr.f32.mxu0 0.0
  %2956 = vmatmul.mubr.f32.gmra.mxu0 %v2216
  %v2957 = vpop.f32.mrf.mxu0
  %v2958 = vadd.f32 0.0, %v2957
  %v2959 = vpop.f32.mrf.mxu0
  %v2960 = vadd.f32 0.0, %v2959
  %2961 = vmatprep.mubr.f32.mxu0 0.0
  %2962 = vmatmul.mubr.f32.gmra.mxu0 %v2219
  %v2963 = vpop.f32.mrf.mxu0
  %v2964 = vadd.f32 0.0, %v2963
  %v2965 = vpop.f32.mrf.mxu0
  %v2966 = vadd.f32 0.0, %v2965
  %2967 = vmatprep.mubr.f32.mxu0 0.0
  %2968 = vmatmul.mubr.f32.gmra.mxu0 %v2222
  %v2969 = vpop.f32.mrf.mxu0
  %v2970 = vadd.f32 0.0, %v2969
  %v2971 = vpop.f32.mrf.mxu0
  %v2972 = vadd.f32 0.0, %v2971
  %2973 = vmatprep.mubr.f32.mxu0 0.0
  %2974 = vmatmul.mubr.f32.gmra.mxu0 %v2225
  %v2975 = vpop.f32.mrf.mxu0
  %v2976 = vadd.f32 0.0, %v2975
  %v2977 = vpop.f32.mrf.mxu0
  %v2978 = vadd.f32 0.0, %v2977
  %2979 = vmatprep.mubr.f32.mxu0 0.0
  %2980 = vmatmul.mubr.f32.gmra.mxu0 %v2228
  %v2981 = vpop.f32.mrf.mxu0
  %v2982 = vadd.f32 0.0, %v2981
  %v2983 = vpop.f32.mrf.mxu0
  %v2984 = vadd.f32 0.0, %v2983
  %2985 = vmatprep.mubr.f32.mxu0 0.0
  %2986 = vmatmul.mubr.f32.gmra.mxu0 %v2231
  %v2987 = vpop.f32.mrf.mxu0
  %v2988 = vadd.f32 0.0, %v2987
  %v2989 = vpop.f32.mrf.mxu0
  %v2990 = vadd.f32 0.0, %v2989
  %2991 = vmatprep.mubr.f32.mxu0 0.0
  %2992 = vmatmul.mubr.f32.gmra.mxu0 %v2523
  %v2993 = vpop.f32.mrf.mxu0
  %v2994 = vadd.f32 0.0, %v2993
  %v2995 = vpop.f32.mrf.mxu0
  %v2996 = vadd.f32 0.0, %v2995
  %2997 = vmatprep.mubr.f32.mxu0 0.0
  %2998 = vmatmul.mubr.f32.gmra.mxu0 %v2700
  %v2999 = vpop.f32.mrf.mxu0
  %v3000 = vadd.f32 0.0, %v2999
  %v3001 = vpop.f32.mrf.mxu0
  %v3002 = vadd.f32 0.0, %v3001
  %3003 = vmatprep.mubr.f32.mxu0 0.0
  %3004 = vmatmul.mubr.f32.gmra.mxu0 %v2877
  %v3005 = vpop.f32.mrf.mxu0
  %v3006 = vadd.f32 0.0, %v3005
  %v3007 = vpop.f32.mrf.mxu0
  %v3008 = vadd.f32 0.0, %v3007
  %3009 = vdwg.mxu0
  %v3010 = vadd.f32 %v2833, %v2952
  %v3011 = vadd.f32 %v2834, %v2954
  %v3012 = vadd.f32 %v2835, %v2958
  %v3013 = vadd.f32 %v2836, %v2960
  %v3014 = vadd.f32 %v2837, %v2964
  %v3015 = vadd.f32 %v2838, %v2966
  %v3016 = vadd.f32 %v2839, %v2970
  %v3017 = vadd.f32 %v2840, %v2972
  %v3018 = vadd.f32 %v2841, %v2976
  %v3019 = vadd.f32 %v2842, %v2978
  %v3020 = vadd.f32 %v2843, %v2982
  %v3021 = vadd.f32 %v2844, %v2984
  %v3022 = vadd.f32 %v2845, %v2988
  %v3023 = vadd.f32 %v2846, %v2990
  %v3024 = vadd.f32 %v2847, %v2994
  %v3025 = vadd.f32 %v2848, %v2996
  %v3026 = vadd.f32 %v2849, %v3000
  %v3027 = vadd.f32 %v2850, %v3002
  %v3028 = vadd.f32 %v2851, %v3006
  %v3029 = vadd.f32 %v2852, %v3008
  %v3030 = vld [vmem:[%s6] sm:$0x3]
  %v3032 = vlaneseq
  %v3033 = vshrl.u32 %v3032, 7
  %v3034 = vsub.s32 0, %v3033
  %v3035 = vrot.slane %v3030, %v3034
  %v3036 = vlaneseq
  %v3037 = vshrl.u32 %v3036, 7
  %v3038 = vsub.s32 1, %v3037
  %v3039 = vrot.slane %v3030, %v3038
  %v3042 = vadd.f32 %v3010, %v3035
  %v3043 = vadd.f32 %v3011, %v3039
  %v3044 = vadd.f32 %v3012, %v3035
  %v3045 = vadd.f32 %v3013, %v3039
  %v3046 = vadd.f32 %v3014, %v3035
  %v3047 = vadd.f32 %v3015, %v3039
  %v3048 = vadd.f32 %v3016, %v3035
  %v3049 = vadd.f32 %v3017, %v3039
  %v3050 = vadd.f32 %v3018, %v3035
  %v3051 = vadd.f32 %v3019, %v3039
  %v3052 = vadd.f32 %v3020, %v3035
  %v3053 = vadd.f32 %v3021, %v3039
  %v3054 = vadd.f32 %v3022, %v3035
  %v3055 = vadd.f32 %v3023, %v3039
  %v3056 = vadd.f32 %v3024, %v3035
  %v3057 = vadd.f32 %v3025, %v3039
  %v3058 = vadd.f32 %v3026, %v3035
  %v3059 = vadd.f32 %v3027, %v3039
  %v3060 = vadd.f32 %v3028, %v3035
  %v3061 = vadd.f32 %v3029, %v3039
  %v3062 = vmax.f32 %v3042, 0.0
  %v3063 = vmax.f32 %v3043, 0.0
  %v3064 = vmax.f32 %v3044, 0.0
  %v3065 = vmax.f32 %v3045, 0.0
  %v3066 = vmax.f32 %v3046, 0.0
  %v3067 = vmax.f32 %v3047, 0.0
  %v3068 = vmax.f32 %v3048, 0.0
  %v3069 = vmax.f32 %v3049, 0.0
  %v3070 = vmax.f32 %v3050, 0.0
  %v3071 = vmax.f32 %v3051, 0.0
  %v3072 = vmax.f32 %v3052, 0.0
  %v3073 = vmax.f32 %v3053, 0.0
  %v3074 = vmax.f32 %v3054, 0.0
  %v3075 = vmax.f32 %v3055, 0.0
  %v3076 = vmax.f32 %v3056, 0.0
  %v3077 = vmax.f32 %v3057, 0.0
  %v3078 = vmax.f32 %v3058, 0.0
  %v3079 = vmax.f32 %v3059, 0.0
  %v3080 = vmax.f32 %v3060, 0.0
  %v3081 = vmax.f32 %v3061, 0.0
  %v3082 = vmax.f32 %v3062, %v3064
  %v3083 = vmax.f32 %v3063, %v3065
  %v3084 = vmax.f32 %v3066, %v3068
  %v3085 = vmax.f32 %v3067, %v3069
  %v3086 = vmax.f32 %v3070, %v3072
  %v3087 = vmax.f32 %v3071, %v3073
  %v3088 = vmax.f32 %v3074, %v3076
  %v3089 = vmax.f32 %v3075, %v3077
  %v3090 = vmax.f32 %v3078, %v3080
  %v3091 = vmax.f32 %v3079, %v3081
  %v3092 = vld [vmem:[%s7] sm:$0xff]
  %v3093 = vld [vmem:[%s7 + $0x8] sm:$0xff]
  %v3094 = vld [vmem:[%s7 + $0x10] sm:$0xff]
  %v3095 = vld [vmem:[%s7 + $0x18] sm:$0xff]
  %v3096 = vld [vmem:[%s7 + $0x20] sm:$0xff]
  %v3097 = vld [vmem:[%s7 + $0x28] sm:$0xff]
  %v3098 = vld [vmem:[%s7 + $0x30] sm:$0xff]
  %v3099 = vld [vmem:[%s7 + $0x38] sm:$0xff]
  %v3100 = vld [vmem:[%s7 + $0x40] sm:$0xff]
  %v3101 = vld [vmem:[%s7 + $0x48] sm:$0xff]
  %v3102 = vld [vmem:[%s7 + $0x50] sm:$0xff]
  %v3103 = vld [vmem:[%s7 + $0x58] sm:$0xff]
  %v3104 = vld [vmem:[%s7 + $0x60] sm:$0xff]
  %v3105 = vld [vmem:[%s7 + $0x68] sm:$0xff]
  %v3106 = vld [vmem:[%s7 + $0x70] sm:$0xff]
  %v3107 = vld [vmem:[%s7 + $0x78] sm:$0xff]
  %v3108 = vld [vmem:[%s7 + $0x80] sm:$0xff]
  %v3109 = vld [vmem:[%s7 + $0x88] sm:$0xff]
  %v3110 = vld [vmem:[%s7 + $0x90] sm:$0xff]
  %v3111 = vld [vmem:[%s7 + $0x98] sm:$0xff]
  %vm3112 = vcmask 261120
  %v3114 = vsel %vm3112, %v3083, 0
  %v3117 = vsel %vm3112, %v3085, 0
  %v3120 = vsel %vm3112, %v3087, 0
  %v3123 = vsel %vm3112, %v3089, 0
  %v3126 = vsel %vm3112, %v3091, 0
  %3128 = vmatprep.subr.mxu0 0.0
  %3129 = vmatpush1.msra.mxu0 %v3107
  %3130 = vmatprep.subr.mxu0 0.0
  %3131 = vmatpush1.msra.mxu0 %v3106
  %3132 = vmatprep.subr.mxu0 0.0
  %3133 = vmatpush1.msra.mxu0 %v3105
  %3134 = vmatprep.subr.mxu0 0.0
  %3135 = vmatpush1.msra.mxu0 %v3104
  %3136 = vmatprep.subr.mxu0 0.0
  %3137 = vmatpush1.msra.mxu0 %v3103
  %3138 = vmatprep.subr.mxu0 0.0
  %3139 = vmatpush1.msra.mxu0 %v3102
  %3140 = vmatprep.subr.mxu0 0.0
  %3141 = vmatpush1.msra.mxu0 %v3101
  %3142 = vmatprep.subr.mxu0 0.0
  %3143 = vmatpush1.msra.mxu0 %v3100
  %3144 = vmatprep.subr.mxu0 0.0
  %3145 = vmatpush1.msra.mxu0 %v3099
  %3146 = vmatprep.subr.mxu0 0.0
  %3147 = vmatpush1.msra.mxu0 %v3098
  %3148 = vmatprep.subr.mxu0 0.0
  %3149 = vmatpush1.msra.mxu0 %v3097
  %3150 = vmatprep.subr.mxu0 0.0
  %3151 = vmatpush1.msra.mxu0 %v3096
  %3152 = vmatprep.subr.mxu0 0.0
  %3153 = vmatpush1.msra.mxu0 %v3095
  %3154 = vmatprep.subr.mxu0 0.0
  %3155 = vmatpush1.msra.mxu0 %v3094
  %3156 = vmatprep.subr.mxu0 0.0
  %3157 = vmatpush1.msra.mxu0 %v3093
  %3158 = vmatprep.subr.mxu0 0.0
  %3159 = vmatpush1.msra.mxu0 %v3092
  %3160 = vmatprep.subr.mxu0 0.0
  %3161 = vmatpush2.msra.mxu0 0.0
  %3162 = vmatprep.subr.mxu0 0.0
  %3163 = vmatpush2.msra.mxu0 0.0
  %3164 = vmatprep.subr.mxu0 0.0
  %3165 = vmatpush2.msra.mxu0 0.0
  %3166 = vmatprep.subr.mxu0 0.0
  %3167 = vmatpush2.msra.mxu0 0.0
  %3168 = vmatprep.subr.mxu0 0.0
  %3169 = vmatpush2.msra.mxu0 0.0
  %3170 = vmatprep.subr.mxu0 0.0
  %3171 = vmatpush2.msra.mxu0 0.0
  %3172 = vmatprep.subr.mxu0 0.0
  %3173 = vmatpush2.msra.mxu0 0.0
  %3174 = vmatprep.subr.mxu0 0.0
  %3175 = vmatpush2.msra.mxu0 0.0
  %3176 = vmatprep.subr.mxu0 0.0
  %3177 = vmatpush2.msra.mxu0 0.0
  %3178 = vmatprep.subr.mxu0 0.0
  %3179 = vmatpush2.msra.mxu0 0.0
  %3180 = vmatprep.subr.mxu0 0.0
  %3181 = vmatpush2.msra.mxu0 0.0
  %3182 = vmatprep.subr.mxu0 0.0
  %3183 = vmatpush2.msra.mxu0 0.0
  %3184 = vmatprep.subr.mxu0 0.0
  %3185 = vmatpush2.msra.mxu0 %v3111
  %3186 = vmatprep.subr.mxu0 0.0
  %3187 = vmatpush2.msra.mxu0 %v3110
  %3188 = vmatprep.subr.mxu0 0.0
  %3189 = vmatpush2.msra.mxu0 %v3109
  %3190 = vmatprep.subr.mxu0 0.0
  %3191 = vmatpush2.msra.mxu0 %v3108
  %3192 = vmatprep.mubr.f32.mxu0 %v3114
  %3193 = vmatmul.mubr.f32.gmra.mxu0 %v3082
  %v3194 = vpop.f32.mrf.mxu0
  %v3195 = vadd.f32 0.0, %v3194
  %v3196 = vpop.f32.mrf.mxu0
  %3197 = vmatprep.mubr.f32.mxu0 %v3117
  %3198 = vmatmul.mubr.f32.gmra.mxu0 %v3084
  %v3199 = vpop.f32.mrf.mxu0
  %v3200 = vadd.f32 0.0, %v3199
  %v3201 = vpop.f32.mrf.mxu0
  %3202 = vmatprep.mubr.f32.mxu0 %v3120
  %3203 = vmatmul.mubr.f32.gmra.mxu0 %v3086
  %v3204 = vpop.f32.mrf.mxu0
  %v3205 = vadd.f32 0.0, %v3204
  %v3206 = vpop.f32.mrf.mxu0
  %3207 = vmatprep.mubr.f32.mxu0 %v3123
  %3208 = vmatmul.mubr.f32.gmra.mxu0 %v3088
  %v3209 = vpop.f32.mrf.mxu0
  %v3210 = vadd.f32 0.0, %v3209
  %v3211 = vpop.f32.mrf.mxu0
  %3212 = vmatprep.mubr.f32.mxu0 %v3126
  %3213 = vmatmul.mubr.f32.gmra.mxu0 %v3090
  %v3214 = vpop.f32.mrf.mxu0
  %v3215 = vadd.f32 0.0, %v3214
  %v3216 = vpop.f32.mrf.mxu0
  %3217 = vdwg.mxu0
  %v3218 = vld [vmem:[%s8] sm:$0xff]
  %v3219 = vld [vmem:[%s8 + $0x8] sm:$0xff]
  %v3220 = vld [vmem:[%s8 + $0x10] sm:$0xff]
  %v3221 = vld [vmem:[%s8 + $0x18] sm:$0xff]
  %v3222 = vld [vmem:[%s8 + $0x20] sm:$0xff]
  %v3223 = vld [vmem:[%s8 + $0x28] sm:$0xff]
  %v3224 = vld [vmem:[%s8 + $0x30] sm:$0xff]
  %v3225 = vld [vmem:[%s8 + $0x38] sm:$0xff]
  %v3226 = vld [vmem:[%s8 + $0x40] sm:$0xff]
  %v3227 = vld [vmem:[%s8 + $0x48] sm:$0xff]
  %v3228 = vld [vmem:[%s8 + $0x50] sm:$0xff]
  %v3229 = vld [vmem:[%s8 + $0x58] sm:$0xff]
  %v3230 = vld [vmem:[%s8 + $0x60] sm:$0xff]
  %v3231 = vld [vmem:[%s8 + $0x68] sm:$0xff]
  %v3232 = vld [vmem:[%s8 + $0x70] sm:$0xff]
  %v3233 = vld [vmem:[%s8 + $0x78] sm:$0xff]
  %v3234 = vld [vmem:[%s8 + $0x80] sm:$0xff]
  %v3235 = vld [vmem:[%s8 + $0x88] sm:$0xff]
  %v3236 = vld [vmem:[%s8 + $0x90] sm:$0xff]
  %v3237 = vld [vmem:[%s8 + $0x98] sm:$0xff]
  %3238 = vmatprep.subr.mxu0 0.0
  %3239 = vmatpush1.msra.mxu0 %v3233
  %3240 = vmatprep.subr.mxu0 0.0
  %3241 = vmatpush1.msra.mxu0 %v3232
  %3242 = vmatprep.subr.mxu0 0.0
  %3243 = vmatpush1.msra.mxu0 %v3231
  %3244 = vmatprep.subr.mxu0 0.0
  %3245 = vmatpush1.msra.mxu0 %v3230
  %3246 = vmatprep.subr.mxu0 0.0
  %3247 = vmatpush1.msra.mxu0 %v3229
  %3248 = vmatprep.subr.mxu0 0.0
  %3249 = vmatpush1.msra.mxu0 %v3228
  %3250 = vmatprep.subr.mxu0 0.0
  %3251 = vmatpush1.msra.mxu0 %v3227
  %3252 = vmatprep.subr.mxu0 0.0
  %3253 = vmatpush1.msra.mxu0 %v3226
  %3254 = vmatprep.subr.mxu0 0.0
  %3255 = vmatpush1.msra.mxu0 %v3225
  %3256 = vmatprep.subr.mxu0 0.0
  %3257 = vmatpush1.msra.mxu0 %v3224
  %3258 = vmatprep.subr.mxu0 0.0
  %3259 = vmatpush1.msra.mxu0 %v3223
  %3260 = vmatprep.subr.mxu0 0.0
  %3261 = vmatpush1.msra.mxu0 %v3222
  %3262 = vmatprep.subr.mxu0 0.0
  %3263 = vmatpush1.msra.mxu0 %v3221
  %3264 = vmatprep.subr.mxu0 0.0
  %3265 = vmatpush1.msra.mxu0 %v3220
  %3266 = vmatprep.subr.mxu0 0.0
  %3267 = vmatpush1.msra.mxu0 %v3219
  %3268 = vmatprep.subr.mxu0 0.0
  %3269 = vmatpush1.msra.mxu0 %v3218
  %3270 = vmatprep.subr.mxu0 0.0
  %3271 = vmatpush2.msra.mxu0 0.0
  %3272 = vmatprep.subr.mxu0 0.0
  %3273 = vmatpush2.msra.mxu0 0.0
  %3274 = vmatprep.subr.mxu0 0.0
  %3275 = vmatpush2.msra.mxu0 0.0
  %3276 = vmatprep.subr.mxu0 0.0
  %3277 = vmatpush2.msra.mxu0 0.0
  %3278 = vmatprep.subr.mxu0 0.0
  %3279 = vmatpush2.msra.mxu0 0.0
  %3280 = vmatprep.subr.mxu0 0.0
  %3281 = vmatpush2.msra.mxu0 0.0
  %3282 = vmatprep.subr.mxu0 0.0
  %3283 = vmatpush2.msra.mxu0 0.0
  %3284 = vmatprep.subr.mxu0 0.0
  %3285 = vmatpush2.msra.mxu0 0.0
  %3286 = vmatprep.subr.mxu0 0.0
  %3287 = vmatpush2.msra.mxu0 0.0
  %3288 = vmatprep.subr.mxu0 0.0
  %3289 = vmatpush2.msra.mxu0 0.0
  %3290 = vmatprep.subr.mxu0 0.0
  %3291 = vmatpush2.msra.mxu0 0.0
  %3292 = vmatprep.subr.mxu0 0.0
  %3293 = vmatpush2.msra.mxu0 0.0
  %3294 = vmatprep.subr.mxu0 0.0
  %3295 = vmatpush2.msra.mxu0 %v3237
  %3296 = vmatprep.subr.mxu0 0.0
  %3297 = vmatpush2.msra.mxu0 %v3236
  %3298 = vmatprep.subr.mxu0 0.0
  %3299 = vmatpush2.msra.mxu0 %v3235
  %3300 = vmatprep.subr.mxu0 0.0
  %3301 = vmatpush2.msra.mxu0 %v3234
  %3302 = vmatprep.mubr.f32.mxu0 %v3114
  %3303 = vmatmul.mubr.f32.gmra.mxu0 %v3082
  %v3304 = vpop.f32.mrf.mxu0
  %v3305 = vadd.f32 0.0, %v3304
  %v3306 = vpop.f32.mrf.mxu0
  %3307 = vmatprep.mubr.f32.mxu0 %v3117
  %3308 = vmatmul.mubr.f32.gmra.mxu0 %v3084
  %v3309 = vpop.f32.mrf.mxu0
  %v3310 = vadd.f32 0.0, %v3309
  %v3311 = vpop.f32.mrf.mxu0
  %3312 = vmatprep.mubr.f32.mxu0 %v3120
  %3313 = vmatmul.mubr.f32.gmra.mxu0 %v3086
  %v3314 = vpop.f32.mrf.mxu0
  %v3315 = vadd.f32 0.0, %v3314
  %v3316 = vpop.f32.mrf.mxu0
  %3317 = vmatprep.mubr.f32.mxu0 %v3123
  %3318 = vmatmul.mubr.f32.gmra.mxu0 %v3088
  %v3319 = vpop.f32.mrf.mxu0
  %v3320 = vadd.f32 0.0, %v3319
  %v3321 = vpop.f32.mrf.mxu0
  %3322 = vmatprep.mubr.f32.mxu0 %v3126
  %3323 = vmatmul.mubr.f32.gmra.mxu0 %v3090
  %v3324 = vpop.f32.mrf.mxu0
  %v3325 = vadd.f32 0.0, %v3324
  %v3326 = vpop.f32.mrf.mxu0
  %3327 = vdwg.mxu0
  %v3328 = vmax.f32 %v3195, %v3305
  %v3329 = vmax.f32 %v3200, %v3310
  %v3330 = vmax.f32 %v3205, %v3315
  %v3331 = vmax.f32 %v3210, %v3320
  %v3332 = vmax.f32 %v3215, %v3325
  %v3333 = vld [vmem:[%s10] sm:$0x1]
  %v3334 = vld [vmem:[%s9] sm:$0xff]
  %v3335 = vld [vmem:[%s9 + $0x8] sm:$0xff]
  %v3336 = vld [vmem:[%s9 + $0x10] sm:$0xff]
  %v3337 = vld [vmem:[%s9 + $0x18] sm:$0xff]
  %v3338 = vld [vmem:[%s9 + $0x20] sm:$0xff]
  %v3339 = vld [vmem:[%s9 + $0x28] sm:$0xff]
  %v3340 = vld [vmem:[%s9 + $0x30] sm:$0xff]
  %v3341 = vld [vmem:[%s9 + $0x38] sm:$0xff]
  %v3342 = vld [vmem:[%s9 + $0x40] sm:$0xff]
  %v3343 = vld [vmem:[%s9 + $0x48] sm:$0xff]
  %vm3344 = vcmask 654336
  %v3346 = vsel %vm3344, %v3328, 0
  %3348 = vmatprep.subr.mxu0 0.0
  %3349 = vmatpush1.msra.mxu0 0.0
  %3350 = vmatprep.subr.mxu0 0.0
  %3351 = vmatpush1.msra.mxu0 0.0
  %3352 = vmatprep.subr.mxu0 0.0
  %3353 = vmatpush1.msra.mxu0 0.0
  %3354 = vmatprep.subr.mxu0 0.0
  %3355 = vmatpush1.msra.mxu0 0.0
  %3356 = vmatprep.subr.mxu0 0.0
  %3357 = vmatpush1.msra.mxu0 0.0
  %3358 = vmatprep.subr.mxu0 0.0
  %3359 = vmatpush1.msra.mxu0 0.0
  %3360 = vmatprep.subr.mxu0 0.0
  %3361 = vmatpush1.msra.mxu0 %v3343
  %3362 = vmatprep.subr.mxu0 0.0
  %3363 = vmatpush1.msra.mxu0 %v3342
  %3364 = vmatprep.subr.mxu0 0.0
  %3365 = vmatpush1.msra.mxu0 %v3341
  %3366 = vmatprep.subr.mxu0 0.0
  %3367 = vmatpush1.msra.mxu0 %v3340
  %3368 = vmatprep.subr.mxu0 0.0
  %3369 = vmatpush1.msra.mxu0 %v3339
  %3370 = vmatprep.subr.mxu0 0.0
  %3371 = vmatpush1.msra.mxu0 %v3338
  %3372 = vmatprep.subr.mxu0 0.0
  %3373 = vmatpush1.msra.mxu0 %v3337
  %3374 = vmatprep.subr.mxu0 0.0
  %3375 = vmatpush1.msra.mxu0 %v3336
  %3376 = vmatprep.subr.mxu0 0.0
  %3377 = vmatpush1.msra.mxu0 %v3335
  %3378 = vmatprep.subr.mxu0 0.0
  %3379 = vmatpush1.msra.mxu0 %v3334
  %3380 = vmatprep.subr.mxu0 0.0
  %3381 = vmatpush2.msra.mxu0 0.0
  %3382 = vmatprep.subr.mxu0 0.0
  %3383 = vmatpush2.msra.mxu0 0.0
  %3384 = vmatprep.subr.mxu0 0.0
  %3385 = vmatpush2.msra.mxu0 0.0
  %3386 = vmatprep.subr.mxu0 0.0
  %3387 = vmatpush2.msra.mxu0 0.0
  %3388 = vmatprep.subr.mxu0 0.0
  %3389 = vmatpush2.msra.mxu0 0.0
  %3390 = vmatprep.subr.mxu0 0.0
  %3391 = vmatpush2.msra.mxu0 0.0
  %3392 = vmatprep.subr.mxu0 0.0
  %3393 = vmatpush2.msra.mxu0 0.0
  %3394 = vmatprep.subr.mxu0 0.0
  %3395 = vmatpush2.msra.mxu0 0.0
  %3396 = vmatprep.subr.mxu0 0.0
  %3397 = vmatpush2.msra.mxu0 0.0
  %3398 = vmatprep.subr.mxu0 0.0
  %3399 = vmatpush2.msra.mxu0 0.0
  %3400 = vmatprep.subr.mxu0 0.0
  %3401 = vmatpush2.msra.mxu0 0.0
  %3402 = vmatprep.subr.mxu0 0.0
  %3403 = vmatpush2.msra.mxu0 0.0
  %3404 = vmatprep.subr.mxu0 0.0
  %3405 = vmatpush2.msra.mxu0 0.0
  %3406 = vmatprep.subr.mxu0 0.0
  %3407 = vmatpush2.msra.mxu0 0.0
  %3408 = vmatprep.subr.mxu0 0.0
  %3409 = vmatpush2.msra.mxu0 0.0
  %3410 = vmatprep.subr.mxu0 0.0
  %3411 = vmatpush2.msra.mxu0 0.0
  %3412 = vmatprep.mubr.f32.mxu0 0.0
  %3413 = vmatmul.mubr.f32.gmra.mxu0 %v3346
  %v3414 = vpop.f32.mrf.mxu0
  %v3415 = vadd.f32 0.0, %v3414
  %v3416 = vpop.f32.mrf.mxu0
  %3417 = vdwg.mxu0
  %v3419 = vlaneseq
  %v3420 = vshrl.u32 %v3419, 7
  %v3421 = vsub.s32 0, %v3420
  %v3422 = vrot.slane %v3333, %v3421
  %v3424 = vadd.f32 %v3422, %v3415
  %s3425 = scalar_lea.vmem %s9, 80
  %v3426 = vld [vmem:[%s3425] sm:$0xff]
  %v3427 = vld [vmem:[%s3425 + $0x8] sm:$0xff]
  %v3428 = vld [vmem:[%s3425 + $0x10] sm:$0xff]
  %v3429 = vld [vmem:[%s3425 + $0x18] sm:$0xff]
  %v3430 = vld [vmem:[%s3425 + $0x20] sm:$0xff]
  %v3431 = vld [vmem:[%s3425 + $0x28] sm:$0xff]
  %v3432 = vld [vmem:[%s3425 + $0x30] sm:$0xff]
  %v3433 = vld [vmem:[%s3425 + $0x38] sm:$0xff]
  %v3434 = vld [vmem:[%s3425 + $0x40] sm:$0xff]
  %v3435 = vld [vmem:[%s3425 + $0x48] sm:$0xff]
  %v3437 = vsel %vm3344, %v3329, 0
  %3439 = vmatprep.subr.mxu0 0.0
  %3440 = vmatpush1.msra.mxu0 0.0
  %3441 = vmatprep.subr.mxu0 0.0
  %3442 = vmatpush1.msra.mxu0 0.0
  %3443 = vmatprep.subr.mxu0 0.0
  %3444 = vmatpush1.msra.mxu0 0.0
  %3445 = vmatprep.subr.mxu0 0.0
  %3446 = vmatpush1.msra.mxu0 0.0
  %3447 = vmatprep.subr.mxu0 0.0
  %3448 = vmatpush1.msra.mxu0 0.0
  %3449 = vmatprep.subr.mxu0 0.0
  %3450 = vmatpush1.msra.mxu0 0.0
  %3451 = vmatprep.subr.mxu0 0.0
  %3452 = vmatpush1.msra.mxu0 %v3435
  %3453 = vmatprep.subr.mxu0 0.0
  %3454 = vmatpush1.msra.mxu0 %v3434
  %3455 = vmatprep.subr.mxu0 0.0
  %3456 = vmatpush1.msra.mxu0 %v3433
  %3457 = vmatprep.subr.mxu0 0.0
  %3458 = vmatpush1.msra.mxu0 %v3432
  %3459 = vmatprep.subr.mxu0 0.0
  %3460 = vmatpush1.msra.mxu0 %v3431
  %3461 = vmatprep.subr.mxu0 0.0
  %3462 = vmatpush1.msra.mxu0 %v3430
  %3463 = vmatprep.subr.mxu0 0.0
  %3464 = vmatpush1.msra.mxu0 %v3429
  %3465 = vmatprep.subr.mxu0 0.0
  %3466 = vmatpush1.msra.mxu0 %v3428
  %3467 = vmatprep.subr.mxu0 0.0
  %3468 = vmatpush1.msra.mxu0 %v3427
  %3469 = vmatprep.subr.mxu0 0.0
  %3470 = vmatpush1.msra.mxu0 %v3426
  %3471 = vmatprep.subr.mxu0 0.0
  %3472 = vmatpush2.msra.mxu0 0.0
  %3473 = vmatprep.subr.mxu0 0.0
  %3474 = vmatpush2.msra.mxu0 0.0
  %3475 = vmatprep.subr.mxu0 0.0
  %3476 = vmatpush2.msra.mxu0 0.0
  %3477 = vmatprep.subr.mxu0 0.0
  %3478 = vmatpush2.msra.mxu0 0.0
  %3479 = vmatprep.subr.mxu0 0.0
  %3480 = vmatpush2.msra.mxu0 0.0
  %3481 = vmatprep.subr.mxu0 0.0
  %3482 = vmatpush2.msra.mxu0 0.0
  %3483 = vmatprep.subr.mxu0 0.0
  %3484 = vmatpush2.msra.mxu0 0.0
  %3485 = vmatprep.subr.mxu0 0.0
  %3486 = vmatpush2.msra.mxu0 0.0
  %3487 = vmatprep.subr.mxu0 0.0
  %3488 = vmatpush2.msra.mxu0 0.0
  %3489 = vmatprep.subr.mxu0 0.0
  %3490 = vmatpush2.msra.mxu0 0.0
  %3491 = vmatprep.subr.mxu0 0.0
  %3492 = vmatpush2.msra.mxu0 0.0
  %3493 = vmatprep.subr.mxu0 0.0
  %3494 = vmatpush2.msra.mxu0 0.0
  %3495 = vmatprep.subr.mxu0 0.0
  %3496 = vmatpush2.msra.mxu0 0.0
  %3497 = vmatprep.subr.mxu0 0.0
  %3498 = vmatpush2.msra.mxu0 0.0
  %3499 = vmatprep.subr.mxu0 0.0
  %3500 = vmatpush2.msra.mxu0 0.0
  %3501 = vmatprep.subr.mxu0 0.0
  %3502 = vmatpush2.msra.mxu0 0.0
  %3503 = vmatprep.mubr.f32.mxu0 0.0
  %3504 = vmatmul.mubr.f32.gmra.mxu0 %v3437
  %v3505 = vpop.f32.mrf.mxu0
  %v3506 = vadd.f32 0.0, %v3505
  %v3507 = vpop.f32.mrf.mxu0
  %3508 = vdwg.mxu0
  %v3509 = vadd.f32 %v3424, %v3506
  %s3510 = scalar_lea.vmem %s9, 160
  %v3511 = vld [vmem:[%s3510] sm:$0xff]
  %v3512 = vld [vmem:[%s3510 + $0x8] sm:$0xff]
  %v3513 = vld [vmem:[%s3510 + $0x10] sm:$0xff]
  %v3514 = vld [vmem:[%s3510 + $0x18] sm:$0xff]
  %v3515 = vld [vmem:[%s3510 + $0x20] sm:$0xff]
  %v3516 = vld [vmem:[%s3510 + $0x28] sm:$0xff]
  %v3517 = vld [vmem:[%s3510 + $0x30] sm:$0xff]
  %v3518 = vld [vmem:[%s3510 + $0x38] sm:$0xff]
  %v3519 = vld [vmem:[%s3510 + $0x40] sm:$0xff]
  %v3520 = vld [vmem:[%s3510 + $0x48] sm:$0xff]
  %v3522 = vsel %vm3344, %v3330, 0
  %3524 = vmatprep.subr.mxu0 0.0
  %3525 = vmatpush1.msra.mxu0 0.0
  %3526 = vmatprep.subr.mxu0 0.0
  %3527 = vmatpush1.msra.mxu0 0.0
  %3528 = vmatprep.subr.mxu0 0.0
  %3529 = vmatpush1.msra.mxu0 0.0
  %3530 = vmatprep.subr.mxu0 0.0
  %3531 = vmatpush1.msra.mxu0 0.0
  %3532 = vmatprep.subr.mxu0 0.0
  %3533 = vmatpush1.msra.mxu0 0.0
  %3534 = vmatprep.subr.mxu0 0.0
  %3535 = vmatpush1.msra.mxu0 0.0
  %3536 = vmatprep.subr.mxu0 0.0
  %3537 = vmatpush1.msra.mxu0 %v3520
  %3538 = vmatprep.subr.mxu0 0.0
  %3539 = vmatpush1.msra.mxu0 %v3519
  %3540 = vmatprep.subr.mxu0 0.0
  %3541 = vmatpush1.msra.mxu0 %v3518
  %3542 = vmatprep.subr.mxu0 0.0
  %3543 = vmatpush1.msra.mxu0 %v3517
  %3544 = vmatprep.subr.mxu0 0.0
  %3545 = vmatpush1.msra.mxu0 %v3516
  %3546 = vmatprep.subr.mxu0 0.0
  %3547 = vmatpush1.msra.mxu0 %v3515
  %3548 = vmatprep.subr.mxu0 0.0
  %3549 = vmatpush1.msra.mxu0 %v3514
  %3550 = vmatprep.subr.mxu0 0.0
  %3551 = vmatpush1.msra.mxu0 %v3513
  %3552 = vmatprep.subr.mxu0 0.0
  %3553 = vmatpush1.msra.mxu0 %v3512
  %3554 = vmatprep.subr.mxu0 0.0
  %3555 = vmatpush1.msra.mxu0 %v3511
  %3556 = vmatprep.subr.mxu0 0.0
  %3557 = vmatpush2.msra.mxu0 0.0
  %3558 = vmatprep.subr.mxu0 0.0
  %3559 = vmatpush2.msra.mxu0 0.0
  %3560 = vmatprep.subr.mxu0 0.0
  %3561 = vmatpush2.msra.mxu0 0.0
  %3562 = vmatprep.subr.mxu0 0.0
  %3563 = vmatpush2.msra.mxu0 0.0
  %3564 = vmatprep.subr.mxu0 0.0
  %3565 = vmatpush2.msra.mxu0 0.0
  %3566 = vmatprep.subr.mxu0 0.0
  %3567 = vmatpush2.msra.mxu0 0.0
  %3568 = vmatprep.subr.mxu0 0.0
  %3569 = vmatpush2.msra.mxu0 0.0
  %3570 = vmatprep.subr.mxu0 0.0
  %3571 = vmatpush2.msra.mxu0 0.0
  %3572 = vmatprep.subr.mxu0 0.0
  %3573 = vmatpush2.msra.mxu0 0.0
  %3574 = vmatprep.subr.mxu0 0.0
  %3575 = vmatpush2.msra.mxu0 0.0
  %3576 = vmatprep.subr.mxu0 0.0
  %3577 = vmatpush2.msra.mxu0 0.0
  %3578 = vmatprep.subr.mxu0 0.0
  %3579 = vmatpush2.msra.mxu0 0.0
  %3580 = vmatprep.subr.mxu0 0.0
  %3581 = vmatpush2.msra.mxu0 0.0
  %3582 = vmatprep.subr.mxu0 0.0
  %3583 = vmatpush2.msra.mxu0 0.0
  %3584 = vmatprep.subr.mxu0 0.0
  %3585 = vmatpush2.msra.mxu0 0.0
  %3586 = vmatprep.subr.mxu0 0.0
  %3587 = vmatpush2.msra.mxu0 0.0
  %3588 = vmatprep.mubr.f32.mxu0 0.0
  %3589 = vmatmul.mubr.f32.gmra.mxu0 %v3522
  %v3590 = vpop.f32.mrf.mxu0
  %v3591 = vadd.f32 0.0, %v3590
  %v3592 = vpop.f32.mrf.mxu0
  %3593 = vdwg.mxu0
  %v3594 = vadd.f32 %v3509, %v3591
  %s3595 = scalar_lea.vmem %s9, 240
  %v3596 = vld [vmem:[%s3595] sm:$0xff]
  %v3597 = vld [vmem:[%s3595 + $0x8] sm:$0xff]
  %v3598 = vld [vmem:[%s3595 + $0x10] sm:$0xff]
  %v3599 = vld [vmem:[%s3595 + $0x18] sm:$0xff]
  %v3600 = vld [vmem:[%s3595 + $0x20] sm:$0xff]
  %v3601 = vld [vmem:[%s3595 + $0x28] sm:$0xff]
  %v3602 = vld [vmem:[%s3595 + $0x30] sm:$0xff]
  %v3603 = vld [vmem:[%s3595 + $0x38] sm:$0xff]
  %v3604 = vld [vmem:[%s3595 + $0x40] sm:$0xff]
  %v3605 = vld [vmem:[%s3595 + $0x48] sm:$0xff]
  %v3607 = vsel %vm3344, %v3331, 0
  %3609 = vmatprep.subr.mxu0 0.0
  %3610 = vmatpush1.msra.mxu0 0.0
  %3611 = vmatprep.subr.mxu0 0.0
  %3612 = vmatpush1.msra.mxu0 0.0
  %3613 = vmatprep.subr.mxu0 0.0
  %3614 = vmatpush1.msra.mxu0 0.0
  %3615 = vmatprep.subr.mxu0 0.0
  %3616 = vmatpush1.msra.mxu0 0.0
  %3617 = vmatprep.subr.mxu0 0.0
  %3618 = vmatpush1.msra.mxu0 0.0
  %3619 = vmatprep.subr.mxu0 0.0
  %3620 = vmatpush1.msra.mxu0 0.0
  %3621 = vmatprep.subr.mxu0 0.0
  %3622 = vmatpush1.msra.mxu0 %v3605
  %3623 = vmatprep.subr.mxu0 0.0
  %3624 = vmatpush1.msra.mxu0 %v3604
  %3625 = vmatprep.subr.mxu0 0.0
  %3626 = vmatpush1.msra.mxu0 %v3603
  %3627 = vmatprep.subr.mxu0 0.0
  %3628 = vmatpush1.msra.mxu0 %v3602
  %3629 = vmatprep.subr.mxu0 0.0
  %3630 = vmatpush1.msra.mxu0 %v3601
  %3631 = vmatprep.subr.mxu0 0.0
  %3632 = vmatpush1.msra.mxu0 %v3600
  %3633 = vmatprep.subr.mxu0 0.0
  %3634 = vmatpush1.msra.mxu0 %v3599
  %3635 = vmatprep.subr.mxu0 0.0
  %3636 = vmatpush1.msra.mxu0 %v3598
  %3637 = vmatprep.subr.mxu0 0.0
  %3638 = vmatpush1.msra.mxu0 %v3597
  %3639 = vmatprep.subr.mxu0 0.0
  %3640 = vmatpush1.msra.mxu0 %v3596
  %3641 = vmatprep.subr.mxu0 0.0
  %3642 = vmatpush2.msra.mxu0 0.0
  %3643 = vmatprep.subr.mxu0 0.0
  %3644 = vmatpush2.msra.mxu0 0.0
  %3645 = vmatprep.subr.mxu0 0.0
  %3646 = vmatpush2.msra.mxu0 0.0
  %3647 = vmatprep.subr.mxu0 0.0
  %3648 = vmatpush2.msra.mxu0 0.0
  %3649 = vmatprep.subr.mxu0 0.0
  %3650 = vmatpush2.msra.mxu0 0.0
  %3651 = vmatprep.subr.mxu0 0.0
  %3652 = vmatpush2.msra.mxu0 0.0
  %3653 = vmatprep.subr.mxu0 0.0
  %3654 = vmatpush2.msra.mxu0 0.0
  %3655 = vmatprep.subr.mxu0 0.0
  %3656 = vmatpush2.msra.mxu0 0.0
  %3657 = vmatprep.subr.mxu0 0.0
  %3658 = vmatpush2.msra.mxu0 0.0
  %3659 = vmatprep.subr.mxu0 0.0
  %3660 = vmatpush2.msra.mxu0 0.0
  %3661 = vmatprep.subr.mxu0 0.0
  %3662 = vmatpush2.msra.mxu0 0.0
  %3663 = vmatprep.subr.mxu0 0.0
  %3664 = vmatpush2.msra.mxu0 0.0
  %3665 = vmatprep.subr.mxu0 0.0
  %3666 = vmatpush2.msra.mxu0 0.0
  %3667 = vmatprep.subr.mxu0 0.0
  %3668 = vmatpush2.msra.mxu0 0.0
  %3669 = vmatprep.subr.mxu0 0.0
  %3670 = vmatpush2.msra.mxu0 0.0
  %3671 = vmatprep.subr.mxu0 0.0
  %3672 = vmatpush2.msra.mxu0 0.0
  %3673 = vmatprep.mubr.f32.mxu0 0.0
  %3674 = vmatmul.mubr.f32.gmra.mxu0 %v3607
  %v3675 = vpop.f32.mrf.mxu0
  %v3676 = vadd.f32 0.0, %v3675
  %v3677 = vpop.f32.mrf.mxu0
  %3678 = vdwg.mxu0
  %v3679 = vadd.f32 %v3594, %v3676
  %s3680 = scalar_lea.vmem %s9, 320
  %v3681 = vld [vmem:[%s3680] sm:$0xff]
  %v3682 = vld [vmem:[%s3680 + $0x8] sm:$0xff]
  %v3683 = vld [vmem:[%s3680 + $0x10] sm:$0xff]
  %v3684 = vld [vmem:[%s3680 + $0x18] sm:$0xff]
  %v3685 = vld [vmem:[%s3680 + $0x20] sm:$0xff]
  %v3686 = vld [vmem:[%s3680 + $0x28] sm:$0xff]
  %v3687 = vld [vmem:[%s3680 + $0x30] sm:$0xff]
  %v3688 = vld [vmem:[%s3680 + $0x38] sm:$0xff]
  %v3689 = vld [vmem:[%s3680 + $0x40] sm:$0xff]
  %v3690 = vld [vmem:[%s3680 + $0x48] sm:$0xff]
  %v3692 = vsel %vm3344, %v3332, 0
  %3694 = vmatprep.subr.mxu0 0.0
  %3695 = vmatpush1.msra.mxu0 0.0
  %3696 = vmatprep.subr.mxu0 0.0
  %3697 = vmatpush1.msra.mxu0 0.0
  %3698 = vmatprep.subr.mxu0 0.0
  %3699 = vmatpush1.msra.mxu0 0.0
  %3700 = vmatprep.subr.mxu0 0.0
  %3701 = vmatpush1.msra.mxu0 0.0
  %3702 = vmatprep.subr.mxu0 0.0
  %3703 = vmatpush1.msra.mxu0 0.0
  %3704 = vmatprep.subr.mxu0 0.0
  %3705 = vmatpush1.msra.mxu0 0.0
  %3706 = vmatprep.subr.mxu0 0.0
  %3707 = vmatpush1.msra.mxu0 %v3690
  %3708 = vmatprep.subr.mxu0 0.0
  %3709 = vmatpush1.msra.mxu0 %v3689
  %3710 = vmatprep.subr.mxu0 0.0
  %3711 = vmatpush1.msra.mxu0 %v3688
  %3712 = vmatprep.subr.mxu0 0.0
  %3713 = vmatpush1.msra.mxu0 %v3687
  %3714 = vmatprep.subr.mxu0 0.0
  %3715 = vmatpush1.msra.mxu0 %v3686
  %3716 = vmatprep.subr.mxu0 0.0
  %3717 = vmatpush1.msra.mxu0 %v3685
  %3718 = vmatprep.subr.mxu0 0.0
  %3719 = vmatpush1.msra.mxu0 %v3684
  %3720 = vmatprep.subr.mxu0 0.0
  %3721 = vmatpush1.msra.mxu0 %v3683
  %3722 = vmatprep.subr.mxu0 0.0
  %3723 = vmatpush1.msra.mxu0 %v3682
  %3724 = vmatprep.subr.mxu0 0.0
  %3725 = vmatpush1.msra.mxu0 %v3681
  %3726 = vmatprep.subr.mxu0 0.0
  %3727 = vmatpush2.msra.mxu0 0.0
  %3728 = vmatprep.subr.mxu0 0.0
  %3729 = vmatpush2.msra.mxu0 0.0
  %3730 = vmatprep.subr.mxu0 0.0
  %3731 = vmatpush2.msra.mxu0 0.0
  %3732 = vmatprep.subr.mxu0 0.0
  %3733 = vmatpush2.msra.mxu0 0.0
  %3734 = vmatprep.subr.mxu0 0.0
  %3735 = vmatpush2.msra.mxu0 0.0
  %3736 = vmatprep.subr.mxu0 0.0
  %3737 = vmatpush2.msra.mxu0 0.0
  %3738 = vmatprep.subr.mxu0 0.0
  %3739 = vmatpush2.msra.mxu0 0.0
  %3740 = vmatprep.subr.mxu0 0.0
  %3741 = vmatpush2.msra.mxu0 0.0
  %3742 = vmatprep.subr.mxu0 0.0
  %3743 = vmatpush2.msra.mxu0 0.0
  %3744 = vmatprep.subr.mxu0 0.0
  %3745 = vmatpush2.msra.mxu0 0.0
  %3746 = vmatprep.subr.mxu0 0.0
  %3747 = vmatpush2.msra.mxu0 0.0
  %3748 = vmatprep.subr.mxu0 0.0
  %3749 = vmatpush2.msra.mxu0 0.0
  %3750 = vmatprep.subr.mxu0 0.0
  %3751 = vmatpush2.msra.mxu0 0.0
  %3752 = vmatprep.subr.mxu0 0.0
  %3753 = vmatpush2.msra.mxu0 0.0
  %3754 = vmatprep.subr.mxu0 0.0
  %3755 = vmatpush2.msra.mxu0 0.0
  %3756 = vmatprep.subr.mxu0 0.0
  %3757 = vmatpush2.msra.mxu0 0.0
  %3758 = vmatprep.mubr.f32.mxu0 0.0
  %3759 = vmatmul.mubr.f32.gmra.mxu0 %v3692
  %v3760 = vpop.f32.mrf.mxu0
  %v3761 = vadd.f32 0.0, %v3760
  %v3762 = vpop.f32.mrf.mxu0
  %3763 = vdwg.mxu0
  %v3764 = vadd.f32 %v3679, %v3761
  %v3765 = vmax.f32 %v3764, 0.0
  %v3766 = vld [vmem:[%s11] sm:$0xff]
  %v3767 = vld [vmem:[%s11 + $0x8] sm:$0xff]
  %v3768 = vld [vmem:[%s11 + $0x10] sm:$0xff]
  %v3769 = vld [vmem:[%s11 + $0x18] sm:$0xff]
  %v3770 = vld [vmem:[%s11 + $0x20] sm:$0xff]
  %v3771 = vld [vmem:[%s11 + $0x28] sm:$0xff]
  %v3772 = vld [vmem:[%s11 + $0x30] sm:$0xff]
  %v3773 = vld [vmem:[%s11 + $0x38] sm:$0xff]
  %v3774 = vld [vmem:[%s11 + $0x40] sm:$0xff]
  %v3775 = vld [vmem:[%s11 + $0x48] sm:$0xff]
  %v3776 = vld [vmem:[%s11 + $0x50] sm:$0xff]
  %v3777 = vld [vmem:[%s11 + $0x58] sm:$0xff]
  %v3778 = vld [vmem:[%s11 + $0x60] sm:$0xff]
  %v3779 = vld [vmem:[%s11 + $0x68] sm:$0xff]
  %v3780 = vld [vmem:[%s11 + $0x70] sm:$0xff]
  %v3781 = vld [vmem:[%s12] sm:$0x1]
  %v3783 = vlaneseq
  %v3784 = vshrl.u32 %v3783, 7
  %v3785 = vsub.s32 0, %v3784
  %v3786 = vrot.slane %v3781, %v3785
  %vm3788 = vcmask 982016
  %v3790 = vsel %vm3788, %v3765, 0
  %3792 = vmatprep.subr.mxu0 0.0
  %3793 = vmatpush1.msra.mxu0 0.0
  %3794 = vmatprep.subr.mxu0 0.0
  %3795 = vmatpush1.msra.mxu0 %v3780
  %3796 = vmatprep.subr.mxu0 0.0
  %3797 = vmatpush1.msra.mxu0 %v3779
  %3798 = vmatprep.subr.mxu0 0.0
  %3799 = vmatpush1.msra.mxu0 %v3778
  %3800 = vmatprep.subr.mxu0 0.0
  %3801 = vmatpush1.msra.mxu0 %v3777
  %3802 = vmatprep.subr.mxu0 0.0
  %3803 = vmatpush1.msra.mxu0 %v3776
  %3804 = vmatprep.subr.mxu0 0.0
  %3805 = vmatpush1.msra.mxu0 %v3775
  %3806 = vmatprep.subr.mxu0 0.0
  %3807 = vmatpush1.msra.mxu0 %v3774
  %3808 = vmatprep.subr.mxu0 0.0
  %3809 = vmatpush1.msra.mxu0 %v3773
  %3810 = vmatprep.subr.mxu0 0.0
  %3811 = vmatpush1.msra.mxu0 %v3772
  %3812 = vmatprep.subr.mxu0 0.0
  %3813 = vmatpush1.msra.mxu0 %v3771
  %3814 = vmatprep.subr.mxu0 0.0
  %3815 = vmatpush1.msra.mxu0 %v3770
  %3816 = vmatprep.subr.mxu0 0.0
  %3817 = vmatpush1.msra.mxu0 %v3769
  %3818 = vmatprep.subr.mxu0 0.0
  %3819 = vmatpush1.msra.mxu0 %v3768
  %3820 = vmatprep.subr.mxu0 0.0
  %3821 = vmatpush1.msra.mxu0 %v3767
  %3822 = vmatprep.subr.mxu0 0.0
  %3823 = vmatpush1.msra.mxu0 %v3766
  %3824 = vmatprep.subr.mxu0 0.0
  %3825 = vmatpush2.msra.mxu0 0.0
  %3826 = vmatprep.subr.mxu0 0.0
  %3827 = vmatpush2.msra.mxu0 0.0
  %3828 = vmatprep.subr.mxu0 0.0
  %3829 = vmatpush2.msra.mxu0 0.0
  %3830 = vmatprep.subr.mxu0 0.0
  %3831 = vmatpush2.msra.mxu0 0.0
  %3832 = vmatprep.subr.mxu0 0.0
  %3833 = vmatpush2.msra.mxu0 0.0
  %3834 = vmatprep.subr.mxu0 0.0
  %3835 = vmatpush2.msra.mxu0 0.0
  %3836 = vmatprep.subr.mxu0 0.0
  %3837 = vmatpush2.msra.mxu0 0.0
  %3838 = vmatprep.subr.mxu0 0.0
  %3839 = vmatpush2.msra.mxu0 0.0
  %3840 = vmatprep.subr.mxu0 0.0
  %3841 = vmatpush2.msra.mxu0 0.0
  %3842 = vmatprep.subr.mxu0 0.0
  %3843 = vmatpush2.msra.mxu0 0.0
  %3844 = vmatprep.subr.mxu0 0.0
  %3845 = vmatpush2.msra.mxu0 0.0
  %3846 = vmatprep.subr.mxu0 0.0
  %3847 = vmatpush2.msra.mxu0 0.0
  %3848 = vmatprep.subr.mxu0 0.0
  %3849 = vmatpush2.msra.mxu0 0.0
  %3850 = vmatprep.subr.mxu0 0.0
  %3851 = vmatpush2.msra.mxu0 0.0
  %3852 = vmatprep.subr.mxu0 0.0
  %3853 = vmatpush2.msra.mxu0 0.0
  %3854 = vmatprep.subr.mxu0 0.0
  %3855 = vmatpush2.msra.mxu0 0.0
  %3856 = vmatprep.mubr.f32.mxu0 0.0
  %3857 = vmatmul.mubr.f32.gmra.mxu0 %v3790
  %v3858 = vpop.f32.mrf.mxu0
  %v3859 = vadd.f32 %v3786, %v3858
  %v3860 = vpop.f32.mrf.mxu0
  %3861 = vdwg.mxu0
  %v3862 = vmax.f32 %v3859, 0.0
  %v3863 = vld [vmem:[%s13] sm:$0xff]
  %v3864 = vld [vmem:[%s13 + $0x8] sm:$0xff]
  %v3865 = vld [vmem:[%s13 + $0x10] sm:$0xff]
  %v3866 = vld [vmem:[%s13 + $0x18] sm:$0xff]
  %v3867 = vld [vmem:[%s13 + $0x20] sm:$0xff]
  %v3868 = vld [vmem:[%s13 + $0x28] sm:$0xff]
  %v3869 = vld [vmem:[%s13 + $0x30] sm:$0xff]
  %v3870 = vld [vmem:[%s13 + $0x38] sm:$0xff]
  %v3871 = vld [vmem:[%s13 + $0x40] sm:$0xff]
  %v3872 = vld [vmem:[%s13 + $0x48] sm:$0xff]
  %v3873 = vld [vmem:[%s13 + $0x50] sm:$0xf]
  %v3874 = vld [vmem:[%s14] sm:$0x1]
  %v3876 = vlaneseq
  %v3877 = vshrl.u32 %v3876, 7
  %v3878 = vsub.s32 0, %v3877
  %v3879 = vrot.slane %v3874, %v3878
  %v3882 = vsel %vm2202, %v3862, 0
  %v3885 = vsel %vm2233, %v3873, 0
  %3887 = vmatprep.subr.mxu0 0.0
  %3888 = vmatpush1.msra.mxu0 0.0
  %3889 = vmatprep.subr.mxu0 0.0
  %3890 = vmatpush1.msra.mxu0 0.0
  %3891 = vmatprep.subr.mxu0 0.0
  %3892 = vmatpush1.msra.mxu0 0.0
  %3893 = vmatprep.subr.mxu0 0.0
  %3894 = vmatpush1.msra.mxu0 0.0
  %3895 = vmatprep.subr.mxu0 0.0
  %3896 = vmatpush1.msra.mxu0 0.0
  %3897 = vmatprep.subr.mxu0 0.0
  %3898 = vmatpush1.msra.mxu0 %v3885
  %3899 = vmatprep.subr.mxu0 0.0
  %3900 = vmatpush1.msra.mxu0 %v3872
  %3901 = vmatprep.subr.mxu0 0.0
  %3902 = vmatpush1.msra.mxu0 %v3871
  %3903 = vmatprep.subr.mxu0 0.0
  %3904 = vmatpush1.msra.mxu0 %v3870
  %3905 = vmatprep.subr.mxu0 0.0
  %3906 = vmatpush1.msra.mxu0 %v3869
  %3907 = vmatprep.subr.mxu0 0.0
  %3908 = vmatpush1.msra.mxu0 %v3868
  %3909 = vmatprep.subr.mxu0 0.0
  %3910 = vmatpush1.msra.mxu0 %v3867
  %3911 = vmatprep.subr.mxu0 0.0
  %3912 = vmatpush1.msra.mxu0 %v3866
  %3913 = vmatprep.subr.mxu0 0.0
  %3914 = vmatpush1.msra.mxu0 %v3865
  %3915 = vmatprep.subr.mxu0 0.0
  %3916 = vmatpush1.msra.mxu0 %v3864
  %3917 = vmatprep.subr.mxu0 0.0
  %3918 = vmatpush1.msra.mxu0 %v3863
  %3919 = vmatprep.subr.mxu0 0.0
  %3920 = vmatpush2.msra.mxu0 0.0
  %3921 = vmatprep.subr.mxu0 0.0
  %3922 = vmatpush2.msra.mxu0 0.0
  %3923 = vmatprep.subr.mxu0 0.0
  %3924 = vmatpush2.msra.mxu0 0.0
  %3925 = vmatprep.subr.mxu0 0.0
  %3926 = vmatpush2.msra.mxu0 0.0
  %3927 = vmatprep.subr.mxu0 0.0
  %3928 = vmatpush2.msra.mxu0 0.0
  %3929 = vmatprep.subr.mxu0 0.0
  %3930 = vmatpush2.msra.mxu0 0.0
  %3931 = vmatprep.subr.mxu0 0.0
  %3932 = vmatpush2.msra.mxu0 0.0
  %3933 = vmatprep.subr.mxu0 0.0
  %3934 = vmatpush2.msra.mxu0 0.0
  %3935 = vmatprep.subr.mxu0 0.0
  %3936 = vmatpush2.msra.mxu0 0.0
  %3937 = vmatprep.subr.mxu0 0.0
  %3938 = vmatpush2.msra.mxu0 0.0
  %3939 = vmatprep.subr.mxu0 0.0
  %3940 = vmatpush2.msra.mxu0 0.0
  %3941 = vmatprep.subr.mxu0 0.0
  %3942 = vmatpush2.msra.mxu0 0.0
  %3943 = vmatprep.subr.mxu0 0.0
  %3944 = vmatpush2.msra.mxu0 0.0
  %3945 = vmatprep.subr.mxu0 0.0
  %3946 = vmatpush2.msra.mxu0 0.0
  %3947 = vmatprep.subr.mxu0 0.0
  %3948 = vmatpush2.msra.mxu0 0.0
  %3949 = vmatprep.subr.mxu0 0.0
  %3950 = vmatpush2.msra.mxu0 0.0
  %3951 = vmatprep.mubr.f32.mxu0 0.0
  %3952 = vmatmul.mubr.f32.gmra.mxu0 %v3882
  %v3953 = vpop.f32.mrf.mxu0
  %v3954 = vadd.f32 %v3879, %v3953
  %v3955 = vpop.f32.mrf.mxu0
  %3956 = vdwg.mxu0
  %3957 = vst [vmem:[%s15] sm:$0xff] %v3954
  // Predicated region
  $region62: #{net_forward.1} parent=0 // pred_check
    _
  $region63: #{net_forward.1} parent=0 // pred_check_branch
    %3959 = sbr.rel (0) target = $region65
  $region64: #{net_forward.1} parent=0 // pred_region
    _
  $region65: #{net_forward.1} parent=0 // pred_fallthru
    _
  // Predicated region
  $region66: #{net_forward.1} parent=0 // pred_check
    _
  $region67: #{net_forward.1} parent=0 // pred_check_branch
    %3961 = sbr.rel (0) target = $region69
  $region68: #{net_forward.1} parent=0 // pred_region
    _
  $region69: #{net_forward.1} parent=0 // pred_fallthru
    _

</llo_original>
